<compile_context>
chip_gen: v6e
topology: v6e:2x2x1
jax: 0.10.0
libtpu: 0.0.40
codegen_flags: <defaults>
</compile_context>

<pallas_src>
import math
import functools

import jax
import jax.numpy as jnp
from jax import lax
from jax.experimental import pallas as pl
from jax.experimental.pallas import tpu as pltpu


def _round_up(x, m):
    return ((x + m - 1) // m) * m


def _block_vmem_bytes(shape, itemsize):
    """VMEM footprint of one block, accounting for (8,128) lane/sublane padding."""
    if len(shape) == 1:
        return _round_up(shape[0], 128) * itemsize
    lead = 1
    for d in shape[:-2]:
        lead *= d
    return lead * _round_up(shape[-2], 8) * _round_up(shape[-1], 128) * itemsize


# -----------------------------------------------------------------------------
# Pallas kernel: fused im2col (tap-sum) conv for one batch element
# -----------------------------------------------------------------------------
def _conv_tap_kernel(x_ref, w_ref, b_ref, o_ref, *, kh, kw, h_out, w_out):
    # x_ref: (1, Hp, Wp, C) f32   -- spatially pre-padded NHWC input, one batch
    # w_ref: (kh, kw, C, O) f32   -- greedily-selected weights, tap-major
    # b_ref: (1, O)         f32
    # o_ref: (1, Ho, Wo, O) f32   -- NHWC output, one batch
    c = x_ref.shape[-1]
    o = o_ref.shape[-1]
    m = h_out * w_out

    # Register accumulator initialized with the bias: no scratch, no epilogue.
    acc = jnp.broadcast_to(b_ref[0, :].astype(jnp.float32), (m, o))

    # Fused im2col: one MXU matmul per tap over statically shifted windows of
    # the padded input already sitting in VMEM; f32 accumulation.
    for ky in range(kh):
        for kx in range(kw):
            x_tap = x_ref[0, ky:ky + h_out, kx:kx + w_out, :]        # (Ho, Wo, C)
            acc = acc + jnp.dot(x_tap.reshape(m, c), w_ref[ky, kx],
                                preferred_element_type=jnp.float32)  # (m, O)

    o_ref[...] = acc.reshape(o_ref.shape)


# -----------------------------------------------------------------------------
# Conv2d_SM forward (greedy selection 'GS')
# -----------------------------------------------------------------------------
@functools.partial(jax.jit, static_argnames=("padding",))
def conv2d_sm_forward(x, all_weights, weight_scores, bias, *, padding):
    """
    x            : [N, C, H, W]            (NCHW, like PyTorch)
    all_weights  : [O, C, kh, kw, K]
    weight_scores: [O, C, kh, kw, K]
    bias         : [O]
    returns      : [N, O, H_out, W_out]    (NCHW)
    """
    N, C, H, W = x.shape
    O, _, kh, kw, _K = all_weights.shape

    # --- set_weights(): greedy selection of one weight per position ----------
    # (jnp.argmax first-max tie-breaking; ties have measure zero here.)
    indexes = jnp.argmax(weight_scores, axis=-1, keepdims=True)       # [O,C,kh,kw,1]
    w = jnp.take_along_axis(all_weights, indexes, axis=-1)[..., 0]    # [O,C,kh,kw]

    p = padding
    Hp, Wp = H + 2 * p, W + 2 * p
    H_out = Hp - kh + 1
    W_out = Wp - kw + 1

    # --- cheap prep in XLA: one pass over x (no kh*kw inflation, no K pad) ---
    x_pad = jnp.pad(jnp.transpose(x, (0, 2, 3, 1)).astype(jnp.float32),
                    ((0, 0), (p, p), (p, p), (0, 0)))                 # [N,Hp,Wp,C]
    w_taps = jnp.transpose(w, (2, 3, 1, 0)).astype(jnp.float32)       # [kh,kw,C,O]
    bias2d = bias.astype(jnp.float32).reshape(1, O)

    # --- explicit VMEM budget: double-buffered blocks + headroom, v7x-safe ---
    blk_bytes = (_block_vmem_bytes((1, Hp, Wp, C), 4)
                 + _block_vmem_bytes((kh, kw, C, O), 4)
                 + _block_vmem_bytes((1, O), 4)
                 + _block_vmem_bytes((1, H_out, W_out, O), 4))
    vmem_limit = int(min(max(4 * blk_bytes, 8 << 20), 40 << 20))

    kernel = functools.partial(_conv_tap_kernel, kh=kh, kw=kw,
                               h_out=H_out, w_out=W_out)

    out_nhwc = pl.pallas_call(
        kernel,
        out_shape=jax.ShapeDtypeStruct((N, H_out, W_out, O), jnp.float32),
        grid=(N,),
        in_specs=[
            pl.BlockSpec((1, Hp, Wp, C), lambda n: (n, 0, 0, 0)),     # x, one batch
            pl.BlockSpec((kh, kw, C, O), lambda n: (0, 0, 0, 0)),     # weights (resident)
            pl.BlockSpec((1, O), lambda n: (0, 0)),                   # bias   (resident)
        ],
        out_specs=pl.BlockSpec((1, H_out, W_out, O), lambda n: (n, 0, 0, 0)),
        compiler_params=pltpu.CompilerParams(
            dimension_semantics=("parallel",),
            vmem_limit_bytes=vmem_limit),
    )(x_pad, w_taps, bias2d)

    # TODO(synk): if the surrounding model can consume NHWC, return `out_nhwc`
    # directly and skip this final relayout pass over the (small) output.
    return jnp.transpose(out_nhwc, (0, 3, 1, 2))                      # NCHW


# -----------------------------------------------------------------------------
# main
# -----------------------------------------------------------------------------
if __name__ == "__main__":
    # Module hyper-params (small synthetic shapes)
    in_channels, out_channels = 4, 8
    kernel_size, padding, K = 3, 1, 4
    N, H, W = 2, 16, 16

    # Deterministic parameter init mirroring Conv2d_SM.__init__
    fan_in = in_channels * kernel_size * kernel_size        # 36
    fan_out = out_channels * kernel_size * kernel_size      # 72
    std = math.sqrt(2.0 / float(fan_in + fan_out))

    key = jax.random.PRNGKey(0)
    k_x, k_aw, k_ws, k_b = jax.random.split(key, 4)

    w_shape = (out_channels, in_channels, kernel_size, kernel_size, K)
    all_weights = jax.random.uniform(
        k_aw, w_shape, dtype=jnp.float32, minval=-std, maxval=std)
    weight_scores = jax.random.uniform(
        k_ws, w_shape, dtype=jnp.float32, minval=0.0, maxval=std)
    bias_bound = 1.0 / math.sqrt(fan_in)
    bias = jax.random.uniform(
        k_b, (out_channels,), dtype=jnp.float32,
        minval=-bias_bound, maxval=bias_bound)

    x = jax.random.normal(k_x, (N, in_channels, H, W), dtype=jnp.float32)

    # Run the Pallas-backed forward pass
    y = conv2d_sm_forward(x, all_weights, weight_scores, bias, padding=padding)
    y = jax.block_until_ready(y)

    # Reference: same greedy weight selection + fp32 conv (HIGHEST precision).
    idx = jnp.argmax(weight_scores, axis=-1, keepdims=True)
    w_sel = jnp.take_along_axis(all_weights, idx, axis=-1)[..., 0]
    y_ref = lax.conv_general_dilated(
        x, w_sel, window_strides=(1, 1),
        padding=((padding, padding), (padding, padding)),
        dimension_numbers=("NCHW", "OIHW", "NCHW"),
        precision=lax.Precision.HIGHEST)
    y_ref = y_ref + bias.reshape(1, -1, 1, 1)

    assert y.shape == (N, out_channels, H, W)
    # Tolerance covers the MXU's f32 pass decomposition on the in-kernel dots;
    # any structural bug (tap misalignment, wrong weight pick, missing bias)
    # produces errors orders of magnitude larger.
    assert jnp.allclose(y, y_ref, rtol=1e-2, atol=1e-2), \
        float(jnp.max(jnp.abs(y - y_ref)))

    print("KERNEL_OK")
</pallas_src>

<mosaic_0001>
module attributes {stable_mosaic.version = 11 : i64} {
  func.func @_conv_tap_kernel(%arg0: i32, %arg1: memref<1x18x18x4xf32, #tpu.memory_space<vmem>>, %arg2: memref<3x3x4x8xf32, #tpu.memory_space<vmem>>, %arg3: memref<1x8xf32, #tpu.memory_space<vmem>>, %arg4: memref<1x16x16x8xf32, #tpu.memory_space<vmem>>) attributes {dimension_semantics = [#tpu.dimension_semantics<parallel>], iteration_bounds = array<i64: 2>, scalar_prefetch = 0 : i64, scratch_operands = 0 : i64, tpu.core_type = #tpu.core_type<tc>, window_params = [{transform_indices = @transform_0, window_bounds = array<i64: 1, 18, 18, 4>}, {pipeline_mode = #tpu.pipeline_mode<synchronous>, transform_indices = @transform_1, window_bounds = array<i64: 3, 3, 4, 8>}, {pipeline_mode = #tpu.pipeline_mode<synchronous>, transform_indices = @transform_2, window_bounds = array<i64: 1, 8>}, {transform_indices = @transform_3, window_bounds = array<i64: 1, 16, 16, 8>}]} {
    %c0 = arith.constant 0 : index
    %c0_0 = arith.constant 0 : index
    %0 = vector.load %arg3[%c0, %c0_0] : memref<1x8xf32, #tpu.memory_space<vmem>>, vector<1x8xf32>
    %1 = vector.shape_cast %0 : vector<1x8xf32> to vector<8xf32>
    %2 = vector.shape_cast %1 : vector<8xf32> to vector<1x8xf32>
    %3 = vector.broadcast %2 : vector<1x8xf32> to vector<256x8xf32>
    %c0_1 = arith.constant 0 : index
    %c0_2 = arith.constant 0 : index
    %c0_3 = arith.constant 0 : index
    %c0_4 = arith.constant 0 : index
    %4 = vector.load %arg1[%c0_1, %c0_2, %c0_3, %c0_4] : memref<1x18x18x4xf32, #tpu.memory_space<vmem>>, vector<1x16x16x4xf32>
    %5 = vector.shape_cast %4 : vector<1x16x16x4xf32> to vector<16x16x4xf32>
    %6 = vector.shape_cast %5 : vector<16x16x4xf32> to vector<256x4xf32>
    %c0_5 = arith.constant 0 : index
    %c0_6 = arith.constant 0 : index
    %c0_7 = arith.constant 0 : index
    %c0_8 = arith.constant 0 : index
    %7 = vector.load %arg2[%c0_5, %c0_6, %c0_7, %c0_8] : memref<3x3x4x8xf32, #tpu.memory_space<vmem>>, vector<1x1x4x8xf32>
    %8 = vector.shape_cast %7 : vector<1x1x4x8xf32> to vector<4x8xf32>
    %cst = arith.constant dense<0.000000e+00> : vector<256x8xf32>
    %9 = tpu.matmul %6, %8, %cst {dimension_numbers = #tpu.dot_dimension_numbers<[1], [0], [0], [1], [0, 0, 1, 1], [], []>} : vector<256x4xf32>, vector<4x8xf32>, vector<256x8xf32> -> vector<256x8xf32>
    %10 = arith.addf %3, %9 : vector<256x8xf32>
    %c0_9 = arith.constant 0 : index
    %c0_10 = arith.constant 0 : index
    %c1 = arith.constant 1 : index
    %c0_11 = arith.constant 0 : index
    %11 = vector.load %arg1[%c0_9, %c0_10, %c1, %c0_11] : memref<1x18x18x4xf32, #tpu.memory_space<vmem>>, vector<1x16x16x4xf32>
    %12 = vector.shape_cast %11 : vector<1x16x16x4xf32> to vector<16x16x4xf32>
    %13 = vector.shape_cast %12 : vector<16x16x4xf32> to vector<256x4xf32>
    %c0_12 = arith.constant 0 : index
    %c1_13 = arith.constant 1 : index
    %c0_14 = arith.constant 0 : index
    %c0_15 = arith.constant 0 : index
    %14 = vector.load %arg2[%c0_12, %c1_13, %c0_14, %c0_15] : memref<3x3x4x8xf32, #tpu.memory_space<vmem>>, vector<1x1x4x8xf32>
    %15 = vector.shape_cast %14 : vector<1x1x4x8xf32> to vector<4x8xf32>
    %cst_16 = arith.constant dense<0.000000e+00> : vector<256x8xf32>
    %16 = tpu.matmul %13, %15, %cst_16 {dimension_numbers = #tpu.dot_dimension_numbers<[1], [0], [0], [1], [0, 0, 1, 1], [], []>} : vector<256x4xf32>, vector<4x8xf32>, vector<256x8xf32> -> vector<256x8xf32>
    %17 = arith.addf %10, %16 : vector<256x8xf32>
    %c0_17 = arith.constant 0 : index
    %c0_18 = arith.constant 0 : index
    %c2 = arith.constant 2 : index
    %c0_19 = arith.constant 0 : index
    %18 = vector.load %arg1[%c0_17, %c0_18, %c2, %c0_19] : memref<1x18x18x4xf32, #tpu.memory_space<vmem>>, vector<1x16x16x4xf32>
    %19 = vector.shape_cast %18 : vector<1x16x16x4xf32> to vector<16x16x4xf32>
    %20 = vector.shape_cast %19 : vector<16x16x4xf32> to vector<256x4xf32>
    %c0_20 = arith.constant 0 : index
    %c2_21 = arith.constant 2 : index
    %c0_22 = arith.constant 0 : index
    %c0_23 = arith.constant 0 : index
    %21 = vector.load %arg2[%c0_20, %c2_21, %c0_22, %c0_23] : memref<3x3x4x8xf32, #tpu.memory_space<vmem>>, vector<1x1x4x8xf32>
    %22 = vector.shape_cast %21 : vector<1x1x4x8xf32> to vector<4x8xf32>
    %cst_24 = arith.constant dense<0.000000e+00> : vector<256x8xf32>
    %23 = tpu.matmul %20, %22, %cst_24 {dimension_numbers = #tpu.dot_dimension_numbers<[1], [0], [0], [1], [0, 0, 1, 1], [], []>} : vector<256x4xf32>, vector<4x8xf32>, vector<256x8xf32> -> vector<256x8xf32>
    %24 = arith.addf %17, %23 : vector<256x8xf32>
    %c0_25 = arith.constant 0 : index
    %c1_26 = arith.constant 1 : index
    %c0_27 = arith.constant 0 : index
    %c0_28 = arith.constant 0 : index
    %25 = vector.load %arg1[%c0_25, %c1_26, %c0_27, %c0_28] : memref<1x18x18x4xf32, #tpu.memory_space<vmem>>, vector<1x16x16x4xf32>
    %26 = vector.shape_cast %25 : vector<1x16x16x4xf32> to vector<16x16x4xf32>
    %27 = vector.shape_cast %26 : vector<16x16x4xf32> to vector<256x4xf32>
    %c1_29 = arith.constant 1 : index
    %c0_30 = arith.constant 0 : index
    %c0_31 = arith.constant 0 : index
    %c0_32 = arith.constant 0 : index
    %28 = vector.load %arg2[%c1_29, %c0_30, %c0_31, %c0_32] : memref<3x3x4x8xf32, #tpu.memory_space<vmem>>, vector<1x1x4x8xf32>
    %29 = vector.shape_cast %28 : vector<1x1x4x8xf32> to vector<4x8xf32>
    %cst_33 = arith.constant dense<0.000000e+00> : vector<256x8xf32>
    %30 = tpu.matmul %27, %29, %cst_33 {dimension_numbers = #tpu.dot_dimension_numbers<[1], [0], [0], [1], [0, 0, 1, 1], [], []>} : vector<256x4xf32>, vector<4x8xf32>, vector<256x8xf32> -> vector<256x8xf32>
    %31 = arith.addf %24, %30 : vector<256x8xf32>
    %c0_34 = arith.constant 0 : index
    %c1_35 = arith.constant 1 : index
    %c1_36 = arith.constant 1 : index
    %c0_37 = arith.constant 0 : index
    %32 = vector.load %arg1[%c0_34, %c1_35, %c1_36, %c0_37] : memref<1x18x18x4xf32, #tpu.memory_space<vmem>>, vector<1x16x16x4xf32>
    %33 = vector.shape_cast %32 : vector<1x16x16x4xf32> to vector<16x16x4xf32>
    %34 = vector.shape_cast %33 : vector<16x16x4xf32> to vector<256x4xf32>
    %c1_38 = arith.constant 1 : index
    %c1_39 = arith.constant 1 : index
    %c0_40 = arith.constant 0 : index
    %c0_41 = arith.constant 0 : index
    %35 = vector.load %arg2[%c1_38, %c1_39, %c0_40, %c0_41] : memref<3x3x4x8xf32, #tpu.memory_space<vmem>>, vector<1x1x4x8xf32>
    %36 = vector.shape_cast %35 : vector<1x1x4x8xf32> to vector<4x8xf32>
    %cst_42 = arith.constant dense<0.000000e+00> : vector<256x8xf32>
    %37 = tpu.matmul %34, %36, %cst_42 {dimension_numbers = #tpu.dot_dimension_numbers<[1], [0], [0], [1], [0, 0, 1, 1], [], []>} : vector<256x4xf32>, vector<4x8xf32>, vector<256x8xf32> -> vector<256x8xf32>
    %38 = arith.addf %31, %37 : vector<256x8xf32>
    %c0_43 = arith.constant 0 : index
    %c1_44 = arith.constant 1 : index
    %c2_45 = arith.constant 2 : index
    %c0_46 = arith.constant 0 : index
    %39 = vector.load %arg1[%c0_43, %c1_44, %c2_45, %c0_46] : memref<1x18x18x4xf32, #tpu.memory_space<vmem>>, vector<1x16x16x4xf32>
    %40 = vector.shape_cast %39 : vector<1x16x16x4xf32> to vector<16x16x4xf32>
    %41 = vector.shape_cast %40 : vector<16x16x4xf32> to vector<256x4xf32>
    %c1_47 = arith.constant 1 : index
    %c2_48 = arith.constant 2 : index
    %c0_49 = arith.constant 0 : index
    %c0_50 = arith.constant 0 : index
    %42 = vector.load %arg2[%c1_47, %c2_48, %c0_49, %c0_50] : memref<3x3x4x8xf32, #tpu.memory_space<vmem>>, vector<1x1x4x8xf32>
    %43 = vector.shape_cast %42 : vector<1x1x4x8xf32> to vector<4x8xf32>
    %cst_51 = arith.constant dense<0.000000e+00> : vector<256x8xf32>
    %44 = tpu.matmul %41, %43, %cst_51 {dimension_numbers = #tpu.dot_dimension_numbers<[1], [0], [0], [1], [0, 0, 1, 1], [], []>} : vector<256x4xf32>, vector<4x8xf32>, vector<256x8xf32> -> vector<256x8xf32>
    %45 = arith.addf %38, %44 : vector<256x8xf32>
    %c0_52 = arith.constant 0 : index
    %c2_53 = arith.constant 2 : index
    %c0_54 = arith.constant 0 : index
    %c0_55 = arith.constant 0 : index
    %46 = vector.load %arg1[%c0_52, %c2_53, %c0_54, %c0_55] : memref<1x18x18x4xf32, #tpu.memory_space<vmem>>, vector<1x16x16x4xf32>
    %47 = vector.shape_cast %46 : vector<1x16x16x4xf32> to vector<16x16x4xf32>
    %48 = vector.shape_cast %47 : vector<16x16x4xf32> to vector<256x4xf32>
    %c2_56 = arith.constant 2 : index
    %c0_57 = arith.constant 0 : index
    %c0_58 = arith.constant 0 : index
    %c0_59 = arith.constant 0 : index
    %49 = vector.load %arg2[%c2_56, %c0_57, %c0_58, %c0_59] : memref<3x3x4x8xf32, #tpu.memory_space<vmem>>, vector<1x1x4x8xf32>
    %50 = vector.shape_cast %49 : vector<1x1x4x8xf32> to vector<4x8xf32>
    %cst_60 = arith.constant dense<0.000000e+00> : vector<256x8xf32>
    %51 = tpu.matmul %48, %50, %cst_60 {dimension_numbers = #tpu.dot_dimension_numbers<[1], [0], [0], [1], [0, 0, 1, 1], [], []>} : vector<256x4xf32>, vector<4x8xf32>, vector<256x8xf32> -> vector<256x8xf32>
    %52 = arith.addf %45, %51 : vector<256x8xf32>
    %c0_61 = arith.constant 0 : index
    %c2_62 = arith.constant 2 : index
    %c1_63 = arith.constant 1 : index
    %c0_64 = arith.constant 0 : index
    %53 = vector.load %arg1[%c0_61, %c2_62, %c1_63, %c0_64] : memref<1x18x18x4xf32, #tpu.memory_space<vmem>>, vector<1x16x16x4xf32>
    %54 = vector.shape_cast %53 : vector<1x16x16x4xf32> to vector<16x16x4xf32>
    %55 = vector.shape_cast %54 : vector<16x16x4xf32> to vector<256x4xf32>
    %c2_65 = arith.constant 2 : index
    %c1_66 = arith.constant 1 : index
    %c0_67 = arith.constant 0 : index
    %c0_68 = arith.constant 0 : index
    %56 = vector.load %arg2[%c2_65, %c1_66, %c0_67, %c0_68] : memref<3x3x4x8xf32, #tpu.memory_space<vmem>>, vector<1x1x4x8xf32>
    %57 = vector.shape_cast %56 : vector<1x1x4x8xf32> to vector<4x8xf32>
    %cst_69 = arith.constant dense<0.000000e+00> : vector<256x8xf32>
    %58 = tpu.matmul %55, %57, %cst_69 {dimension_numbers = #tpu.dot_dimension_numbers<[1], [0], [0], [1], [0, 0, 1, 1], [], []>} : vector<256x4xf32>, vector<4x8xf32>, vector<256x8xf32> -> vector<256x8xf32>
    %59 = arith.addf %52, %58 : vector<256x8xf32>
    %c0_70 = arith.constant 0 : index
    %c2_71 = arith.constant 2 : index
    %c2_72 = arith.constant 2 : index
    %c0_73 = arith.constant 0 : index
    %60 = vector.load %arg1[%c0_70, %c2_71, %c2_72, %c0_73] : memref<1x18x18x4xf32, #tpu.memory_space<vmem>>, vector<1x16x16x4xf32>
    %61 = vector.shape_cast %60 : vector<1x16x16x4xf32> to vector<16x16x4xf32>
    %62 = vector.shape_cast %61 : vector<16x16x4xf32> to vector<256x4xf32>
    %c2_74 = arith.constant 2 : index
    %c2_75 = arith.constant 2 : index
    %c0_76 = arith.constant 0 : index
    %c0_77 = arith.constant 0 : index
    %63 = vector.load %arg2[%c2_74, %c2_75, %c0_76, %c0_77] : memref<3x3x4x8xf32, #tpu.memory_space<vmem>>, vector<1x1x4x8xf32>
    %64 = vector.shape_cast %63 : vector<1x1x4x8xf32> to vector<4x8xf32>
    %cst_78 = arith.constant dense<0.000000e+00> : vector<256x8xf32>
    %65 = tpu.matmul %62, %64, %cst_78 {dimension_numbers = #tpu.dot_dimension_numbers<[1], [0], [0], [1], [0, 0, 1, 1], [], []>} : vector<256x4xf32>, vector<4x8xf32>, vector<256x8xf32> -> vector<256x8xf32>
    %66 = arith.addf %59, %65 : vector<256x8xf32>
    %67 = vector.shape_cast %66 : vector<256x8xf32> to vector<1x16x16x8xf32>
    %c0_79 = arith.constant 0 : index
    %c0_80 = arith.constant 0 : index
    %c0_81 = arith.constant 0 : index
    %c0_82 = arith.constant 0 : index
    %68 = vector.load %arg4[%c0_79, %c0_80, %c0_81, %c0_82] : memref<1x16x16x8xf32, #tpu.memory_space<vmem>>, vector<1x16x16x8xf32>
    tpu.vector_store %arg4[%c0_79, %c0_80, %c0_81, %c0_82], %67 {strides = array<i32>} : memref<1x16x16x8xf32, #tpu.memory_space<vmem>>, vector<1x16x16x8xf32>,
    return
  }
  func.func @transform_0(%arg0: i32) -> (i32, i32, i32, i32) {
    %c0_i32 = arith.constant 0 : i32
    %c0_i32_0 = arith.constant 0 : i32
    %c0_i32_1 = arith.constant 0 : i32
    %c0_i32_2 = arith.constant 0 : i32
    return %arg0, %c0_i32, %c0_i32_0, %c0_i32_1 : i32, i32, i32, i32
  }
  func.func @transform_1(%arg0: i32) -> (i32, i32, i32, i32) {
    %c0_i32 = arith.constant 0 : i32
    %c0_i32_0 = arith.constant 0 : i32
    %c0_i32_1 = arith.constant 0 : i32
    %c0_i32_2 = arith.constant 0 : i32
    %c0_i32_3 = arith.constant 0 : i32
    return %c0_i32, %c0_i32_0, %c0_i32_1, %c0_i32_2 : i32, i32, i32, i32
  }
  func.func @transform_2(%arg0: i32) -> (i32, i32) {
    %c0_i32 = arith.constant 0 : i32
    %c0_i32_0 = arith.constant 0 : i32
    %c0_i32_1 = arith.constant 0 : i32
    return %c0_i32, %c0_i32_0 : i32, i32
  }
  func.func @transform_3(%arg0: i32) -> (i32, i32, i32, i32) {
    %c0_i32 = arith.constant 0 : i32
    %c0_i32_0 = arith.constant 0 : i32
    %c0_i32_1 = arith.constant 0 : i32
    %c0_i32_2 = arith.constant 0 : i32
    return %arg0, %c0_i32, %c0_i32_0, %c0_i32_1 : i32, i32, i32, i32
  }
}

</mosaic_0001>

<llo_original>
// kernel: conv2d_sm_forward.1
$region0: #{conv2d_sm_forward.1}
  #allocation0 [shape = 'u32[]', space=smem, size = 0x4, offset = 0x4, fixed_abs, tag = 'smem constant byte address 0x4 - core index']
  #allocation1 [shape = 'u32[144,128]{1,0:T(1,128)}', space=vmem, size = 0x12000, scoped, tag = 'internal scratch']
  %s0 = inlined_call_operand.vmem [shape: f32[2,18,18,4], index: 0, kind: input, shape index: {}]
  %s1 = inlined_call_operand.vmem [shape: f32[3,3,4,8], index: 1, kind: input, shape index: {}]
  %s2 = inlined_call_operand.vmem [shape: f32[1,8], index: 2, kind: input, shape index: {}]
  %s3 = inlined_call_operand.vmem [shape: f32[2,16,16,8], index: 3, kind: output, shape index: {}]
  %s4 = sld [smem:[#allocation0]]
  $region45: #{conv2d_sm_forward.1} parent=0
    _
  %s6 = ssub.s32 1, %s4
  %s7 = scalar_select 0, %s6, %s4
  loop: start=0, step=1, limit=4
  $region2: #{conv2d_sm_forward.1} parent=0 // loop_pre_header
    _
  $region3: #{conv2d_sm_forward.1} parent=0 // loop_header
    %s9 = sphi 0, %s13
    %p10 = scmp.ge.s32.totalorder %s9, 4
    %s19 = sphi 0, %s21
    %s22 = sphi 0, %s19
    %s23 = sphi 0, %s22
    %s39 = sphi 0, %s23
    %s43 = sphi 0, %s43
    %s45 = sphi 0, %s43
    %s46 = sphi 0, %s45
    %s60 = sphi 0, %s46
    %s64 = sphi 0, %s64
    %s66 = sphi 0, %s64
    %s67 = sphi 0, %s66
    %s81 = sphi 0, %s67
    %s87 = sphi 0, %s89
    %s90 = sphi 0, %s87
    %s91 = sphi 0, %s90
    %s107 = sphi 0, %s91
  $region4: #{conv2d_sm_forward.1} parent=0 // loop_header_branch
    %12 = sbr.rel (%p10) target = $region8
  $region5: #{conv2d_sm_forward.1} parent=0 // loop_body
    %s14 = ssub.s32 %s9, 1
    %s15 = ssub.s32 %s9, 2
    %s16 = sadd.s32 %s9, 1
    %s17 = ssub.s32 %s9, %s16
    %p18 = scmp.eq.s32.totalorder %s17, 0
    %s20 = sadd.s32 %s19, 1
    %s21 = scalar_select %p18, %s19, %s20
    %p24 = pneg %p18
    %p25 = scmp.eq.s32.totalorder %s9, 1
    %p26 = por %p24, %p25
    %p27 = scmp.ne.s32.totalorder %s19, %s22
    %p28 = scmp.eq.s32.totalorder %s9, 0
    %p29 = por %p27, %p28
    %p30 = scmp.ne.s32.totalorder %s19, %s22
    %p31 = scmp.eq.s32.totalorder %s14, 1
    %p32 = por %p30, %p31
    %p33 = scmp.ne.s32.totalorder %s22, %s23
    %p34 = scmp.eq.s32.totalorder %s14, 0
    %p35 = por %p33, %p34
    %p36 = scmp.ne.s32.totalorder %s22, %s23
    %p37 = scmp.eq.s32.totalorder %s15, 1
    %p38 = por %p36, %p37
    %p40 = scmp.ne.s32.totalorder %s23, %s39
    %p41 = scmp.eq.s32.totalorder %s15, 0
    %p42 = por %p40, %p41
    %s44 = sadd.s32 %s43, 1
    %p47 = scmp.eq.s32.totalorder %s9, 1
    %p48 = scmp.ne.s32.totalorder %s43, %s45
    %p49 = scmp.eq.s32.totalorder %s9, 0
    %p50 = por %p48, %p49
    %p51 = scmp.ne.s32.totalorder %s43, %s45
    %p52 = scmp.eq.s32.totalorder %s14, 1
    %p53 = por %p51, %p52
    %p54 = scmp.ne.s32.totalorder %s45, %s46
    %p55 = scmp.eq.s32.totalorder %s14, 0
    %p56 = por %p54, %p55
    %p57 = scmp.ne.s32.totalorder %s45, %s46
    %p58 = scmp.eq.s32.totalorder %s15, 1
    %p59 = por %p57, %p58
    %p61 = scmp.ne.s32.totalorder %s46, %s60
    %p62 = scmp.eq.s32.totalorder %s15, 0
    %p63 = por %p61, %p62
    %s65 = sadd.s32 %s64, 1
    %p68 = scmp.eq.s32.totalorder %s9, 1
    %p69 = scmp.ne.s32.totalorder %s64, %s66
    %p70 = scmp.eq.s32.totalorder %s9, 0
    %p71 = por %p69, %p70
    %p72 = scmp.ne.s32.totalorder %s64, %s66
    %p73 = scmp.eq.s32.totalorder %s14, 1
    %p74 = por %p72, %p73
    %p75 = scmp.ne.s32.totalorder %s66, %s67
    %p76 = scmp.eq.s32.totalorder %s14, 0
    %p77 = por %p75, %p76
    %p78 = scmp.ne.s32.totalorder %s66, %s67
    %p79 = scmp.eq.s32.totalorder %s15, 1
    %p80 = por %p78, %p79
    %p82 = scmp.ne.s32.totalorder %s67, %s81
    %p83 = scmp.eq.s32.totalorder %s15, 0
    %p84 = por %p82, %p83
    %s85 = ssub.s32 %s9, %s16
    %p86 = scmp.eq.s32.totalorder %s85, 0
    %s88 = sadd.s32 %s87, 1
    %s89 = scalar_select %p86, %s87, %s88
    %p92 = pneg %p86
    %p93 = scmp.eq.s32.totalorder %s9, 1
    %p94 = por %p92, %p93
    %p95 = scmp.ne.s32.totalorder %s87, %s90
    %p96 = scmp.eq.s32.totalorder %s9, 0
    %p97 = por %p95, %p96
    %p98 = scmp.ne.s32.totalorder %s87, %s90
    %p99 = scmp.eq.s32.totalorder %s14, 1
    %p100 = por %p98, %p99
    %p101 = scmp.ne.s32.totalorder %s90, %s91
    %p102 = scmp.eq.s32.totalorder %s14, 0
    %p103 = por %p101, %p102
    %p104 = scmp.ne.s32.totalorder %s90, %s91
    %p105 = scmp.eq.s32.totalorder %s15, 1
    %p106 = por %p104, %p105
    %p108 = scmp.ne.s32.totalorder %s91, %s107
    %p109 = scmp.eq.s32.totalorder %s15, 0
    %p110 = por %p108, %p109
    %p111 = scmp.le.s32.totalorder 1, %s9
    %p112 = scmp.lt.s32.totalorder %s9, 3
    %p113 = pnand %p111, %p112
    %p114 = pneg %p113
    // Predicated region
    $region9: #{conv2d_sm_forward.1} parent=5 // pred_check
      _
    $region10: #{conv2d_sm_forward.1} parent=5 // pred_check_branch
      %116 = sbr.rel (%p113) target = $region12
    $region11: #{conv2d_sm_forward.1} parent=5 // pred_region
      %s117 = ssub.s32 %s9, 1
      // Predicated region
      $region13: #{conv2d_sm_forward.1} parent=11 // pred_check
        %p118 = pneg %p56
      $region14: #{conv2d_sm_forward.1} parent=11 // pred_check_branch
        %120 = sbr.rel (%p118) target = $region16
      $region15: #{conv2d_sm_forward.1} parent=11 // pred_region
        _
      $region16: #{conv2d_sm_forward.1} parent=11 // pred_fallthru
        _
      // Predicated region
      $region17: #{conv2d_sm_forward.1} parent=11 // pred_check
        %p121 = pneg %p77
      $region18: #{conv2d_sm_forward.1} parent=11 // pred_check_branch
        %123 = sbr.rel (%p121) target = $region20
      $region19: #{conv2d_sm_forward.1} parent=11 // pred_region
        _
      $region20: #{conv2d_sm_forward.1} parent=11 // pred_fallthru
        _
    $region12: #{conv2d_sm_forward.1} parent=5 // pred_fallthru
      _
    %p124 = scmp.lt.s32.totalorder %s9, 2
    // Predicated region
    $region21: #{conv2d_sm_forward.1} parent=5 // pred_check
      %p125 = pneg %p124
    $region22: #{conv2d_sm_forward.1} parent=5 // pred_check_branch
      %127 = sbr.rel (%p125) target = $region24
    $region23: #{conv2d_sm_forward.1} parent=5 // pred_region
      // Predicated region
      $region25: #{conv2d_sm_forward.1} parent=23 // pred_check
        %p128 = pneg %p29
      $region26: #{conv2d_sm_forward.1} parent=23 // pred_check_branch
        %130 = sbr.rel (%p128) target = $region28
      $region27: #{conv2d_sm_forward.1} parent=23 // pred_region
        %p131 = scmp.lt.s32.totalorder %s9, 1
        %s132 = scalar_select %p131, %s9, 1
        %s133 = smul.addr %s132, 54
        %s134 = smul.addr %s133, 8
        %s135 = scalar_lea.vmem %s0, %s134
      $region28: #{conv2d_sm_forward.1} parent=23 // pred_fallthru
        _
    $region24: #{conv2d_sm_forward.1} parent=5 // pred_fallthru
      _
    %p136 = scmp.le.s32.totalorder 1, %s9
    %p137 = scmp.lt.s32.totalorder %s9, 3
    %p138 = pnand %p136, %p137
    %p139 = pneg %p138
    // Predicated region
    $region29: #{conv2d_sm_forward.1} parent=5 // pred_check
      _
    $region30: #{conv2d_sm_forward.1} parent=5 // pred_check_branch
      %141 = sbr.rel (%p138) target = $region32
    $region31: #{conv2d_sm_forward.1} parent=5 // pred_region
      %s142 = ssub.s32 %s9, 1
      %p143 = scmp.lt.s32.totalorder %s14, 1
      %s144 = scalar_select %p143, %s14, 1
      %s145 = smul.addr %s144, 54
      %s146 = smul.addr %s145, 8
      %s147 = scalar_lea.vmem %s0, %s146
      %p148 = pneg %p35
      %p149 = pneg %p32
      %p150 = pneg %p56
      %p151 = pneg %p53
      %p152 = pneg %p77
      %p153 = pneg %p74
      %p154 = pneg %p103
      %p155 = pneg %p100
      %p156 = scmp.lt.s32.totalorder %s14, 1
      %s157 = scalar_select %p156, %s14, 1
      %s158 = smul.addr %s157, 32
      %s159 = smul.addr %s158, 8
      %s160 = scalar_lea.vmem %s3, %s159
      %p161 = scmp.lt.s32.totalorder %s14, 1
      %s162 = scalar_select %p161, %s14, 1
      %s163 = smul.addr %s162, 54
      %s164 = smul.addr %s163, 8
      %s165 = scalar_lea.vmem %s0, %s164
      %p166 = scmp.lt.s32.totalorder %s14, 1
      %s167 = scalar_select %p166, %s14, 1
      %s168 = smul.addr %s167, 32
      %s169 = smul.addr %s168, 8
      %s170 = scalar_lea.vmem %s3, %s169
      %v171 = vld [vmem:[%s2] sm:$0x1]
      %v173 = vlaneseq
      %v174 = vshrl.u32 %v173, 7
      %v175 = vsub.s32 0, %v174
      %v176 = vrot.slane %v171, %v175
      %v178 = vld [vmem:[%s165] sm:$0xff]
      %v179 = vld [vmem:[%s165 + $0x8] sm:$0xff]
      %v180 = vld [vmem:[%s165 + $0x18] sm:$0xff]
      %v181 = vld [vmem:[%s165 + $0x20] sm:$0xff]
      %v182 = vld [vmem:[%s165 + $0x30] sm:$0xff]
      %v183 = vld [vmem:[%s165 + $0x38] sm:$0xff]
      %v184 = vld [vmem:[%s165 + $0x48] sm:$0xff]
      %v185 = vld [vmem:[%s165 + $0x50] sm:$0xff]
      %v186 = vld [vmem:[%s165 + $0x60] sm:$0xff]
      %v187 = vld [vmem:[%s165 + $0x68] sm:$0xff]
      %v188 = vld [vmem:[%s165 + $0x78] sm:$0xff]
      %v189 = vld [vmem:[%s165 + $0x80] sm:$0xff]
      %v190 = vld [vmem:[%s165 + $0x90] sm:$0xff]
      %v191 = vld [vmem:[%s165 + $0x98] sm:$0xff]
      %v192 = vld [vmem:[%s165 + $0xa8] sm:$0xff]
      %v193 = vld [vmem:[%s165 + $0xb0] sm:$0xff]
      %v194 = vld [vmem:[%s165 + $0xc0] sm:$0xff]
      %v195 = vld [vmem:[%s165 + $0xc8] sm:$0xff]
      %v196 = vld [vmem:[%s165 + $0xd8] sm:$0xff]
      %v197 = vld [vmem:[%s165 + $0xe0] sm:$0xff]
      %v198 = vld [vmem:[%s165 + $0xf0] sm:$0xff]
      %v199 = vld [vmem:[%s165 + $0xf8] sm:$0xff]
      %v200 = vld [vmem:[%s165 + $0x108] sm:$0xff]
      %v201 = vld [vmem:[%s165 + $0x110] sm:$0xff]
      %v202 = vld [vmem:[%s165 + $0x120] sm:$0xff]
      %v203 = vld [vmem:[%s165 + $0x128] sm:$0xff]
      %v204 = vld [vmem:[%s165 + $0x138] sm:$0xff]
      %v205 = vld [vmem:[%s165 + $0x140] sm:$0xff]
      %v206 = vld [vmem:[%s165 + $0x150] sm:$0xff]
      %v207 = vld [vmem:[%s165 + $0x158] sm:$0xff]
      %v208 = vld [vmem:[%s165 + $0x168] sm:$0xff]
      %v209 = vld [vmem:[%s165 + $0x170] sm:$0xff]
      %v210 = vld [vmem:[%s1] sm:$0xf]
      %vm211 = vcmask 31744
      %v213 = vsel %vm211, %v178, 0
      %v216 = vsel %vm211, %v179, 0
      %v219 = vsel %vm211, %v180, 0
      %v222 = vsel %vm211, %v181, 0
      %v225 = vsel %vm211, %v182, 0
      %v228 = vsel %vm211, %v183, 0
      %v231 = vsel %vm211, %v184, 0
      %v234 = vsel %vm211, %v185, 0
      %v237 = vsel %vm211, %v186, 0
      %v240 = vsel %vm211, %v187, 0
      %v243 = vsel %vm211, %v188, 0
      %v246 = vsel %vm211, %v189, 0
      %v249 = vsel %vm211, %v190, 0
      %v252 = vsel %vm211, %v191, 0
      %v255 = vsel %vm211, %v192, 0
      %v258 = vsel %vm211, %v193, 0
      %v261 = vsel %vm211, %v194, 0
      %v264 = vsel %vm211, %v195, 0
      %v267 = vsel %vm211, %v196, 0
      %v270 = vsel %vm211, %v197, 0
      %v273 = vsel %vm211, %v198, 0
      %v276 = vsel %vm211, %v199, 0
      %v279 = vsel %vm211, %v200, 0
      %v282 = vsel %vm211, %v201, 0
      %v285 = vsel %vm211, %v202, 0
      %v288 = vsel %vm211, %v203, 0
      %v291 = vsel %vm211, %v204, 0
      %v294 = vsel %vm211, %v205, 0
      %v297 = vsel %vm211, %v206, 0
      %v300 = vsel %vm211, %v207, 0
      %v303 = vsel %vm211, %v208, 0
      %v306 = vsel %vm211, %v209, 0
      %vm308 = vcmask 1043456
      %v310 = vsel %vm308, %v210, 0
      %312 = vmatprep.subr.mxu0 0.0
      %313 = vmatpush1.msra.mxu0 0.0
      %314 = vmatprep.subr.mxu0 0.0
      %315 = vmatpush1.msra.mxu0 0.0
      %316 = vmatprep.subr.mxu0 0.0
      %317 = vmatpush1.msra.mxu0 0.0
      %318 = vmatprep.subr.mxu0 0.0
      %319 = vmatpush1.msra.mxu0 0.0
      %320 = vmatprep.subr.mxu0 0.0
      %321 = vmatpush1.msra.mxu0 0.0
      %322 = vmatprep.subr.mxu0 0.0
      %323 = vmatpush1.msra.mxu0 0.0
      %324 = vmatprep.subr.mxu0 0.0
      %325 = vmatpush1.msra.mxu0 0.0
      %326 = vmatprep.subr.mxu0 0.0
      %327 = vmatpush1.msra.mxu0 0.0
      %328 = vmatprep.subr.mxu0 0.0
      %329 = vmatpush1.msra.mxu0 0.0
      %330 = vmatprep.subr.mxu0 0.0
      %331 = vmatpush1.msra.mxu0 0.0
      %332 = vmatprep.subr.mxu0 0.0
      %333 = vmatpush1.msra.mxu0 0.0
      %334 = vmatprep.subr.mxu0 0.0
      %335 = vmatpush1.msra.mxu0 0.0
      %336 = vmatprep.subr.mxu0 0.0
      %337 = vmatpush1.msra.mxu0 0.0
      %338 = vmatprep.subr.mxu0 0.0
      %339 = vmatpush1.msra.mxu0 0.0
      %340 = vmatprep.subr.mxu0 0.0
      %341 = vmatpush1.msra.mxu0 0.0
      %342 = vmatprep.subr.mxu0 0.0
      %343 = vmatpush1.msra.mxu0 %v310
      %344 = vmatprep.subr.mxu0 0.0
      %345 = vmatpush2.msra.mxu0 0.0
      %346 = vmatprep.subr.mxu0 0.0
      %347 = vmatpush2.msra.mxu0 0.0
      %348 = vmatprep.subr.mxu0 0.0
      %349 = vmatpush2.msra.mxu0 0.0
      %350 = vmatprep.subr.mxu0 0.0
      %351 = vmatpush2.msra.mxu0 0.0
      %352 = vmatprep.subr.mxu0 0.0
      %353 = vmatpush2.msra.mxu0 0.0
      %354 = vmatprep.subr.mxu0 0.0
      %355 = vmatpush2.msra.mxu0 0.0
      %356 = vmatprep.subr.mxu0 0.0
      %357 = vmatpush2.msra.mxu0 0.0
      %358 = vmatprep.subr.mxu0 0.0
      %359 = vmatpush2.msra.mxu0 0.0
      %360 = vmatprep.subr.mxu0 0.0
      %361 = vmatpush2.msra.mxu0 0.0
      %362 = vmatprep.subr.mxu0 0.0
      %363 = vmatpush2.msra.mxu0 0.0
      %364 = vmatprep.subr.mxu0 0.0
      %365 = vmatpush2.msra.mxu0 0.0
      %366 = vmatprep.subr.mxu0 0.0
      %367 = vmatpush2.msra.mxu0 0.0
      %368 = vmatprep.subr.mxu0 0.0
      %369 = vmatpush2.msra.mxu0 0.0
      %370 = vmatprep.subr.mxu0 0.0
      %371 = vmatpush2.msra.mxu0 0.0
      %372 = vmatprep.subr.mxu0 0.0
      %373 = vmatpush2.msra.mxu0 0.0
      %374 = vmatprep.subr.mxu0 0.0
      %375 = vmatpush2.msra.mxu0 0.0
      %376 = vmatprep.mubr.f32.mxu0 0.0
      %377 = vmatmul.mubr.f32.gmra.mxu0 %v213
      %v378 = vpop.f32.mrf.mxu0
      %v379 = vadd.f32 0.0, %v378
      %v380 = vpop.f32.mrf.mxu0
      %381 = vmatprep.mubr.f32.mxu0 0.0
      %382 = vmatmul.mubr.f32.gmra.mxu0 %v216
      %v383 = vpop.f32.mrf.mxu0
      %v384 = vadd.f32 0.0, %v383
      %v385 = vpop.f32.mrf.mxu0
      %386 = vmatprep.mubr.f32.mxu0 0.0
      %387 = vmatmul.mubr.f32.gmra.mxu0 %v219
      %v388 = vpop.f32.mrf.mxu0
      %v389 = vadd.f32 0.0, %v388
      %v390 = vpop.f32.mrf.mxu0
      %391 = vmatprep.mubr.f32.mxu0 0.0
      %392 = vmatmul.mubr.f32.gmra.mxu0 %v222
      %v393 = vpop.f32.mrf.mxu0
      %v394 = vadd.f32 0.0, %v393
      %v395 = vpop.f32.mrf.mxu0
      %396 = vmatprep.mubr.f32.mxu0 0.0
      %397 = vmatmul.mubr.f32.gmra.mxu0 %v225
      %v398 = vpop.f32.mrf.mxu0
      %v399 = vadd.f32 0.0, %v398
      %v400 = vpop.f32.mrf.mxu0
      %401 = vmatprep.mubr.f32.mxu0 0.0
      %402 = vmatmul.mubr.f32.gmra.mxu0 %v228
      %v403 = vpop.f32.mrf.mxu0
      %v404 = vadd.f32 0.0, %v403
      %v405 = vpop.f32.mrf.mxu0
      %406 = vmatprep.mubr.f32.mxu0 0.0
      %407 = vmatmul.mubr.f32.gmra.mxu0 %v231
      %v408 = vpop.f32.mrf.mxu0
      %v409 = vadd.f32 0.0, %v408
      %v410 = vpop.f32.mrf.mxu0
      %411 = vmatprep.mubr.f32.mxu0 0.0
      %412 = vmatmul.mubr.f32.gmra.mxu0 %v234
      %v413 = vpop.f32.mrf.mxu0
      %v414 = vadd.f32 0.0, %v413
      %v415 = vpop.f32.mrf.mxu0
      %416 = vmatprep.mubr.f32.mxu0 0.0
      %417 = vmatmul.mubr.f32.gmra.mxu0 %v237
      %v418 = vpop.f32.mrf.mxu0
      %v419 = vadd.f32 0.0, %v418
      %v420 = vpop.f32.mrf.mxu0
      %421 = vmatprep.mubr.f32.mxu0 0.0
      %422 = vmatmul.mubr.f32.gmra.mxu0 %v240
      %v423 = vpop.f32.mrf.mxu0
      %v424 = vadd.f32 0.0, %v423
      %v425 = vpop.f32.mrf.mxu0
      %426 = vmatprep.mubr.f32.mxu0 0.0
      %427 = vmatmul.mubr.f32.gmra.mxu0 %v243
      %v428 = vpop.f32.mrf.mxu0
      %v429 = vadd.f32 0.0, %v428
      %v430 = vpop.f32.mrf.mxu0
      %431 = vmatprep.mubr.f32.mxu0 0.0
      %432 = vmatmul.mubr.f32.gmra.mxu0 %v246
      %v433 = vpop.f32.mrf.mxu0
      %v434 = vadd.f32 0.0, %v433
      %v435 = vpop.f32.mrf.mxu0
      %436 = vmatprep.mubr.f32.mxu0 0.0
      %437 = vmatmul.mubr.f32.gmra.mxu0 %v249
      %v438 = vpop.f32.mrf.mxu0
      %v439 = vadd.f32 0.0, %v438
      %v440 = vpop.f32.mrf.mxu0
      %441 = vmatprep.mubr.f32.mxu0 0.0
      %442 = vmatmul.mubr.f32.gmra.mxu0 %v252
      %v443 = vpop.f32.mrf.mxu0
      %v444 = vadd.f32 0.0, %v443
      %v445 = vpop.f32.mrf.mxu0
      %446 = vmatprep.mubr.f32.mxu0 0.0
      %447 = vmatmul.mubr.f32.gmra.mxu0 %v255
      %v448 = vpop.f32.mrf.mxu0
      %v449 = vadd.f32 0.0, %v448
      %v450 = vpop.f32.mrf.mxu0
      %451 = vmatprep.mubr.f32.mxu0 0.0
      %452 = vmatmul.mubr.f32.gmra.mxu0 %v258
      %v453 = vpop.f32.mrf.mxu0
      %v454 = vadd.f32 0.0, %v453
      %v455 = vpop.f32.mrf.mxu0
      %456 = vmatprep.mubr.f32.mxu0 0.0
      %457 = vmatmul.mubr.f32.gmra.mxu0 %v261
      %v458 = vpop.f32.mrf.mxu0
      %v459 = vadd.f32 0.0, %v458
      %v460 = vpop.f32.mrf.mxu0
      %461 = vmatprep.mubr.f32.mxu0 0.0
      %462 = vmatmul.mubr.f32.gmra.mxu0 %v264
      %v463 = vpop.f32.mrf.mxu0
      %v464 = vadd.f32 0.0, %v463
      %v465 = vpop.f32.mrf.mxu0
      %466 = vmatprep.mubr.f32.mxu0 0.0
      %467 = vmatmul.mubr.f32.gmra.mxu0 %v267
      %v468 = vpop.f32.mrf.mxu0
      %v469 = vadd.f32 0.0, %v468
      %v470 = vpop.f32.mrf.mxu0
      %471 = vmatprep.mubr.f32.mxu0 0.0
      %472 = vmatmul.mubr.f32.gmra.mxu0 %v270
      %v473 = vpop.f32.mrf.mxu0
      %v474 = vadd.f32 0.0, %v473
      %v475 = vpop.f32.mrf.mxu0
      %476 = vmatprep.mubr.f32.mxu0 0.0
      %477 = vmatmul.mubr.f32.gmra.mxu0 %v273
      %v478 = vpop.f32.mrf.mxu0
      %v479 = vadd.f32 0.0, %v478
      %v480 = vpop.f32.mrf.mxu0
      %481 = vmatprep.mubr.f32.mxu0 0.0
      %482 = vmatmul.mubr.f32.gmra.mxu0 %v276
      %v483 = vpop.f32.mrf.mxu0
      %v484 = vadd.f32 0.0, %v483
      %v485 = vpop.f32.mrf.mxu0
      %486 = vmatprep.mubr.f32.mxu0 0.0
      %487 = vmatmul.mubr.f32.gmra.mxu0 %v279
      %v488 = vpop.f32.mrf.mxu0
      %v489 = vadd.f32 0.0, %v488
      %v490 = vpop.f32.mrf.mxu0
      %491 = vmatprep.mubr.f32.mxu0 0.0
      %492 = vmatmul.mubr.f32.gmra.mxu0 %v282
      %v493 = vpop.f32.mrf.mxu0
      %v494 = vadd.f32 0.0, %v493
      %v495 = vpop.f32.mrf.mxu0
      %496 = vmatprep.mubr.f32.mxu0 0.0
      %497 = vmatmul.mubr.f32.gmra.mxu0 %v285
      %v498 = vpop.f32.mrf.mxu0
      %v499 = vadd.f32 0.0, %v498
      %v500 = vpop.f32.mrf.mxu0
      %501 = vmatprep.mubr.f32.mxu0 0.0
      %502 = vmatmul.mubr.f32.gmra.mxu0 %v288
      %v503 = vpop.f32.mrf.mxu0
      %v504 = vadd.f32 0.0, %v503
      %v505 = vpop.f32.mrf.mxu0
      %506 = vmatprep.mubr.f32.mxu0 0.0
      %507 = vmatmul.mubr.f32.gmra.mxu0 %v291
      %v508 = vpop.f32.mrf.mxu0
      %v509 = vadd.f32 0.0, %v508
      %v510 = vpop.f32.mrf.mxu0
      %511 = vmatprep.mubr.f32.mxu0 0.0
      %512 = vmatmul.mubr.f32.gmra.mxu0 %v294
      %v513 = vpop.f32.mrf.mxu0
      %v514 = vadd.f32 0.0, %v513
      %v515 = vpop.f32.mrf.mxu0
      %516 = vmatprep.mubr.f32.mxu0 0.0
      %517 = vmatmul.mubr.f32.gmra.mxu0 %v297
      %v518 = vpop.f32.mrf.mxu0
      %v519 = vadd.f32 0.0, %v518
      %v520 = vpop.f32.mrf.mxu0
      %521 = vmatprep.mubr.f32.mxu0 0.0
      %522 = vmatmul.mubr.f32.gmra.mxu0 %v300
      %v523 = vpop.f32.mrf.mxu0
      %v524 = vadd.f32 0.0, %v523
      %v525 = vpop.f32.mrf.mxu0
      %526 = vmatprep.mubr.f32.mxu0 0.0
      %527 = vmatmul.mubr.f32.gmra.mxu0 %v303
      %v528 = vpop.f32.mrf.mxu0
      %v529 = vadd.f32 0.0, %v528
      %v530 = vpop.f32.mrf.mxu0
      %531 = vmatprep.mubr.f32.mxu0 0.0
      %532 = vmatmul.mubr.f32.gmra.mxu0 %v306
      %v533 = vpop.f32.mrf.mxu0
      %v534 = vadd.f32 0.0, %v533
      %v535 = vpop.f32.mrf.mxu0
      %536 = vdwg.mxu0
      %v537 = vadd.f32 %v176, %v379
      %v538 = vadd.f32 %v176, %v384
      %v539 = vadd.f32 %v176, %v389
      %v540 = vadd.f32 %v176, %v394
      %v541 = vadd.f32 %v176, %v399
      %v542 = vadd.f32 %v176, %v404
      %v543 = vadd.f32 %v176, %v409
      %v544 = vadd.f32 %v176, %v414
      %v545 = vadd.f32 %v176, %v419
      %v546 = vadd.f32 %v176, %v424
      %v547 = vadd.f32 %v176, %v429
      %v548 = vadd.f32 %v176, %v434
      %v549 = vadd.f32 %v176, %v439
      %v550 = vadd.f32 %v176, %v444
      %v551 = vadd.f32 %v176, %v449
      %v552 = vadd.f32 %v176, %v454
      %v553 = vadd.f32 %v176, %v459
      %v554 = vadd.f32 %v176, %v464
      %v555 = vadd.f32 %v176, %v469
      %v556 = vadd.f32 %v176, %v474
      %v557 = vadd.f32 %v176, %v479
      %v558 = vadd.f32 %v176, %v484
      %v559 = vadd.f32 %v176, %v489
      %v560 = vadd.f32 %v176, %v494
      %v561 = vadd.f32 %v176, %v499
      %v562 = vadd.f32 %v176, %v504
      %v563 = vadd.f32 %v176, %v509
      %v564 = vadd.f32 %v176, %v514
      %v565 = vadd.f32 %v176, %v519
      %v566 = vadd.f32 %v176, %v524
      %v567 = vadd.f32 %v176, %v529
      %v568 = vadd.f32 %v176, %v534
      %v569 = vld [vmem:[%s165 + $0x1] sm:$0xff]
      %v570 = vld [vmem:[%s165 + $0x9] sm:$0xff]
      %v571 = vld [vmem:[%s165 + $0x19] sm:$0xff]
      %v572 = vld [vmem:[%s165 + $0x21] sm:$0xff]
      %v573 = vld [vmem:[%s165 + $0x31] sm:$0xff]
      %v574 = vld [vmem:[%s165 + $0x39] sm:$0xff]
      %v575 = vld [vmem:[%s165 + $0x49] sm:$0xff]
      %v576 = vld [vmem:[%s165 + $0x51] sm:$0xff]
      %v577 = vld [vmem:[%s165 + $0x61] sm:$0xff]
      %v578 = vld [vmem:[%s165 + $0x69] sm:$0xff]
      %v579 = vld [vmem:[%s165 + $0x79] sm:$0xff]
      %v580 = vld [vmem:[%s165 + $0x81] sm:$0xff]
      %v581 = vld [vmem:[%s165 + $0x91] sm:$0xff]
      %v582 = vld [vmem:[%s165 + $0x99] sm:$0xff]
      %v583 = vld [vmem:[%s165 + $0xa9] sm:$0xff]
      %v584 = vld [vmem:[%s165 + $0xb1] sm:$0xff]
      %v585 = vld [vmem:[%s165 + $0xc1] sm:$0xff]
      %v586 = vld [vmem:[%s165 + $0xc9] sm:$0xff]
      %v587 = vld [vmem:[%s165 + $0xd9] sm:$0xff]
      %v588 = vld [vmem:[%s165 + $0xe1] sm:$0xff]
      %v589 = vld [vmem:[%s165 + $0xf1] sm:$0xff]
      %v590 = vld [vmem:[%s165 + $0xf9] sm:$0xff]
      %v591 = vld [vmem:[%s165 + $0x109] sm:$0xff]
      %v592 = vld [vmem:[%s165 + $0x111] sm:$0xff]
      %v593 = vld [vmem:[%s165 + $0x121] sm:$0xff]
      %v594 = vld [vmem:[%s165 + $0x129] sm:$0xff]
      %v595 = vld [vmem:[%s165 + $0x139] sm:$0xff]
      %v596 = vld [vmem:[%s165 + $0x141] sm:$0xff]
      %v597 = vld [vmem:[%s165 + $0x151] sm:$0xff]
      %v598 = vld [vmem:[%s165 + $0x159] sm:$0xff]
      %v599 = vld [vmem:[%s165 + $0x169] sm:$0xff]
      %v600 = vld [vmem:[%s165 + $0x171] sm:$0xff]
      %s601 = scalar_lea.vmem %s1, 4
      %v602 = vld [vmem:[%s601] sm:$0xf]
      %v604 = vsel %vm211, %v569, 0
      %v607 = vsel %vm211, %v570, 0
      %v610 = vsel %vm211, %v571, 0
      %v613 = vsel %vm211, %v572, 0
      %v616 = vsel %vm211, %v573, 0
      %v619 = vsel %vm211, %v574, 0
      %v622 = vsel %vm211, %v575, 0
      %v625 = vsel %vm211, %v576, 0
      %v628 = vsel %vm211, %v577, 0
      %v631 = vsel %vm211, %v578, 0
      %v634 = vsel %vm211, %v579, 0
      %v637 = vsel %vm211, %v580, 0
      %v640 = vsel %vm211, %v581, 0
      %v643 = vsel %vm211, %v582, 0
      %v646 = vsel %vm211, %v583, 0
      %v649 = vsel %vm211, %v584, 0
      %v652 = vsel %vm211, %v585, 0
      %v655 = vsel %vm211, %v586, 0
      %v658 = vsel %vm211, %v587, 0
      %v661 = vsel %vm211, %v588, 0
      %v664 = vsel %vm211, %v589, 0
      %v667 = vsel %vm211, %v590, 0
      %v670 = vsel %vm211, %v591, 0
      %v673 = vsel %vm211, %v592, 0
      %v676 = vsel %vm211, %v593, 0
      %v679 = vsel %vm211, %v594, 0
      %v682 = vsel %vm211, %v595, 0
      %v685 = vsel %vm211, %v596, 0
      %v688 = vsel %vm211, %v597, 0
      %v691 = vsel %vm211, %v598, 0
      %v694 = vsel %vm211, %v599, 0
      %v697 = vsel %vm211, %v600, 0
      %v700 = vsel %vm308, %v602, 0
      %702 = vmatprep.subr.mxu0 0.0
      %703 = vmatpush1.msra.mxu0 0.0
      %704 = vmatprep.subr.mxu0 0.0
      %705 = vmatpush1.msra.mxu0 0.0
      %706 = vmatprep.subr.mxu0 0.0
      %707 = vmatpush1.msra.mxu0 0.0
      %708 = vmatprep.subr.mxu0 0.0
      %709 = vmatpush1.msra.mxu0 0.0
      %710 = vmatprep.subr.mxu0 0.0
      %711 = vmatpush1.msra.mxu0 0.0
      %712 = vmatprep.subr.mxu0 0.0
      %713 = vmatpush1.msra.mxu0 0.0
      %714 = vmatprep.subr.mxu0 0.0
      %715 = vmatpush1.msra.mxu0 0.0
      %716 = vmatprep.subr.mxu0 0.0
      %717 = vmatpush1.msra.mxu0 0.0
      %718 = vmatprep.subr.mxu0 0.0
      %719 = vmatpush1.msra.mxu0 0.0
      %720 = vmatprep.subr.mxu0 0.0
      %721 = vmatpush1.msra.mxu0 0.0
      %722 = vmatprep.subr.mxu0 0.0
      %723 = vmatpush1.msra.mxu0 0.0
      %724 = vmatprep.subr.mxu0 0.0
      %725 = vmatpush1.msra.mxu0 0.0
      %726 = vmatprep.subr.mxu0 0.0
      %727 = vmatpush1.msra.mxu0 0.0
      %728 = vmatprep.subr.mxu0 0.0
      %729 = vmatpush1.msra.mxu0 0.0
      %730 = vmatprep.subr.mxu0 0.0
      %731 = vmatpush1.msra.mxu0 0.0
      %732 = vmatprep.subr.mxu0 0.0
      %733 = vmatpush1.msra.mxu0 %v700
      %734 = vmatprep.subr.mxu0 0.0
      %735 = vmatpush2.msra.mxu0 0.0
      %736 = vmatprep.subr.mxu0 0.0
      %737 = vmatpush2.msra.mxu0 0.0
      %738 = vmatprep.subr.mxu0 0.0
      %739 = vmatpush2.msra.mxu0 0.0
      %740 = vmatprep.subr.mxu0 0.0
      %741 = vmatpush2.msra.mxu0 0.0
      %742 = vmatprep.subr.mxu0 0.0
      %743 = vmatpush2.msra.mxu0 0.0
      %744 = vmatprep.subr.mxu0 0.0
      %745 = vmatpush2.msra.mxu0 0.0
      %746 = vmatprep.subr.mxu0 0.0
      %747 = vmatpush2.msra.mxu0 0.0
      %748 = vmatprep.subr.mxu0 0.0
      %749 = vmatpush2.msra.mxu0 0.0
      %750 = vmatprep.subr.mxu0 0.0
      %751 = vmatpush2.msra.mxu0 0.0
      %752 = vmatprep.subr.mxu0 0.0
      %753 = vmatpush2.msra.mxu0 0.0
      %754 = vmatprep.subr.mxu0 0.0
      %755 = vmatpush2.msra.mxu0 0.0
      %756 = vmatprep.subr.mxu0 0.0
      %757 = vmatpush2.msra.mxu0 0.0
      %758 = vmatprep.subr.mxu0 0.0
      %759 = vmatpush2.msra.mxu0 0.0
      %760 = vmatprep.subr.mxu0 0.0
      %761 = vmatpush2.msra.mxu0 0.0
      %762 = vmatprep.subr.mxu0 0.0
      %763 = vmatpush2.msra.mxu0 0.0
      %764 = vmatprep.subr.mxu0 0.0
      %765 = vmatpush2.msra.mxu0 0.0
      %766 = vmatprep.mubr.f32.mxu0 0.0
      %767 = vmatmul.mubr.f32.gmra.mxu0 %v604
      %v768 = vpop.f32.mrf.mxu0
      %v769 = vadd.f32 0.0, %v768
      %v770 = vpop.f32.mrf.mxu0
      %771 = vmatprep.mubr.f32.mxu0 0.0
      %772 = vmatmul.mubr.f32.gmra.mxu0 %v607
      %v773 = vpop.f32.mrf.mxu0
      %v774 = vadd.f32 0.0, %v773
      %v775 = vpop.f32.mrf.mxu0
      %776 = vmatprep.mubr.f32.mxu0 0.0
      %777 = vmatmul.mubr.f32.gmra.mxu0 %v610
      %v778 = vpop.f32.mrf.mxu0
      %v779 = vadd.f32 0.0, %v778
      %v780 = vpop.f32.mrf.mxu0
      %781 = vmatprep.mubr.f32.mxu0 0.0
      %782 = vmatmul.mubr.f32.gmra.mxu0 %v613
      %v783 = vpop.f32.mrf.mxu0
      %v784 = vadd.f32 0.0, %v783
      %v785 = vpop.f32.mrf.mxu0
      %786 = vmatprep.mubr.f32.mxu0 0.0
      %787 = vmatmul.mubr.f32.gmra.mxu0 %v616
      %v788 = vpop.f32.mrf.mxu0
      %v789 = vadd.f32 0.0, %v788
      %v790 = vpop.f32.mrf.mxu0
      %791 = vmatprep.mubr.f32.mxu0 0.0
      %792 = vmatmul.mubr.f32.gmra.mxu0 %v619
      %v793 = vpop.f32.mrf.mxu0
      %v794 = vadd.f32 0.0, %v793
      %v795 = vpop.f32.mrf.mxu0
      %796 = vmatprep.mubr.f32.mxu0 0.0
      %797 = vmatmul.mubr.f32.gmra.mxu0 %v622
      %v798 = vpop.f32.mrf.mxu0
      %v799 = vadd.f32 0.0, %v798
      %v800 = vpop.f32.mrf.mxu0
      %801 = vmatprep.mubr.f32.mxu0 0.0
      %802 = vmatmul.mubr.f32.gmra.mxu0 %v625
      %v803 = vpop.f32.mrf.mxu0
      %v804 = vadd.f32 0.0, %v803
      %v805 = vpop.f32.mrf.mxu0
      %806 = vmatprep.mubr.f32.mxu0 0.0
      %807 = vmatmul.mubr.f32.gmra.mxu0 %v628
      %v808 = vpop.f32.mrf.mxu0
      %v809 = vadd.f32 0.0, %v808
      %v810 = vpop.f32.mrf.mxu0
      %811 = vmatprep.mubr.f32.mxu0 0.0
      %812 = vmatmul.mubr.f32.gmra.mxu0 %v631
      %v813 = vpop.f32.mrf.mxu0
      %v814 = vadd.f32 0.0, %v813
      %v815 = vpop.f32.mrf.mxu0
      %816 = vmatprep.mubr.f32.mxu0 0.0
      %817 = vmatmul.mubr.f32.gmra.mxu0 %v634
      %v818 = vpop.f32.mrf.mxu0
      %v819 = vadd.f32 0.0, %v818
      %v820 = vpop.f32.mrf.mxu0
      %821 = vmatprep.mubr.f32.mxu0 0.0
      %822 = vmatmul.mubr.f32.gmra.mxu0 %v637
      %v823 = vpop.f32.mrf.mxu0
      %v824 = vadd.f32 0.0, %v823
      %v825 = vpop.f32.mrf.mxu0
      %826 = vmatprep.mubr.f32.mxu0 0.0
      %827 = vmatmul.mubr.f32.gmra.mxu0 %v640
      %v828 = vpop.f32.mrf.mxu0
      %v829 = vadd.f32 0.0, %v828
      %v830 = vpop.f32.mrf.mxu0
      %831 = vmatprep.mubr.f32.mxu0 0.0
      %832 = vmatmul.mubr.f32.gmra.mxu0 %v643
      %v833 = vpop.f32.mrf.mxu0
      %v834 = vadd.f32 0.0, %v833
      %v835 = vpop.f32.mrf.mxu0
      %836 = vmatprep.mubr.f32.mxu0 0.0
      %837 = vmatmul.mubr.f32.gmra.mxu0 %v646
      %v838 = vpop.f32.mrf.mxu0
      %v839 = vadd.f32 0.0, %v838
      %v840 = vpop.f32.mrf.mxu0
      %841 = vmatprep.mubr.f32.mxu0 0.0
      %842 = vmatmul.mubr.f32.gmra.mxu0 %v649
      %v843 = vpop.f32.mrf.mxu0
      %v844 = vadd.f32 0.0, %v843
      %v845 = vpop.f32.mrf.mxu0
      %846 = vmatprep.mubr.f32.mxu0 0.0
      %847 = vmatmul.mubr.f32.gmra.mxu0 %v652
      %v848 = vpop.f32.mrf.mxu0
      %v849 = vadd.f32 0.0, %v848
      %v850 = vpop.f32.mrf.mxu0
      %851 = vmatprep.mubr.f32.mxu0 0.0
      %852 = vmatmul.mubr.f32.gmra.mxu0 %v655
      %v853 = vpop.f32.mrf.mxu0
      %v854 = vadd.f32 0.0, %v853
      %v855 = vpop.f32.mrf.mxu0
      %856 = vmatprep.mubr.f32.mxu0 0.0
      %857 = vmatmul.mubr.f32.gmra.mxu0 %v658
      %v858 = vpop.f32.mrf.mxu0
      %v859 = vadd.f32 0.0, %v858
      %v860 = vpop.f32.mrf.mxu0
      %861 = vmatprep.mubr.f32.mxu0 0.0
      %862 = vmatmul.mubr.f32.gmra.mxu0 %v661
      %v863 = vpop.f32.mrf.mxu0
      %v864 = vadd.f32 0.0, %v863
      %v865 = vpop.f32.mrf.mxu0
      %866 = vmatprep.mubr.f32.mxu0 0.0
      %867 = vmatmul.mubr.f32.gmra.mxu0 %v664
      %v868 = vpop.f32.mrf.mxu0
      %v869 = vadd.f32 0.0, %v868
      %v870 = vpop.f32.mrf.mxu0
      %871 = vmatprep.mubr.f32.mxu0 0.0
      %872 = vmatmul.mubr.f32.gmra.mxu0 %v667
      %v873 = vpop.f32.mrf.mxu0
      %v874 = vadd.f32 0.0, %v873
      %v875 = vpop.f32.mrf.mxu0
      %876 = vmatprep.mubr.f32.mxu0 0.0
      %877 = vmatmul.mubr.f32.gmra.mxu0 %v670
      %v878 = vpop.f32.mrf.mxu0
      %v879 = vadd.f32 0.0, %v878
      %v880 = vpop.f32.mrf.mxu0
      %881 = vmatprep.mubr.f32.mxu0 0.0
      %882 = vmatmul.mubr.f32.gmra.mxu0 %v673
      %v883 = vpop.f32.mrf.mxu0
      %v884 = vadd.f32 0.0, %v883
      %v885 = vpop.f32.mrf.mxu0
      %886 = vmatprep.mubr.f32.mxu0 0.0
      %887 = vmatmul.mubr.f32.gmra.mxu0 %v676
      %v888 = vpop.f32.mrf.mxu0
      %v889 = vadd.f32 0.0, %v888
      %v890 = vpop.f32.mrf.mxu0
      %891 = vmatprep.mubr.f32.mxu0 0.0
      %892 = vmatmul.mubr.f32.gmra.mxu0 %v679
      %v893 = vpop.f32.mrf.mxu0
      %v894 = vadd.f32 0.0, %v893
      %v895 = vpop.f32.mrf.mxu0
      %896 = vmatprep.mubr.f32.mxu0 0.0
      %897 = vmatmul.mubr.f32.gmra.mxu0 %v682
      %v898 = vpop.f32.mrf.mxu0
      %v899 = vadd.f32 0.0, %v898
      %v900 = vpop.f32.mrf.mxu0
      %901 = vmatprep.mubr.f32.mxu0 0.0
      %902 = vmatmul.mubr.f32.gmra.mxu0 %v685
      %v903 = vpop.f32.mrf.mxu0
      %v904 = vadd.f32 0.0, %v903
      %v905 = vpop.f32.mrf.mxu0
      %906 = vmatprep.mubr.f32.mxu0 0.0
      %907 = vmatmul.mubr.f32.gmra.mxu0 %v688
      %v908 = vpop.f32.mrf.mxu0
      %v909 = vadd.f32 0.0, %v908
      %v910 = vpop.f32.mrf.mxu0
      %911 = vmatprep.mubr.f32.mxu0 0.0
      %912 = vmatmul.mubr.f32.gmra.mxu0 %v691
      %v913 = vpop.f32.mrf.mxu0
      %v914 = vadd.f32 0.0, %v913
      %v915 = vpop.f32.mrf.mxu0
      %916 = vmatprep.mubr.f32.mxu0 0.0
      %917 = vmatmul.mubr.f32.gmra.mxu0 %v694
      %v918 = vpop.f32.mrf.mxu0
      %v919 = vadd.f32 0.0, %v918
      %v920 = vpop.f32.mrf.mxu0
      %921 = vmatprep.mubr.f32.mxu0 0.0
      %922 = vmatmul.mubr.f32.gmra.mxu0 %v697
      %v923 = vpop.f32.mrf.mxu0
      %v924 = vadd.f32 0.0, %v923
      %v925 = vpop.f32.mrf.mxu0
      %926 = vdwg.mxu0
      %v927 = vadd.f32 %v537, %v769
      %v928 = vadd.f32 %v538, %v774
      %v929 = vadd.f32 %v539, %v779
      %v930 = vadd.f32 %v540, %v784
      %v931 = vadd.f32 %v541, %v789
      %v932 = vadd.f32 %v542, %v794
      %v933 = vadd.f32 %v543, %v799
      %v934 = vadd.f32 %v544, %v804
      %v935 = vadd.f32 %v545, %v809
      %v936 = vadd.f32 %v546, %v814
      %v937 = vadd.f32 %v547, %v819
      %v938 = vadd.f32 %v548, %v824
      %v939 = vadd.f32 %v549, %v829
      %v940 = vadd.f32 %v550, %v834
      %v941 = vadd.f32 %v551, %v839
      %v942 = vadd.f32 %v552, %v844
      %v943 = vadd.f32 %v553, %v849
      %v944 = vadd.f32 %v554, %v854
      %v945 = vadd.f32 %v555, %v859
      %v946 = vadd.f32 %v556, %v864
      %v947 = vadd.f32 %v557, %v869
      %v948 = vadd.f32 %v558, %v874
      %v949 = vadd.f32 %v559, %v879
      %v950 = vadd.f32 %v560, %v884
      %v951 = vadd.f32 %v561, %v889
      %v952 = vadd.f32 %v562, %v894
      %v953 = vadd.f32 %v563, %v899
      %v954 = vadd.f32 %v564, %v904
      %v955 = vadd.f32 %v565, %v909
      %v956 = vadd.f32 %v566, %v914
      %v957 = vadd.f32 %v567, %v919
      %v958 = vadd.f32 %v568, %v924
      %v959 = vld [vmem:[%s165 + $0x2] sm:$0xff]
      %v960 = vld [vmem:[%s165 + $0xa] sm:$0xff]
      %v961 = vld [vmem:[%s165 + $0x1a] sm:$0xff]
      %v962 = vld [vmem:[%s165 + $0x22] sm:$0xff]
      %v963 = vld [vmem:[%s165 + $0x32] sm:$0xff]
      %v964 = vld [vmem:[%s165 + $0x3a] sm:$0xff]
      %v965 = vld [vmem:[%s165 + $0x4a] sm:$0xff]
      %v966 = vld [vmem:[%s165 + $0x52] sm:$0xff]
      %v967 = vld [vmem:[%s165 + $0x62] sm:$0xff]
      %v968 = vld [vmem:[%s165 + $0x6a] sm:$0xff]
      %v969 = vld [vmem:[%s165 + $0x7a] sm:$0xff]
      %v970 = vld [vmem:[%s165 + $0x82] sm:$0xff]
      %v971 = vld [vmem:[%s165 + $0x92] sm:$0xff]
      %v972 = vld [vmem:[%s165 + $0x9a] sm:$0xff]
      %v973 = vld [vmem:[%s165 + $0xaa] sm:$0xff]
      %v974 = vld [vmem:[%s165 + $0xb2] sm:$0xff]
      %v975 = vld [vmem:[%s165 + $0xc2] sm:$0xff]
      %v976 = vld [vmem:[%s165 + $0xca] sm:$0xff]
      %v977 = vld [vmem:[%s165 + $0xda] sm:$0xff]
      %v978 = vld [vmem:[%s165 + $0xe2] sm:$0xff]
      %v979 = vld [vmem:[%s165 + $0xf2] sm:$0xff]
      %v980 = vld [vmem:[%s165 + $0xfa] sm:$0xff]
      %v981 = vld [vmem:[%s165 + $0x10a] sm:$0xff]
      %v982 = vld [vmem:[%s165 + $0x112] sm:$0xff]
      %v983 = vld [vmem:[%s165 + $0x122] sm:$0xff]
      %v984 = vld [vmem:[%s165 + $0x12a] sm:$0xff]
      %v985 = vld [vmem:[%s165 + $0x13a] sm:$0xff]
      %v986 = vld [vmem:[%s165 + $0x142] sm:$0xff]
      %v987 = vld [vmem:[%s165 + $0x152] sm:$0xff]
      %v988 = vld [vmem:[%s165 + $0x15a] sm:$0xff]
      %v989 = vld [vmem:[%s165 + $0x16a] sm:$0xff]
      %v990 = vld [vmem:[%s165 + $0x172] sm:$0xff]
      %s991 = scalar_lea.vmem %s1, 8
      %v992 = vld [vmem:[%s991] sm:$0xf]
      %v994 = vsel %vm211, %v959, 0
      %v997 = vsel %vm211, %v960, 0
      %v1000 = vsel %vm211, %v961, 0
      %v1003 = vsel %vm211, %v962, 0
      %v1006 = vsel %vm211, %v963, 0
      %v1009 = vsel %vm211, %v964, 0
      %v1012 = vsel %vm211, %v965, 0
      %v1015 = vsel %vm211, %v966, 0
      %v1018 = vsel %vm211, %v967, 0
      %v1021 = vsel %vm211, %v968, 0
      %v1024 = vsel %vm211, %v969, 0
      %v1027 = vsel %vm211, %v970, 0
      %v1030 = vsel %vm211, %v971, 0
      %v1033 = vsel %vm211, %v972, 0
      %v1036 = vsel %vm211, %v973, 0
      %v1039 = vsel %vm211, %v974, 0
      %v1042 = vsel %vm211, %v975, 0
      %v1045 = vsel %vm211, %v976, 0
      %v1048 = vsel %vm211, %v977, 0
      %v1051 = vsel %vm211, %v978, 0
      %v1054 = vsel %vm211, %v979, 0
      %v1057 = vsel %vm211, %v980, 0
      %v1060 = vsel %vm211, %v981, 0
      %v1063 = vsel %vm211, %v982, 0
      %v1066 = vsel %vm211, %v983, 0
      %v1069 = vsel %vm211, %v984, 0
      %v1072 = vsel %vm211, %v985, 0
      %v1075 = vsel %vm211, %v986, 0
      %v1078 = vsel %vm211, %v987, 0
      %v1081 = vsel %vm211, %v988, 0
      %v1084 = vsel %vm211, %v989, 0
      %v1087 = vsel %vm211, %v990, 0
      %v1090 = vsel %vm308, %v992, 0
      %1092 = vmatprep.subr.mxu0 0.0
      %1093 = vmatpush1.msra.mxu0 0.0
      %1094 = vmatprep.subr.mxu0 0.0
      %1095 = vmatpush1.msra.mxu0 0.0
      %1096 = vmatprep.subr.mxu0 0.0
      %1097 = vmatpush1.msra.mxu0 0.0
      %1098 = vmatprep.subr.mxu0 0.0
      %1099 = vmatpush1.msra.mxu0 0.0
      %1100 = vmatprep.subr.mxu0 0.0
      %1101 = vmatpush1.msra.mxu0 0.0
      %1102 = vmatprep.subr.mxu0 0.0
      %1103 = vmatpush1.msra.mxu0 0.0
      %1104 = vmatprep.subr.mxu0 0.0
      %1105 = vmatpush1.msra.mxu0 0.0
      %1106 = vmatprep.subr.mxu0 0.0
      %1107 = vmatpush1.msra.mxu0 0.0
      %1108 = vmatprep.subr.mxu0 0.0
      %1109 = vmatpush1.msra.mxu0 0.0
      %1110 = vmatprep.subr.mxu0 0.0
      %1111 = vmatpush1.msra.mxu0 0.0
      %1112 = vmatprep.subr.mxu0 0.0
      %1113 = vmatpush1.msra.mxu0 0.0
      %1114 = vmatprep.subr.mxu0 0.0
      %1115 = vmatpush1.msra.mxu0 0.0
      %1116 = vmatprep.subr.mxu0 0.0
      %1117 = vmatpush1.msra.mxu0 0.0
      %1118 = vmatprep.subr.mxu0 0.0
      %1119 = vmatpush1.msra.mxu0 0.0
      %1120 = vmatprep.subr.mxu0 0.0
      %1121 = vmatpush1.msra.mxu0 0.0
      %1122 = vmatprep.subr.mxu0 0.0
      %1123 = vmatpush1.msra.mxu0 %v1090
      %1124 = vmatprep.subr.mxu0 0.0
      %1125 = vmatpush2.msra.mxu0 0.0
      %1126 = vmatprep.subr.mxu0 0.0
      %1127 = vmatpush2.msra.mxu0 0.0
      %1128 = vmatprep.subr.mxu0 0.0
      %1129 = vmatpush2.msra.mxu0 0.0
      %1130 = vmatprep.subr.mxu0 0.0
      %1131 = vmatpush2.msra.mxu0 0.0
      %1132 = vmatprep.subr.mxu0 0.0
      %1133 = vmatpush2.msra.mxu0 0.0
      %1134 = vmatprep.subr.mxu0 0.0
      %1135 = vmatpush2.msra.mxu0 0.0
      %1136 = vmatprep.subr.mxu0 0.0
      %1137 = vmatpush2.msra.mxu0 0.0
      %1138 = vmatprep.subr.mxu0 0.0
      %1139 = vmatpush2.msra.mxu0 0.0
      %1140 = vmatprep.subr.mxu0 0.0
      %1141 = vmatpush2.msra.mxu0 0.0
      %1142 = vmatprep.subr.mxu0 0.0
      %1143 = vmatpush2.msra.mxu0 0.0
      %1144 = vmatprep.subr.mxu0 0.0
      %1145 = vmatpush2.msra.mxu0 0.0
      %1146 = vmatprep.subr.mxu0 0.0
      %1147 = vmatpush2.msra.mxu0 0.0
      %1148 = vmatprep.subr.mxu0 0.0
      %1149 = vmatpush2.msra.mxu0 0.0
      %1150 = vmatprep.subr.mxu0 0.0
      %1151 = vmatpush2.msra.mxu0 0.0
      %1152 = vmatprep.subr.mxu0 0.0
      %1153 = vmatpush2.msra.mxu0 0.0
      %1154 = vmatprep.subr.mxu0 0.0
      %1155 = vmatpush2.msra.mxu0 0.0
      %1156 = vmatprep.mubr.f32.mxu0 0.0
      %1157 = vmatmul.mubr.f32.gmra.mxu0 %v994
      %v1158 = vpop.f32.mrf.mxu0
      %v1159 = vadd.f32 0.0, %v1158
      %v1160 = vpop.f32.mrf.mxu0
      %1161 = vmatprep.mubr.f32.mxu0 0.0
      %1162 = vmatmul.mubr.f32.gmra.mxu0 %v997
      %v1163 = vpop.f32.mrf.mxu0
      %v1164 = vadd.f32 0.0, %v1163
      %v1165 = vpop.f32.mrf.mxu0
      %1166 = vmatprep.mubr.f32.mxu0 0.0
      %1167 = vmatmul.mubr.f32.gmra.mxu0 %v1000
      %v1168 = vpop.f32.mrf.mxu0
      %v1169 = vadd.f32 0.0, %v1168
      %v1170 = vpop.f32.mrf.mxu0
      %1171 = vmatprep.mubr.f32.mxu0 0.0
      %1172 = vmatmul.mubr.f32.gmra.mxu0 %v1003
      %v1173 = vpop.f32.mrf.mxu0
      %v1174 = vadd.f32 0.0, %v1173
      %v1175 = vpop.f32.mrf.mxu0
      %1176 = vmatprep.mubr.f32.mxu0 0.0
      %1177 = vmatmul.mubr.f32.gmra.mxu0 %v1006
      %v1178 = vpop.f32.mrf.mxu0
      %v1179 = vadd.f32 0.0, %v1178
      %v1180 = vpop.f32.mrf.mxu0
      %1181 = vmatprep.mubr.f32.mxu0 0.0
      %1182 = vmatmul.mubr.f32.gmra.mxu0 %v1009
      %v1183 = vpop.f32.mrf.mxu0
      %v1184 = vadd.f32 0.0, %v1183
      %v1185 = vpop.f32.mrf.mxu0
      %1186 = vmatprep.mubr.f32.mxu0 0.0
      %1187 = vmatmul.mubr.f32.gmra.mxu0 %v1012
      %v1188 = vpop.f32.mrf.mxu0
      %v1189 = vadd.f32 0.0, %v1188
      %v1190 = vpop.f32.mrf.mxu0
      %1191 = vmatprep.mubr.f32.mxu0 0.0
      %1192 = vmatmul.mubr.f32.gmra.mxu0 %v1015
      %v1193 = vpop.f32.mrf.mxu0
      %v1194 = vadd.f32 0.0, %v1193
      %v1195 = vpop.f32.mrf.mxu0
      %1196 = vmatprep.mubr.f32.mxu0 0.0
      %1197 = vmatmul.mubr.f32.gmra.mxu0 %v1018
      %v1198 = vpop.f32.mrf.mxu0
      %v1199 = vadd.f32 0.0, %v1198
      %v1200 = vpop.f32.mrf.mxu0
      %1201 = vmatprep.mubr.f32.mxu0 0.0
      %1202 = vmatmul.mubr.f32.gmra.mxu0 %v1021
      %v1203 = vpop.f32.mrf.mxu0
      %v1204 = vadd.f32 0.0, %v1203
      %v1205 = vpop.f32.mrf.mxu0
      %1206 = vmatprep.mubr.f32.mxu0 0.0
      %1207 = vmatmul.mubr.f32.gmra.mxu0 %v1024
      %v1208 = vpop.f32.mrf.mxu0
      %v1209 = vadd.f32 0.0, %v1208
      %v1210 = vpop.f32.mrf.mxu0
      %1211 = vmatprep.mubr.f32.mxu0 0.0
      %1212 = vmatmul.mubr.f32.gmra.mxu0 %v1027
      %v1213 = vpop.f32.mrf.mxu0
      %v1214 = vadd.f32 0.0, %v1213
      %v1215 = vpop.f32.mrf.mxu0
      %1216 = vmatprep.mubr.f32.mxu0 0.0
      %1217 = vmatmul.mubr.f32.gmra.mxu0 %v1030
      %v1218 = vpop.f32.mrf.mxu0
      %v1219 = vadd.f32 0.0, %v1218
      %v1220 = vpop.f32.mrf.mxu0
      %1221 = vmatprep.mubr.f32.mxu0 0.0
      %1222 = vmatmul.mubr.f32.gmra.mxu0 %v1033
      %v1223 = vpop.f32.mrf.mxu0
      %v1224 = vadd.f32 0.0, %v1223
      %v1225 = vpop.f32.mrf.mxu0
      %1226 = vmatprep.mubr.f32.mxu0 0.0
      %1227 = vmatmul.mubr.f32.gmra.mxu0 %v1036
      %v1228 = vpop.f32.mrf.mxu0
      %v1229 = vadd.f32 0.0, %v1228
      %v1230 = vpop.f32.mrf.mxu0
      %1231 = vmatprep.mubr.f32.mxu0 0.0
      %1232 = vmatmul.mubr.f32.gmra.mxu0 %v1039
      %v1233 = vpop.f32.mrf.mxu0
      %v1234 = vadd.f32 0.0, %v1233
      %v1235 = vpop.f32.mrf.mxu0
      %1236 = vmatprep.mubr.f32.mxu0 0.0
      %1237 = vmatmul.mubr.f32.gmra.mxu0 %v1042
      %v1238 = vpop.f32.mrf.mxu0
      %v1239 = vadd.f32 0.0, %v1238
      %v1240 = vpop.f32.mrf.mxu0
      %1241 = vmatprep.mubr.f32.mxu0 0.0
      %1242 = vmatmul.mubr.f32.gmra.mxu0 %v1045
      %v1243 = vpop.f32.mrf.mxu0
      %v1244 = vadd.f32 0.0, %v1243
      %v1245 = vpop.f32.mrf.mxu0
      %1246 = vmatprep.mubr.f32.mxu0 0.0
      %1247 = vmatmul.mubr.f32.gmra.mxu0 %v1048
      %v1248 = vpop.f32.mrf.mxu0
      %v1249 = vadd.f32 0.0, %v1248
      %v1250 = vpop.f32.mrf.mxu0
      %1251 = vmatprep.mubr.f32.mxu0 0.0
      %1252 = vmatmul.mubr.f32.gmra.mxu0 %v1051
      %v1253 = vpop.f32.mrf.mxu0
      %v1254 = vadd.f32 0.0, %v1253
      %v1255 = vpop.f32.mrf.mxu0
      %1256 = vmatprep.mubr.f32.mxu0 0.0
      %1257 = vmatmul.mubr.f32.gmra.mxu0 %v1054
      %v1258 = vpop.f32.mrf.mxu0
      %v1259 = vadd.f32 0.0, %v1258
      %v1260 = vpop.f32.mrf.mxu0
      %1261 = vmatprep.mubr.f32.mxu0 0.0
      %1262 = vmatmul.mubr.f32.gmra.mxu0 %v1057
      %v1263 = vpop.f32.mrf.mxu0
      %v1264 = vadd.f32 0.0, %v1263
      %v1265 = vpop.f32.mrf.mxu0
      %1266 = vmatprep.mubr.f32.mxu0 0.0
      %1267 = vmatmul.mubr.f32.gmra.mxu0 %v1060
      %v1268 = vpop.f32.mrf.mxu0
      %v1269 = vadd.f32 0.0, %v1268
      %v1270 = vpop.f32.mrf.mxu0
      %1271 = vmatprep.mubr.f32.mxu0 0.0
      %1272 = vmatmul.mubr.f32.gmra.mxu0 %v1063
      %v1273 = vpop.f32.mrf.mxu0
      %v1274 = vadd.f32 0.0, %v1273
      %v1275 = vpop.f32.mrf.mxu0
      %1276 = vmatprep.mubr.f32.mxu0 0.0
      %1277 = vmatmul.mubr.f32.gmra.mxu0 %v1066
      %v1278 = vpop.f32.mrf.mxu0
      %v1279 = vadd.f32 0.0, %v1278
      %v1280 = vpop.f32.mrf.mxu0
      %1281 = vmatprep.mubr.f32.mxu0 0.0
      %1282 = vmatmul.mubr.f32.gmra.mxu0 %v1069
      %v1283 = vpop.f32.mrf.mxu0
      %v1284 = vadd.f32 0.0, %v1283
      %v1285 = vpop.f32.mrf.mxu0
      %1286 = vmatprep.mubr.f32.mxu0 0.0
      %1287 = vmatmul.mubr.f32.gmra.mxu0 %v1072
      %v1288 = vpop.f32.mrf.mxu0
      %v1289 = vadd.f32 0.0, %v1288
      %v1290 = vpop.f32.mrf.mxu0
      %1291 = vmatprep.mubr.f32.mxu0 0.0
      %1292 = vmatmul.mubr.f32.gmra.mxu0 %v1075
      %v1293 = vpop.f32.mrf.mxu0
      %v1294 = vadd.f32 0.0, %v1293
      %v1295 = vpop.f32.mrf.mxu0
      %1296 = vmatprep.mubr.f32.mxu0 0.0
      %1297 = vmatmul.mubr.f32.gmra.mxu0 %v1078
      %v1298 = vpop.f32.mrf.mxu0
      %v1299 = vadd.f32 0.0, %v1298
      %v1300 = vpop.f32.mrf.mxu0
      %1301 = vmatprep.mubr.f32.mxu0 0.0
      %1302 = vmatmul.mubr.f32.gmra.mxu0 %v1081
      %v1303 = vpop.f32.mrf.mxu0
      %v1304 = vadd.f32 0.0, %v1303
      %v1305 = vpop.f32.mrf.mxu0
      %1306 = vmatprep.mubr.f32.mxu0 0.0
      %1307 = vmatmul.mubr.f32.gmra.mxu0 %v1084
      %v1308 = vpop.f32.mrf.mxu0
      %v1309 = vadd.f32 0.0, %v1308
      %v1310 = vpop.f32.mrf.mxu0
      %1311 = vmatprep.mubr.f32.mxu0 0.0
      %1312 = vmatmul.mubr.f32.gmra.mxu0 %v1087
      %v1313 = vpop.f32.mrf.mxu0
      %v1314 = vadd.f32 0.0, %v1313
      %v1315 = vpop.f32.mrf.mxu0
      %1316 = vdwg.mxu0
      %v1317 = vadd.f32 %v927, %v1159
      %v1318 = vadd.f32 %v928, %v1164
      %v1319 = vadd.f32 %v929, %v1169
      %v1320 = vadd.f32 %v930, %v1174
      %v1321 = vadd.f32 %v931, %v1179
      %v1322 = vadd.f32 %v932, %v1184
      %v1323 = vadd.f32 %v933, %v1189
      %v1324 = vadd.f32 %v934, %v1194
      %v1325 = vadd.f32 %v935, %v1199
      %v1326 = vadd.f32 %v936, %v1204
      %v1327 = vadd.f32 %v937, %v1209
      %v1328 = vadd.f32 %v938, %v1214
      %v1329 = vadd.f32 %v939, %v1219
      %v1330 = vadd.f32 %v940, %v1224
      %v1331 = vadd.f32 %v941, %v1229
      %v1332 = vadd.f32 %v942, %v1234
      %v1333 = vadd.f32 %v943, %v1239
      %v1334 = vadd.f32 %v944, %v1244
      %v1335 = vadd.f32 %v945, %v1249
      %v1336 = vadd.f32 %v946, %v1254
      %v1337 = vadd.f32 %v947, %v1259
      %v1338 = vadd.f32 %v948, %v1264
      %v1339 = vadd.f32 %v949, %v1269
      %v1340 = vadd.f32 %v950, %v1274
      %v1341 = vadd.f32 %v951, %v1279
      %v1342 = vadd.f32 %v952, %v1284
      %v1343 = vadd.f32 %v953, %v1289
      %v1344 = vadd.f32 %v954, %v1294
      %v1345 = vadd.f32 %v955, %v1299
      %v1346 = vadd.f32 %v956, %v1304
      %v1347 = vadd.f32 %v957, %v1309
      %v1348 = vadd.f32 %v958, %v1314
      %s1349 = scalar_lea.vmem %s165, 24
      %v1350 = vld [vmem:[%s1349] sm:$0xff]
      %v1351 = vld [vmem:[%s1349 + $0x8] sm:$0xff]
      %v1352 = vld [vmem:[%s1349 + $0x18] sm:$0xff]
      %v1353 = vld [vmem:[%s1349 + $0x20] sm:$0xff]
      %v1354 = vld [vmem:[%s1349 + $0x30] sm:$0xff]
      %v1355 = vld [vmem:[%s1349 + $0x38] sm:$0xff]
      %v1356 = vld [vmem:[%s1349 + $0x48] sm:$0xff]
      %v1357 = vld [vmem:[%s1349 + $0x50] sm:$0xff]
      %v1358 = vld [vmem:[%s1349 + $0x60] sm:$0xff]
      %v1359 = vld [vmem:[%s1349 + $0x68] sm:$0xff]
      %v1360 = vld [vmem:[%s1349 + $0x78] sm:$0xff]
      %v1361 = vld [vmem:[%s1349 + $0x80] sm:$0xff]
      %v1362 = vld [vmem:[%s1349 + $0x90] sm:$0xff]
      %v1363 = vld [vmem:[%s1349 + $0x98] sm:$0xff]
      %v1364 = vld [vmem:[%s1349 + $0xa8] sm:$0xff]
      %v1365 = vld [vmem:[%s1349 + $0xb0] sm:$0xff]
      %v1366 = vld [vmem:[%s1349 + $0xc0] sm:$0xff]
      %v1367 = vld [vmem:[%s1349 + $0xc8] sm:$0xff]
      %v1368 = vld [vmem:[%s1349 + $0xd8] sm:$0xff]
      %v1369 = vld [vmem:[%s1349 + $0xe0] sm:$0xff]
      %v1370 = vld [vmem:[%s1349 + $0xf0] sm:$0xff]
      %v1371 = vld [vmem:[%s1349 + $0xf8] sm:$0xff]
      %v1372 = vld [vmem:[%s1349 + $0x108] sm:$0xff]
      %v1373 = vld [vmem:[%s1349 + $0x110] sm:$0xff]
      %v1374 = vld [vmem:[%s1349 + $0x120] sm:$0xff]
      %v1375 = vld [vmem:[%s1349 + $0x128] sm:$0xff]
      %v1376 = vld [vmem:[%s1349 + $0x138] sm:$0xff]
      %v1377 = vld [vmem:[%s1349 + $0x140] sm:$0xff]
      %v1378 = vld [vmem:[%s1349 + $0x150] sm:$0xff]
      %v1379 = vld [vmem:[%s1349 + $0x158] sm:$0xff]
      %v1380 = vld [vmem:[%s1349 + $0x168] sm:$0xff]
      %v1381 = vld [vmem:[%s1349 + $0x170] sm:$0xff]
      %s1382 = scalar_lea.vmem %s1, 12
      %v1383 = vld [vmem:[%s1382] sm:$0xf]
      %v1385 = vsel %vm211, %v1350, 0
      %v1388 = vsel %vm211, %v1351, 0
      %v1391 = vsel %vm211, %v1352, 0
      %v1394 = vsel %vm211, %v1353, 0
      %v1397 = vsel %vm211, %v1354, 0
      %v1400 = vsel %vm211, %v1355, 0
      %v1403 = vsel %vm211, %v1356, 0
      %v1406 = vsel %vm211, %v1357, 0
      %v1409 = vsel %vm211, %v1358, 0
      %v1412 = vsel %vm211, %v1359, 0
      %v1415 = vsel %vm211, %v1360, 0
      %v1418 = vsel %vm211, %v1361, 0
      %v1421 = vsel %vm211, %v1362, 0
      %v1424 = vsel %vm211, %v1363, 0
      %v1427 = vsel %vm211, %v1364, 0
      %v1430 = vsel %vm211, %v1365, 0
      %v1433 = vsel %vm211, %v1366, 0
      %v1436 = vsel %vm211, %v1367, 0
      %v1439 = vsel %vm211, %v1368, 0
      %v1442 = vsel %vm211, %v1369, 0
      %v1445 = vsel %vm211, %v1370, 0
      %v1448 = vsel %vm211, %v1371, 0
      %v1451 = vsel %vm211, %v1372, 0
      %v1454 = vsel %vm211, %v1373, 0
      %v1457 = vsel %vm211, %v1374, 0
      %v1460 = vsel %vm211, %v1375, 0
      %v1463 = vsel %vm211, %v1376, 0
      %v1466 = vsel %vm211, %v1377, 0
      %v1469 = vsel %vm211, %v1378, 0
      %v1472 = vsel %vm211, %v1379, 0
      %v1475 = vsel %vm211, %v1380, 0
      %v1478 = vsel %vm211, %v1381, 0
      %v1481 = vsel %vm308, %v1383, 0
      %1483 = vmatprep.subr.mxu0 0.0
      %1484 = vmatpush1.msra.mxu0 0.0
      %1485 = vmatprep.subr.mxu0 0.0
      %1486 = vmatpush1.msra.mxu0 0.0
      %1487 = vmatprep.subr.mxu0 0.0
      %1488 = vmatpush1.msra.mxu0 0.0
      %1489 = vmatprep.subr.mxu0 0.0
      %1490 = vmatpush1.msra.mxu0 0.0
      %1491 = vmatprep.subr.mxu0 0.0
      %1492 = vmatpush1.msra.mxu0 0.0
      %1493 = vmatprep.subr.mxu0 0.0
      %1494 = vmatpush1.msra.mxu0 0.0
      %1495 = vmatprep.subr.mxu0 0.0
      %1496 = vmatpush1.msra.mxu0 0.0
      %1497 = vmatprep.subr.mxu0 0.0
      %1498 = vmatpush1.msra.mxu0 0.0
      %1499 = vmatprep.subr.mxu0 0.0
      %1500 = vmatpush1.msra.mxu0 0.0
      %1501 = vmatprep.subr.mxu0 0.0
      %1502 = vmatpush1.msra.mxu0 0.0
      %1503 = vmatprep.subr.mxu0 0.0
      %1504 = vmatpush1.msra.mxu0 0.0
      %1505 = vmatprep.subr.mxu0 0.0
      %1506 = vmatpush1.msra.mxu0 0.0
      %1507 = vmatprep.subr.mxu0 0.0
      %1508 = vmatpush1.msra.mxu0 0.0
      %1509 = vmatprep.subr.mxu0 0.0
      %1510 = vmatpush1.msra.mxu0 0.0
      %1511 = vmatprep.subr.mxu0 0.0
      %1512 = vmatpush1.msra.mxu0 0.0
      %1513 = vmatprep.subr.mxu0 0.0
      %1514 = vmatpush1.msra.mxu0 %v1481
      %1515 = vmatprep.subr.mxu0 0.0
      %1516 = vmatpush2.msra.mxu0 0.0
      %1517 = vmatprep.subr.mxu0 0.0
      %1518 = vmatpush2.msra.mxu0 0.0
      %1519 = vmatprep.subr.mxu0 0.0
      %1520 = vmatpush2.msra.mxu0 0.0
      %1521 = vmatprep.subr.mxu0 0.0
      %1522 = vmatpush2.msra.mxu0 0.0
      %1523 = vmatprep.subr.mxu0 0.0
      %1524 = vmatpush2.msra.mxu0 0.0
      %1525 = vmatprep.subr.mxu0 0.0
      %1526 = vmatpush2.msra.mxu0 0.0
      %1527 = vmatprep.subr.mxu0 0.0
      %1528 = vmatpush2.msra.mxu0 0.0
      %1529 = vmatprep.subr.mxu0 0.0
      %1530 = vmatpush2.msra.mxu0 0.0
      %1531 = vmatprep.subr.mxu0 0.0
      %1532 = vmatpush2.msra.mxu0 0.0
      %1533 = vmatprep.subr.mxu0 0.0
      %1534 = vmatpush2.msra.mxu0 0.0
      %1535 = vmatprep.subr.mxu0 0.0
      %1536 = vmatpush2.msra.mxu0 0.0
      %1537 = vmatprep.subr.mxu0 0.0
      %1538 = vmatpush2.msra.mxu0 0.0
      %1539 = vmatprep.subr.mxu0 0.0
      %1540 = vmatpush2.msra.mxu0 0.0
      %1541 = vmatprep.subr.mxu0 0.0
      %1542 = vmatpush2.msra.mxu0 0.0
      %1543 = vmatprep.subr.mxu0 0.0
      %1544 = vmatpush2.msra.mxu0 0.0
      %1545 = vmatprep.subr.mxu0 0.0
      %1546 = vmatpush2.msra.mxu0 0.0
      %1547 = vmatprep.mubr.f32.mxu0 0.0
      %1548 = vmatmul.mubr.f32.gmra.mxu0 %v1385
      %v1549 = vpop.f32.mrf.mxu0
      %v1550 = vadd.f32 0.0, %v1549
      %v1551 = vpop.f32.mrf.mxu0
      %1552 = vmatprep.mubr.f32.mxu0 0.0
      %1553 = vmatmul.mubr.f32.gmra.mxu0 %v1388
      %v1554 = vpop.f32.mrf.mxu0
      %v1555 = vadd.f32 0.0, %v1554
      %v1556 = vpop.f32.mrf.mxu0
      %1557 = vmatprep.mubr.f32.mxu0 0.0
      %1558 = vmatmul.mubr.f32.gmra.mxu0 %v1391
      %v1559 = vpop.f32.mrf.mxu0
      %v1560 = vadd.f32 0.0, %v1559
      %v1561 = vpop.f32.mrf.mxu0
      %1562 = vmatprep.mubr.f32.mxu0 0.0
      %1563 = vmatmul.mubr.f32.gmra.mxu0 %v1394
      %v1564 = vpop.f32.mrf.mxu0
      %v1565 = vadd.f32 0.0, %v1564
      %v1566 = vpop.f32.mrf.mxu0
      %1567 = vmatprep.mubr.f32.mxu0 0.0
      %1568 = vmatmul.mubr.f32.gmra.mxu0 %v1397
      %v1569 = vpop.f32.mrf.mxu0
      %v1570 = vadd.f32 0.0, %v1569
      %v1571 = vpop.f32.mrf.mxu0
      %1572 = vmatprep.mubr.f32.mxu0 0.0
      %1573 = vmatmul.mubr.f32.gmra.mxu0 %v1400
      %v1574 = vpop.f32.mrf.mxu0
      %v1575 = vadd.f32 0.0, %v1574
      %v1576 = vpop.f32.mrf.mxu0
      %1577 = vmatprep.mubr.f32.mxu0 0.0
      %1578 = vmatmul.mubr.f32.gmra.mxu0 %v1403
      %v1579 = vpop.f32.mrf.mxu0
      %v1580 = vadd.f32 0.0, %v1579
      %v1581 = vpop.f32.mrf.mxu0
      %1582 = vmatprep.mubr.f32.mxu0 0.0
      %1583 = vmatmul.mubr.f32.gmra.mxu0 %v1406
      %v1584 = vpop.f32.mrf.mxu0
      %v1585 = vadd.f32 0.0, %v1584
      %v1586 = vpop.f32.mrf.mxu0
      %1587 = vmatprep.mubr.f32.mxu0 0.0
      %1588 = vmatmul.mubr.f32.gmra.mxu0 %v1409
      %v1589 = vpop.f32.mrf.mxu0
      %v1590 = vadd.f32 0.0, %v1589
      %v1591 = vpop.f32.mrf.mxu0
      %1592 = vmatprep.mubr.f32.mxu0 0.0
      %1593 = vmatmul.mubr.f32.gmra.mxu0 %v1412
      %v1594 = vpop.f32.mrf.mxu0
      %v1595 = vadd.f32 0.0, %v1594
      %v1596 = vpop.f32.mrf.mxu0
      %1597 = vmatprep.mubr.f32.mxu0 0.0
      %1598 = vmatmul.mubr.f32.gmra.mxu0 %v1415
      %v1599 = vpop.f32.mrf.mxu0
      %v1600 = vadd.f32 0.0, %v1599
      %v1601 = vpop.f32.mrf.mxu0
      %1602 = vmatprep.mubr.f32.mxu0 0.0
      %1603 = vmatmul.mubr.f32.gmra.mxu0 %v1418
      %v1604 = vpop.f32.mrf.mxu0
      %v1605 = vadd.f32 0.0, %v1604
      %v1606 = vpop.f32.mrf.mxu0
      %1607 = vmatprep.mubr.f32.mxu0 0.0
      %1608 = vmatmul.mubr.f32.gmra.mxu0 %v1421
      %v1609 = vpop.f32.mrf.mxu0
      %v1610 = vadd.f32 0.0, %v1609
      %v1611 = vpop.f32.mrf.mxu0
      %1612 = vmatprep.mubr.f32.mxu0 0.0
      %1613 = vmatmul.mubr.f32.gmra.mxu0 %v1424
      %v1614 = vpop.f32.mrf.mxu0
      %v1615 = vadd.f32 0.0, %v1614
      %v1616 = vpop.f32.mrf.mxu0
      %1617 = vmatprep.mubr.f32.mxu0 0.0
      %1618 = vmatmul.mubr.f32.gmra.mxu0 %v1427
      %v1619 = vpop.f32.mrf.mxu0
      %v1620 = vadd.f32 0.0, %v1619
      %v1621 = vpop.f32.mrf.mxu0
      %1622 = vmatprep.mubr.f32.mxu0 0.0
      %1623 = vmatmul.mubr.f32.gmra.mxu0 %v1430
      %v1624 = vpop.f32.mrf.mxu0
      %v1625 = vadd.f32 0.0, %v1624
      %v1626 = vpop.f32.mrf.mxu0
      %1627 = vmatprep.mubr.f32.mxu0 0.0
      %1628 = vmatmul.mubr.f32.gmra.mxu0 %v1433
      %v1629 = vpop.f32.mrf.mxu0
      %v1630 = vadd.f32 0.0, %v1629
      %v1631 = vpop.f32.mrf.mxu0
      %1632 = vmatprep.mubr.f32.mxu0 0.0
      %1633 = vmatmul.mubr.f32.gmra.mxu0 %v1436
      %v1634 = vpop.f32.mrf.mxu0
      %v1635 = vadd.f32 0.0, %v1634
      %v1636 = vpop.f32.mrf.mxu0
      %1637 = vmatprep.mubr.f32.mxu0 0.0
      %1638 = vmatmul.mubr.f32.gmra.mxu0 %v1439
      %v1639 = vpop.f32.mrf.mxu0
      %v1640 = vadd.f32 0.0, %v1639
      %v1641 = vpop.f32.mrf.mxu0
      %1642 = vmatprep.mubr.f32.mxu0 0.0
      %1643 = vmatmul.mubr.f32.gmra.mxu0 %v1442
      %v1644 = vpop.f32.mrf.mxu0
      %v1645 = vadd.f32 0.0, %v1644
      %v1646 = vpop.f32.mrf.mxu0
      %1647 = vmatprep.mubr.f32.mxu0 0.0
      %1648 = vmatmul.mubr.f32.gmra.mxu0 %v1445
      %v1649 = vpop.f32.mrf.mxu0
      %v1650 = vadd.f32 0.0, %v1649
      %v1651 = vpop.f32.mrf.mxu0
      %1652 = vmatprep.mubr.f32.mxu0 0.0
      %1653 = vmatmul.mubr.f32.gmra.mxu0 %v1448
      %v1654 = vpop.f32.mrf.mxu0
      %v1655 = vadd.f32 0.0, %v1654
      %v1656 = vpop.f32.mrf.mxu0
      %1657 = vmatprep.mubr.f32.mxu0 0.0
      %1658 = vmatmul.mubr.f32.gmra.mxu0 %v1451
      %v1659 = vpop.f32.mrf.mxu0
      %v1660 = vadd.f32 0.0, %v1659
      %v1661 = vpop.f32.mrf.mxu0
      %1662 = vmatprep.mubr.f32.mxu0 0.0
      %1663 = vmatmul.mubr.f32.gmra.mxu0 %v1454
      %v1664 = vpop.f32.mrf.mxu0
      %v1665 = vadd.f32 0.0, %v1664
      %v1666 = vpop.f32.mrf.mxu0
      %1667 = vmatprep.mubr.f32.mxu0 0.0
      %1668 = vmatmul.mubr.f32.gmra.mxu0 %v1457
      %v1669 = vpop.f32.mrf.mxu0
      %v1670 = vadd.f32 0.0, %v1669
      %v1671 = vpop.f32.mrf.mxu0
      %1672 = vmatprep.mubr.f32.mxu0 0.0
      %1673 = vmatmul.mubr.f32.gmra.mxu0 %v1460
      %v1674 = vpop.f32.mrf.mxu0
      %v1675 = vadd.f32 0.0, %v1674
      %v1676 = vpop.f32.mrf.mxu0
      %1677 = vmatprep.mubr.f32.mxu0 0.0
      %1678 = vmatmul.mubr.f32.gmra.mxu0 %v1463
      %v1679 = vpop.f32.mrf.mxu0
      %v1680 = vadd.f32 0.0, %v1679
      %v1681 = vpop.f32.mrf.mxu0
      %1682 = vmatprep.mubr.f32.mxu0 0.0
      %1683 = vmatmul.mubr.f32.gmra.mxu0 %v1466
      %v1684 = vpop.f32.mrf.mxu0
      %v1685 = vadd.f32 0.0, %v1684
      %v1686 = vpop.f32.mrf.mxu0
      %1687 = vmatprep.mubr.f32.mxu0 0.0
      %1688 = vmatmul.mubr.f32.gmra.mxu0 %v1469
      %v1689 = vpop.f32.mrf.mxu0
      %v1690 = vadd.f32 0.0, %v1689
      %v1691 = vpop.f32.mrf.mxu0
      %1692 = vmatprep.mubr.f32.mxu0 0.0
      %1693 = vmatmul.mubr.f32.gmra.mxu0 %v1472
      %v1694 = vpop.f32.mrf.mxu0
      %v1695 = vadd.f32 0.0, %v1694
      %v1696 = vpop.f32.mrf.mxu0
      %1697 = vmatprep.mubr.f32.mxu0 0.0
      %1698 = vmatmul.mubr.f32.gmra.mxu0 %v1475
      %v1699 = vpop.f32.mrf.mxu0
      %v1700 = vadd.f32 0.0, %v1699
      %v1701 = vpop.f32.mrf.mxu0
      %1702 = vmatprep.mubr.f32.mxu0 0.0
      %1703 = vmatmul.mubr.f32.gmra.mxu0 %v1478
      %v1704 = vpop.f32.mrf.mxu0
      %v1705 = vadd.f32 0.0, %v1704
      %v1706 = vpop.f32.mrf.mxu0
      %1707 = vdwg.mxu0
      %v1708 = vadd.f32 %v1317, %v1550
      %v1709 = vadd.f32 %v1318, %v1555
      %v1710 = vadd.f32 %v1319, %v1560
      %v1711 = vadd.f32 %v1320, %v1565
      %v1712 = vadd.f32 %v1321, %v1570
      %v1713 = vadd.f32 %v1322, %v1575
      %v1714 = vadd.f32 %v1323, %v1580
      %v1715 = vadd.f32 %v1324, %v1585
      %v1716 = vadd.f32 %v1325, %v1590
      %v1717 = vadd.f32 %v1326, %v1595
      %v1718 = vadd.f32 %v1327, %v1600
      %v1719 = vadd.f32 %v1328, %v1605
      %v1720 = vadd.f32 %v1329, %v1610
      %v1721 = vadd.f32 %v1330, %v1615
      %v1722 = vadd.f32 %v1331, %v1620
      %v1723 = vadd.f32 %v1332, %v1625
      %v1724 = vadd.f32 %v1333, %v1630
      %v1725 = vadd.f32 %v1334, %v1635
      %v1726 = vadd.f32 %v1335, %v1640
      %v1727 = vadd.f32 %v1336, %v1645
      %v1728 = vadd.f32 %v1337, %v1650
      %v1729 = vadd.f32 %v1338, %v1655
      %v1730 = vadd.f32 %v1339, %v1660
      %v1731 = vadd.f32 %v1340, %v1665
      %v1732 = vadd.f32 %v1341, %v1670
      %v1733 = vadd.f32 %v1342, %v1675
      %v1734 = vadd.f32 %v1343, %v1680
      %v1735 = vadd.f32 %v1344, %v1685
      %v1736 = vadd.f32 %v1345, %v1690
      %v1737 = vadd.f32 %v1346, %v1695
      %v1738 = vadd.f32 %v1347, %v1700
      %v1739 = vadd.f32 %v1348, %v1705
      %v1740 = vld [vmem:[%s1349 + $0x1] sm:$0xff]
      %v1741 = vld [vmem:[%s1349 + $0x9] sm:$0xff]
      %v1742 = vld [vmem:[%s1349 + $0x19] sm:$0xff]
      %v1743 = vld [vmem:[%s1349 + $0x21] sm:$0xff]
      %v1744 = vld [vmem:[%s1349 + $0x31] sm:$0xff]
      %v1745 = vld [vmem:[%s1349 + $0x39] sm:$0xff]
      %v1746 = vld [vmem:[%s1349 + $0x49] sm:$0xff]
      %v1747 = vld [vmem:[%s1349 + $0x51] sm:$0xff]
      %v1748 = vld [vmem:[%s1349 + $0x61] sm:$0xff]
      %v1749 = vld [vmem:[%s1349 + $0x69] sm:$0xff]
      %v1750 = vld [vmem:[%s1349 + $0x79] sm:$0xff]
      %v1751 = vld [vmem:[%s1349 + $0x81] sm:$0xff]
      %v1752 = vld [vmem:[%s1349 + $0x91] sm:$0xff]
      %v1753 = vld [vmem:[%s1349 + $0x99] sm:$0xff]
      %v1754 = vld [vmem:[%s1349 + $0xa9] sm:$0xff]
      %v1755 = vld [vmem:[%s1349 + $0xb1] sm:$0xff]
      %v1756 = vld [vmem:[%s1349 + $0xc1] sm:$0xff]
      %v1757 = vld [vmem:[%s1349 + $0xc9] sm:$0xff]
      %v1758 = vld [vmem:[%s1349 + $0xd9] sm:$0xff]
      %v1759 = vld [vmem:[%s1349 + $0xe1] sm:$0xff]
      %v1760 = vld [vmem:[%s1349 + $0xf1] sm:$0xff]
      %v1761 = vld [vmem:[%s1349 + $0xf9] sm:$0xff]
      %v1762 = vld [vmem:[%s1349 + $0x109] sm:$0xff]
      %v1763 = vld [vmem:[%s1349 + $0x111] sm:$0xff]
      %v1764 = vld [vmem:[%s1349 + $0x121] sm:$0xff]
      %v1765 = vld [vmem:[%s1349 + $0x129] sm:$0xff]
      %v1766 = vld [vmem:[%s1349 + $0x139] sm:$0xff]
      %v1767 = vld [vmem:[%s1349 + $0x141] sm:$0xff]
      %v1768 = vld [vmem:[%s1349 + $0x151] sm:$0xff]
      %v1769 = vld [vmem:[%s1349 + $0x159] sm:$0xff]
      %v1770 = vld [vmem:[%s1349 + $0x169] sm:$0xff]
      %v1771 = vld [vmem:[%s1349 + $0x171] sm:$0xff]
      %s1772 = scalar_lea.vmem %s1, 16
      %v1773 = vld [vmem:[%s1772] sm:$0xf]
      %v1775 = vsel %vm211, %v1740, 0
      %v1778 = vsel %vm211, %v1741, 0
      %v1781 = vsel %vm211, %v1742, 0
      %v1784 = vsel %vm211, %v1743, 0
      %v1787 = vsel %vm211, %v1744, 0
      %v1790 = vsel %vm211, %v1745, 0
      %v1793 = vsel %vm211, %v1746, 0
      %v1796 = vsel %vm211, %v1747, 0
      %v1799 = vsel %vm211, %v1748, 0
      %v1802 = vsel %vm211, %v1749, 0
      %v1805 = vsel %vm211, %v1750, 0
      %v1808 = vsel %vm211, %v1751, 0
      %v1811 = vsel %vm211, %v1752, 0
      %v1814 = vsel %vm211, %v1753, 0
      %v1817 = vsel %vm211, %v1754, 0
      %v1820 = vsel %vm211, %v1755, 0
      %v1823 = vsel %vm211, %v1756, 0
      %v1826 = vsel %vm211, %v1757, 0
      %v1829 = vsel %vm211, %v1758, 0
      %v1832 = vsel %vm211, %v1759, 0
      %v1835 = vsel %vm211, %v1760, 0
      %v1838 = vsel %vm211, %v1761, 0
      %v1841 = vsel %vm211, %v1762, 0
      %v1844 = vsel %vm211, %v1763, 0
      %v1847 = vsel %vm211, %v1764, 0
      %v1850 = vsel %vm211, %v1765, 0
      %v1853 = vsel %vm211, %v1766, 0
      %v1856 = vsel %vm211, %v1767, 0
      %v1859 = vsel %vm211, %v1768, 0
      %v1862 = vsel %vm211, %v1769, 0
      %v1865 = vsel %vm211, %v1770, 0
      %v1868 = vsel %vm211, %v1771, 0
      %v1871 = vsel %vm308, %v1773, 0
      %1873 = vmatprep.subr.mxu0 0.0
      %1874 = vmatpush1.msra.mxu0 0.0
      %1875 = vmatprep.subr.mxu0 0.0
      %1876 = vmatpush1.msra.mxu0 0.0
      %1877 = vmatprep.subr.mxu0 0.0
      %1878 = vmatpush1.msra.mxu0 0.0
      %1879 = vmatprep.subr.mxu0 0.0
      %1880 = vmatpush1.msra.mxu0 0.0
      %1881 = vmatprep.subr.mxu0 0.0
      %1882 = vmatpush1.msra.mxu0 0.0
      %1883 = vmatprep.subr.mxu0 0.0
      %1884 = vmatpush1.msra.mxu0 0.0
      %1885 = vmatprep.subr.mxu0 0.0
      %1886 = vmatpush1.msra.mxu0 0.0
      %1887 = vmatprep.subr.mxu0 0.0
      %1888 = vmatpush1.msra.mxu0 0.0
      %1889 = vmatprep.subr.mxu0 0.0
      %1890 = vmatpush1.msra.mxu0 0.0
      %1891 = vmatprep.subr.mxu0 0.0
      %1892 = vmatpush1.msra.mxu0 0.0
      %1893 = vmatprep.subr.mxu0 0.0
      %1894 = vmatpush1.msra.mxu0 0.0
      %1895 = vmatprep.subr.mxu0 0.0
      %1896 = vmatpush1.msra.mxu0 0.0
      %1897 = vmatprep.subr.mxu0 0.0
      %1898 = vmatpush1.msra.mxu0 0.0
      %1899 = vmatprep.subr.mxu0 0.0
      %1900 = vmatpush1.msra.mxu0 0.0
      %1901 = vmatprep.subr.mxu0 0.0
      %1902 = vmatpush1.msra.mxu0 0.0
      %1903 = vmatprep.subr.mxu0 0.0
      %1904 = vmatpush1.msra.mxu0 %v1871
      %1905 = vmatprep.subr.mxu0 0.0
      %1906 = vmatpush2.msra.mxu0 0.0
      %1907 = vmatprep.subr.mxu0 0.0
      %1908 = vmatpush2.msra.mxu0 0.0
      %1909 = vmatprep.subr.mxu0 0.0
      %1910 = vmatpush2.msra.mxu0 0.0
      %1911 = vmatprep.subr.mxu0 0.0
      %1912 = vmatpush2.msra.mxu0 0.0
      %1913 = vmatprep.subr.mxu0 0.0
      %1914 = vmatpush2.msra.mxu0 0.0
      %1915 = vmatprep.subr.mxu0 0.0
      %1916 = vmatpush2.msra.mxu0 0.0
      %1917 = vmatprep.subr.mxu0 0.0
      %1918 = vmatpush2.msra.mxu0 0.0
      %1919 = vmatprep.subr.mxu0 0.0
      %1920 = vmatpush2.msra.mxu0 0.0
      %1921 = vmatprep.subr.mxu0 0.0
      %1922 = vmatpush2.msra.mxu0 0.0
      %1923 = vmatprep.subr.mxu0 0.0
      %1924 = vmatpush2.msra.mxu0 0.0
      %1925 = vmatprep.subr.mxu0 0.0
      %1926 = vmatpush2.msra.mxu0 0.0
      %1927 = vmatprep.subr.mxu0 0.0
      %1928 = vmatpush2.msra.mxu0 0.0
      %1929 = vmatprep.subr.mxu0 0.0
      %1930 = vmatpush2.msra.mxu0 0.0
      %1931 = vmatprep.subr.mxu0 0.0
      %1932 = vmatpush2.msra.mxu0 0.0
      %1933 = vmatprep.subr.mxu0 0.0
      %1934 = vmatpush2.msra.mxu0 0.0
      %1935 = vmatprep.subr.mxu0 0.0
      %1936 = vmatpush2.msra.mxu0 0.0
      %1937 = vmatprep.mubr.f32.mxu0 0.0
      %1938 = vmatmul.mubr.f32.gmra.mxu0 %v1775
      %v1939 = vpop.f32.mrf.mxu0
      %v1940 = vadd.f32 0.0, %v1939
      %v1941 = vpop.f32.mrf.mxu0
      %1942 = vmatprep.mubr.f32.mxu0 0.0
      %1943 = vmatmul.mubr.f32.gmra.mxu0 %v1778
      %v1944 = vpop.f32.mrf.mxu0
      %v1945 = vadd.f32 0.0, %v1944
      %v1946 = vpop.f32.mrf.mxu0
      %1947 = vmatprep.mubr.f32.mxu0 0.0
      %1948 = vmatmul.mubr.f32.gmra.mxu0 %v1781
      %v1949 = vpop.f32.mrf.mxu0
      %v1950 = vadd.f32 0.0, %v1949
      %v1951 = vpop.f32.mrf.mxu0
      %1952 = vmatprep.mubr.f32.mxu0 0.0
      %1953 = vmatmul.mubr.f32.gmra.mxu0 %v1784
      %v1954 = vpop.f32.mrf.mxu0
      %v1955 = vadd.f32 0.0, %v1954
      %v1956 = vpop.f32.mrf.mxu0
      %1957 = vmatprep.mubr.f32.mxu0 0.0
      %1958 = vmatmul.mubr.f32.gmra.mxu0 %v1787
      %v1959 = vpop.f32.mrf.mxu0
      %v1960 = vadd.f32 0.0, %v1959
      %v1961 = vpop.f32.mrf.mxu0
      %1962 = vmatprep.mubr.f32.mxu0 0.0
      %1963 = vmatmul.mubr.f32.gmra.mxu0 %v1790
      %v1964 = vpop.f32.mrf.mxu0
      %v1965 = vadd.f32 0.0, %v1964
      %v1966 = vpop.f32.mrf.mxu0
      %1967 = vmatprep.mubr.f32.mxu0 0.0
      %1968 = vmatmul.mubr.f32.gmra.mxu0 %v1793
      %v1969 = vpop.f32.mrf.mxu0
      %v1970 = vadd.f32 0.0, %v1969
      %v1971 = vpop.f32.mrf.mxu0
      %1972 = vmatprep.mubr.f32.mxu0 0.0
      %1973 = vmatmul.mubr.f32.gmra.mxu0 %v1796
      %v1974 = vpop.f32.mrf.mxu0
      %v1975 = vadd.f32 0.0, %v1974
      %v1976 = vpop.f32.mrf.mxu0
      %1977 = vmatprep.mubr.f32.mxu0 0.0
      %1978 = vmatmul.mubr.f32.gmra.mxu0 %v1799
      %v1979 = vpop.f32.mrf.mxu0
      %v1980 = vadd.f32 0.0, %v1979
      %v1981 = vpop.f32.mrf.mxu0
      %1982 = vmatprep.mubr.f32.mxu0 0.0
      %1983 = vmatmul.mubr.f32.gmra.mxu0 %v1802
      %v1984 = vpop.f32.mrf.mxu0
      %v1985 = vadd.f32 0.0, %v1984
      %v1986 = vpop.f32.mrf.mxu0
      %1987 = vmatprep.mubr.f32.mxu0 0.0
      %1988 = vmatmul.mubr.f32.gmra.mxu0 %v1805
      %v1989 = vpop.f32.mrf.mxu0
      %v1990 = vadd.f32 0.0, %v1989
      %v1991 = vpop.f32.mrf.mxu0
      %1992 = vmatprep.mubr.f32.mxu0 0.0
      %1993 = vmatmul.mubr.f32.gmra.mxu0 %v1808
      %v1994 = vpop.f32.mrf.mxu0
      %v1995 = vadd.f32 0.0, %v1994
      %v1996 = vpop.f32.mrf.mxu0
      %1997 = vmatprep.mubr.f32.mxu0 0.0
      %1998 = vmatmul.mubr.f32.gmra.mxu0 %v1811
      %v1999 = vpop.f32.mrf.mxu0
      %v2000 = vadd.f32 0.0, %v1999
      %v2001 = vpop.f32.mrf.mxu0
      %2002 = vmatprep.mubr.f32.mxu0 0.0
      %2003 = vmatmul.mubr.f32.gmra.mxu0 %v1814
      %v2004 = vpop.f32.mrf.mxu0
      %v2005 = vadd.f32 0.0, %v2004
      %v2006 = vpop.f32.mrf.mxu0
      %2007 = vmatprep.mubr.f32.mxu0 0.0
      %2008 = vmatmul.mubr.f32.gmra.mxu0 %v1817
      %v2009 = vpop.f32.mrf.mxu0
      %v2010 = vadd.f32 0.0, %v2009
      %v2011 = vpop.f32.mrf.mxu0
      %2012 = vmatprep.mubr.f32.mxu0 0.0
      %2013 = vmatmul.mubr.f32.gmra.mxu0 %v1820
      %v2014 = vpop.f32.mrf.mxu0
      %v2015 = vadd.f32 0.0, %v2014
      %v2016 = vpop.f32.mrf.mxu0
      %2017 = vmatprep.mubr.f32.mxu0 0.0
      %2018 = vmatmul.mubr.f32.gmra.mxu0 %v1823
      %v2019 = vpop.f32.mrf.mxu0
      %v2020 = vadd.f32 0.0, %v2019
      %v2021 = vpop.f32.mrf.mxu0
      %2022 = vmatprep.mubr.f32.mxu0 0.0
      %2023 = vmatmul.mubr.f32.gmra.mxu0 %v1826
      %v2024 = vpop.f32.mrf.mxu0
      %v2025 = vadd.f32 0.0, %v2024
      %v2026 = vpop.f32.mrf.mxu0
      %2027 = vmatprep.mubr.f32.mxu0 0.0
      %2028 = vmatmul.mubr.f32.gmra.mxu0 %v1829
      %v2029 = vpop.f32.mrf.mxu0
      %v2030 = vadd.f32 0.0, %v2029
      %v2031 = vpop.f32.mrf.mxu0
      %2032 = vmatprep.mubr.f32.mxu0 0.0
      %2033 = vmatmul.mubr.f32.gmra.mxu0 %v1832
      %v2034 = vpop.f32.mrf.mxu0
      %v2035 = vadd.f32 0.0, %v2034
      %v2036 = vpop.f32.mrf.mxu0
      %2037 = vmatprep.mubr.f32.mxu0 0.0
      %2038 = vmatmul.mubr.f32.gmra.mxu0 %v1835
      %v2039 = vpop.f32.mrf.mxu0
      %v2040 = vadd.f32 0.0, %v2039
      %v2041 = vpop.f32.mrf.mxu0
      %2042 = vmatprep.mubr.f32.mxu0 0.0
      %2043 = vmatmul.mubr.f32.gmra.mxu0 %v1838
      %v2044 = vpop.f32.mrf.mxu0
      %v2045 = vadd.f32 0.0, %v2044
      %v2046 = vpop.f32.mrf.mxu0
      %2047 = vmatprep.mubr.f32.mxu0 0.0
      %2048 = vmatmul.mubr.f32.gmra.mxu0 %v1841
      %v2049 = vpop.f32.mrf.mxu0
      %v2050 = vadd.f32 0.0, %v2049
      %v2051 = vpop.f32.mrf.mxu0
      %2052 = vmatprep.mubr.f32.mxu0 0.0
      %2053 = vmatmul.mubr.f32.gmra.mxu0 %v1844
      %v2054 = vpop.f32.mrf.mxu0
      %v2055 = vadd.f32 0.0, %v2054
      %v2056 = vpop.f32.mrf.mxu0
      %2057 = vmatprep.mubr.f32.mxu0 0.0
      %2058 = vmatmul.mubr.f32.gmra.mxu0 %v1847
      %v2059 = vpop.f32.mrf.mxu0
      %v2060 = vadd.f32 0.0, %v2059
      %v2061 = vpop.f32.mrf.mxu0
      %2062 = vmatprep.mubr.f32.mxu0 0.0
      %2063 = vmatmul.mubr.f32.gmra.mxu0 %v1850
      %v2064 = vpop.f32.mrf.mxu0
      %v2065 = vadd.f32 0.0, %v2064
      %v2066 = vpop.f32.mrf.mxu0
      %2067 = vmatprep.mubr.f32.mxu0 0.0
      %2068 = vmatmul.mubr.f32.gmra.mxu0 %v1853
      %v2069 = vpop.f32.mrf.mxu0
      %v2070 = vadd.f32 0.0, %v2069
      %v2071 = vpop.f32.mrf.mxu0
      %2072 = vmatprep.mubr.f32.mxu0 0.0
      %2073 = vmatmul.mubr.f32.gmra.mxu0 %v1856
      %v2074 = vpop.f32.mrf.mxu0
      %v2075 = vadd.f32 0.0, %v2074
      %v2076 = vpop.f32.mrf.mxu0
      %2077 = vmatprep.mubr.f32.mxu0 0.0
      %2078 = vmatmul.mubr.f32.gmra.mxu0 %v1859
      %v2079 = vpop.f32.mrf.mxu0
      %v2080 = vadd.f32 0.0, %v2079
      %v2081 = vpop.f32.mrf.mxu0
      %2082 = vmatprep.mubr.f32.mxu0 0.0
      %2083 = vmatmul.mubr.f32.gmra.mxu0 %v1862
      %v2084 = vpop.f32.mrf.mxu0
      %v2085 = vadd.f32 0.0, %v2084
      %v2086 = vpop.f32.mrf.mxu0
      %2087 = vmatprep.mubr.f32.mxu0 0.0
      %2088 = vmatmul.mubr.f32.gmra.mxu0 %v1865
      %v2089 = vpop.f32.mrf.mxu0
      %v2090 = vadd.f32 0.0, %v2089
      %v2091 = vpop.f32.mrf.mxu0
      %2092 = vmatprep.mubr.f32.mxu0 0.0
      %2093 = vmatmul.mubr.f32.gmra.mxu0 %v1868
      %v2094 = vpop.f32.mrf.mxu0
      %v2095 = vadd.f32 0.0, %v2094
      %v2096 = vpop.f32.mrf.mxu0
      %2097 = vdwg.mxu0
      %v2098 = vadd.f32 %v1708, %v1940
      %v2099 = vadd.f32 %v1709, %v1945
      %v2100 = vadd.f32 %v1710, %v1950
      %v2101 = vadd.f32 %v1711, %v1955
      %v2102 = vadd.f32 %v1712, %v1960
      %v2103 = vadd.f32 %v1713, %v1965
      %v2104 = vadd.f32 %v1714, %v1970
      %v2105 = vadd.f32 %v1715, %v1975
      %v2106 = vadd.f32 %v1716, %v1980
      %v2107 = vadd.f32 %v1717, %v1985
      %v2108 = vadd.f32 %v1718, %v1990
      %v2109 = vadd.f32 %v1719, %v1995
      %v2110 = vadd.f32 %v1720, %v2000
      %v2111 = vadd.f32 %v1721, %v2005
      %v2112 = vadd.f32 %v1722, %v2010
      %v2113 = vadd.f32 %v1723, %v2015
      %v2114 = vadd.f32 %v1724, %v2020
      %v2115 = vadd.f32 %v1725, %v2025
      %v2116 = vadd.f32 %v1726, %v2030
      %v2117 = vadd.f32 %v1727, %v2035
      %v2118 = vadd.f32 %v1728, %v2040
      %v2119 = vadd.f32 %v1729, %v2045
      %v2120 = vadd.f32 %v1730, %v2050
      %v2121 = vadd.f32 %v1731, %v2055
      %v2122 = vadd.f32 %v1732, %v2060
      %v2123 = vadd.f32 %v1733, %v2065
      %v2124 = vadd.f32 %v1734, %v2070
      %v2125 = vadd.f32 %v1735, %v2075
      %v2126 = vadd.f32 %v1736, %v2080
      %v2127 = vadd.f32 %v1737, %v2085
      %v2128 = vadd.f32 %v1738, %v2090
      %v2129 = vadd.f32 %v1739, %v2095
      %v2130 = vld [vmem:[%s1349 + $0x2] sm:$0xff]
      %v2131 = vld [vmem:[%s1349 + $0xa] sm:$0xff]
      %v2132 = vld [vmem:[%s1349 + $0x1a] sm:$0xff]
      %v2133 = vld [vmem:[%s1349 + $0x22] sm:$0xff]
      %v2134 = vld [vmem:[%s1349 + $0x32] sm:$0xff]
      %v2135 = vld [vmem:[%s1349 + $0x3a] sm:$0xff]
      %v2136 = vld [vmem:[%s1349 + $0x4a] sm:$0xff]
      %v2137 = vld [vmem:[%s1349 + $0x52] sm:$0xff]
      %v2138 = vld [vmem:[%s1349 + $0x62] sm:$0xff]
      %v2139 = vld [vmem:[%s1349 + $0x6a] sm:$0xff]
      %v2140 = vld [vmem:[%s1349 + $0x7a] sm:$0xff]
      %v2141 = vld [vmem:[%s1349 + $0x82] sm:$0xff]
      %v2142 = vld [vmem:[%s1349 + $0x92] sm:$0xff]
      %v2143 = vld [vmem:[%s1349 + $0x9a] sm:$0xff]
      %v2144 = vld [vmem:[%s1349 + $0xaa] sm:$0xff]
      %v2145 = vld [vmem:[%s1349 + $0xb2] sm:$0xff]
      %v2146 = vld [vmem:[%s1349 + $0xc2] sm:$0xff]
      %v2147 = vld [vmem:[%s1349 + $0xca] sm:$0xff]
      %v2148 = vld [vmem:[%s1349 + $0xda] sm:$0xff]
      %v2149 = vld [vmem:[%s1349 + $0xe2] sm:$0xff]
      %v2150 = vld [vmem:[%s1349 + $0xf2] sm:$0xff]
      %v2151 = vld [vmem:[%s1349 + $0xfa] sm:$0xff]
      %v2152 = vld [vmem:[%s1349 + $0x10a] sm:$0xff]
      %v2153 = vld [vmem:[%s1349 + $0x112] sm:$0xff]
      %v2154 = vld [vmem:[%s1349 + $0x122] sm:$0xff]
      %v2155 = vld [vmem:[%s1349 + $0x12a] sm:$0xff]
      %v2156 = vld [vmem:[%s1349 + $0x13a] sm:$0xff]
      %v2157 = vld [vmem:[%s1349 + $0x142] sm:$0xff]
      %v2158 = vld [vmem:[%s1349 + $0x152] sm:$0xff]
      %v2159 = vld [vmem:[%s1349 + $0x15a] sm:$0xff]
      %v2160 = vld [vmem:[%s1349 + $0x16a] sm:$0xff]
      %v2161 = vld [vmem:[%s1349 + $0x172] sm:$0xff]
      %s2162 = scalar_lea.vmem %s1, 20
      %v2163 = vld [vmem:[%s2162] sm:$0xf]
      %v2165 = vsel %vm211, %v2130, 0
      %v2168 = vsel %vm211, %v2131, 0
      %v2171 = vsel %vm211, %v2132, 0
      %v2174 = vsel %vm211, %v2133, 0
      %v2177 = vsel %vm211, %v2134, 0
      %v2180 = vsel %vm211, %v2135, 0
      %v2183 = vsel %vm211, %v2136, 0
      %v2186 = vsel %vm211, %v2137, 0
      %v2189 = vsel %vm211, %v2138, 0
      %v2192 = vsel %vm211, %v2139, 0
      %v2195 = vsel %vm211, %v2140, 0
      %v2198 = vsel %vm211, %v2141, 0
      %v2201 = vsel %vm211, %v2142, 0
      %v2204 = vsel %vm211, %v2143, 0
      %v2207 = vsel %vm211, %v2144, 0
      %v2210 = vsel %vm211, %v2145, 0
      %v2213 = vsel %vm211, %v2146, 0
      %v2216 = vsel %vm211, %v2147, 0
      %v2219 = vsel %vm211, %v2148, 0
      %v2222 = vsel %vm211, %v2149, 0
      %v2225 = vsel %vm211, %v2150, 0
      %v2228 = vsel %vm211, %v2151, 0
      %v2231 = vsel %vm211, %v2152, 0
      %v2234 = vsel %vm211, %v2153, 0
      %v2237 = vsel %vm211, %v2154, 0
      %v2240 = vsel %vm211, %v2155, 0
      %v2243 = vsel %vm211, %v2156, 0
      %v2246 = vsel %vm211, %v2157, 0
      %v2249 = vsel %vm211, %v2158, 0
      %v2252 = vsel %vm211, %v2159, 0
      %v2255 = vsel %vm211, %v2160, 0
      %v2258 = vsel %vm211, %v2161, 0
      %v2261 = vsel %vm308, %v2163, 0
      %2263 = vmatprep.subr.mxu0 0.0
      %2264 = vmatpush1.msra.mxu0 0.0
      %2265 = vmatprep.subr.mxu0 0.0
      %2266 = vmatpush1.msra.mxu0 0.0
      %2267 = vmatprep.subr.mxu0 0.0
      %2268 = vmatpush1.msra.mxu0 0.0
      %2269 = vmatprep.subr.mxu0 0.0
      %2270 = vmatpush1.msra.mxu0 0.0
      %2271 = vmatprep.subr.mxu0 0.0
      %2272 = vmatpush1.msra.mxu0 0.0
      %2273 = vmatprep.subr.mxu0 0.0
      %2274 = vmatpush1.msra.mxu0 0.0
      %2275 = vmatprep.subr.mxu0 0.0
      %2276 = vmatpush1.msra.mxu0 0.0
      %2277 = vmatprep.subr.mxu0 0.0
      %2278 = vmatpush1.msra.mxu0 0.0
      %2279 = vmatprep.subr.mxu0 0.0
      %2280 = vmatpush1.msra.mxu0 0.0
      %2281 = vmatprep.subr.mxu0 0.0
      %2282 = vmatpush1.msra.mxu0 0.0
      %2283 = vmatprep.subr.mxu0 0.0
      %2284 = vmatpush1.msra.mxu0 0.0
      %2285 = vmatprep.subr.mxu0 0.0
      %2286 = vmatpush1.msra.mxu0 0.0
      %2287 = vmatprep.subr.mxu0 0.0
      %2288 = vmatpush1.msra.mxu0 0.0
      %2289 = vmatprep.subr.mxu0 0.0
      %2290 = vmatpush1.msra.mxu0 0.0
      %2291 = vmatprep.subr.mxu0 0.0
      %2292 = vmatpush1.msra.mxu0 0.0
      %2293 = vmatprep.subr.mxu0 0.0
      %2294 = vmatpush1.msra.mxu0 %v2261
      %2295 = vmatprep.subr.mxu0 0.0
      %2296 = vmatpush2.msra.mxu0 0.0
      %2297 = vmatprep.subr.mxu0 0.0
      %2298 = vmatpush2.msra.mxu0 0.0
      %2299 = vmatprep.subr.mxu0 0.0
      %2300 = vmatpush2.msra.mxu0 0.0
      %2301 = vmatprep.subr.mxu0 0.0
      %2302 = vmatpush2.msra.mxu0 0.0
      %2303 = vmatprep.subr.mxu0 0.0
      %2304 = vmatpush2.msra.mxu0 0.0
      %2305 = vmatprep.subr.mxu0 0.0
      %2306 = vmatpush2.msra.mxu0 0.0
      %2307 = vmatprep.subr.mxu0 0.0
      %2308 = vmatpush2.msra.mxu0 0.0
      %2309 = vmatprep.subr.mxu0 0.0
      %2310 = vmatpush2.msra.mxu0 0.0
      %2311 = vmatprep.subr.mxu0 0.0
      %2312 = vmatpush2.msra.mxu0 0.0
      %2313 = vmatprep.subr.mxu0 0.0
      %2314 = vmatpush2.msra.mxu0 0.0
      %2315 = vmatprep.subr.mxu0 0.0
      %2316 = vmatpush2.msra.mxu0 0.0
      %2317 = vmatprep.subr.mxu0 0.0
      %2318 = vmatpush2.msra.mxu0 0.0
      %2319 = vmatprep.subr.mxu0 0.0
      %2320 = vmatpush2.msra.mxu0 0.0
      %2321 = vmatprep.subr.mxu0 0.0
      %2322 = vmatpush2.msra.mxu0 0.0
      %2323 = vmatprep.subr.mxu0 0.0
      %2324 = vmatpush2.msra.mxu0 0.0
      %2325 = vmatprep.subr.mxu0 0.0
      %2326 = vmatpush2.msra.mxu0 0.0
      %2327 = vmatprep.mubr.f32.mxu0 0.0
      %2328 = vmatmul.mubr.f32.gmra.mxu0 %v2165
      %v2329 = vpop.f32.mrf.mxu0
      %v2330 = vadd.f32 0.0, %v2329
      %v2331 = vpop.f32.mrf.mxu0
      %2332 = vmatprep.mubr.f32.mxu0 0.0
      %2333 = vmatmul.mubr.f32.gmra.mxu0 %v2168
      %v2334 = vpop.f32.mrf.mxu0
      %v2335 = vadd.f32 0.0, %v2334
      %v2336 = vpop.f32.mrf.mxu0
      %2337 = vmatprep.mubr.f32.mxu0 0.0
      %2338 = vmatmul.mubr.f32.gmra.mxu0 %v2171
      %v2339 = vpop.f32.mrf.mxu0
      %v2340 = vadd.f32 0.0, %v2339
      %v2341 = vpop.f32.mrf.mxu0
      %2342 = vmatprep.mubr.f32.mxu0 0.0
      %2343 = vmatmul.mubr.f32.gmra.mxu0 %v2174
      %v2344 = vpop.f32.mrf.mxu0
      %v2345 = vadd.f32 0.0, %v2344
      %v2346 = vpop.f32.mrf.mxu0
      %2347 = vmatprep.mubr.f32.mxu0 0.0
      %2348 = vmatmul.mubr.f32.gmra.mxu0 %v2177
      %v2349 = vpop.f32.mrf.mxu0
      %v2350 = vadd.f32 0.0, %v2349
      %v2351 = vpop.f32.mrf.mxu0
      %2352 = vmatprep.mubr.f32.mxu0 0.0
      %2353 = vmatmul.mubr.f32.gmra.mxu0 %v2180
      %v2354 = vpop.f32.mrf.mxu0
      %v2355 = vadd.f32 0.0, %v2354
      %v2356 = vpop.f32.mrf.mxu0
      %2357 = vmatprep.mubr.f32.mxu0 0.0
      %2358 = vmatmul.mubr.f32.gmra.mxu0 %v2183
      %v2359 = vpop.f32.mrf.mxu0
      %v2360 = vadd.f32 0.0, %v2359
      %v2361 = vpop.f32.mrf.mxu0
      %2362 = vmatprep.mubr.f32.mxu0 0.0
      %2363 = vmatmul.mubr.f32.gmra.mxu0 %v2186
      %v2364 = vpop.f32.mrf.mxu0
      %v2365 = vadd.f32 0.0, %v2364
      %v2366 = vpop.f32.mrf.mxu0
      %2367 = vmatprep.mubr.f32.mxu0 0.0
      %2368 = vmatmul.mubr.f32.gmra.mxu0 %v2189
      %v2369 = vpop.f32.mrf.mxu0
      %v2370 = vadd.f32 0.0, %v2369
      %v2371 = vpop.f32.mrf.mxu0
      %2372 = vmatprep.mubr.f32.mxu0 0.0
      %2373 = vmatmul.mubr.f32.gmra.mxu0 %v2192
      %v2374 = vpop.f32.mrf.mxu0
      %v2375 = vadd.f32 0.0, %v2374
      %v2376 = vpop.f32.mrf.mxu0
      %2377 = vmatprep.mubr.f32.mxu0 0.0
      %2378 = vmatmul.mubr.f32.gmra.mxu0 %v2195
      %v2379 = vpop.f32.mrf.mxu0
      %v2380 = vadd.f32 0.0, %v2379
      %v2381 = vpop.f32.mrf.mxu0
      %2382 = vmatprep.mubr.f32.mxu0 0.0
      %2383 = vmatmul.mubr.f32.gmra.mxu0 %v2198
      %v2384 = vpop.f32.mrf.mxu0
      %v2385 = vadd.f32 0.0, %v2384
      %v2386 = vpop.f32.mrf.mxu0
      %2387 = vmatprep.mubr.f32.mxu0 0.0
      %2388 = vmatmul.mubr.f32.gmra.mxu0 %v2201
      %v2389 = vpop.f32.mrf.mxu0
      %v2390 = vadd.f32 0.0, %v2389
      %v2391 = vpop.f32.mrf.mxu0
      %2392 = vmatprep.mubr.f32.mxu0 0.0
      %2393 = vmatmul.mubr.f32.gmra.mxu0 %v2204
      %v2394 = vpop.f32.mrf.mxu0
      %v2395 = vadd.f32 0.0, %v2394
      %v2396 = vpop.f32.mrf.mxu0
      %2397 = vmatprep.mubr.f32.mxu0 0.0
      %2398 = vmatmul.mubr.f32.gmra.mxu0 %v2207
      %v2399 = vpop.f32.mrf.mxu0
      %v2400 = vadd.f32 0.0, %v2399
      %v2401 = vpop.f32.mrf.mxu0
      %2402 = vmatprep.mubr.f32.mxu0 0.0
      %2403 = vmatmul.mubr.f32.gmra.mxu0 %v2210
      %v2404 = vpop.f32.mrf.mxu0
      %v2405 = vadd.f32 0.0, %v2404
      %v2406 = vpop.f32.mrf.mxu0
      %2407 = vmatprep.mubr.f32.mxu0 0.0
      %2408 = vmatmul.mubr.f32.gmra.mxu0 %v2213
      %v2409 = vpop.f32.mrf.mxu0
      %v2410 = vadd.f32 0.0, %v2409
      %v2411 = vpop.f32.mrf.mxu0
      %2412 = vmatprep.mubr.f32.mxu0 0.0
      %2413 = vmatmul.mubr.f32.gmra.mxu0 %v2216
      %v2414 = vpop.f32.mrf.mxu0
      %v2415 = vadd.f32 0.0, %v2414
      %v2416 = vpop.f32.mrf.mxu0
      %2417 = vmatprep.mubr.f32.mxu0 0.0
      %2418 = vmatmul.mubr.f32.gmra.mxu0 %v2219
      %v2419 = vpop.f32.mrf.mxu0
      %v2420 = vadd.f32 0.0, %v2419
      %v2421 = vpop.f32.mrf.mxu0
      %2422 = vmatprep.mubr.f32.mxu0 0.0
      %2423 = vmatmul.mubr.f32.gmra.mxu0 %v2222
      %v2424 = vpop.f32.mrf.mxu0
      %v2425 = vadd.f32 0.0, %v2424
      %v2426 = vpop.f32.mrf.mxu0
      %2427 = vmatprep.mubr.f32.mxu0 0.0
      %2428 = vmatmul.mubr.f32.gmra.mxu0 %v2225
      %v2429 = vpop.f32.mrf.mxu0
      %v2430 = vadd.f32 0.0, %v2429
      %v2431 = vpop.f32.mrf.mxu0
      %2432 = vmatprep.mubr.f32.mxu0 0.0
      %2433 = vmatmul.mubr.f32.gmra.mxu0 %v2228
      %v2434 = vpop.f32.mrf.mxu0
      %v2435 = vadd.f32 0.0, %v2434
      %v2436 = vpop.f32.mrf.mxu0
      %2437 = vmatprep.mubr.f32.mxu0 0.0
      %2438 = vmatmul.mubr.f32.gmra.mxu0 %v2231
      %v2439 = vpop.f32.mrf.mxu0
      %v2440 = vadd.f32 0.0, %v2439
      %v2441 = vpop.f32.mrf.mxu0
      %2442 = vmatprep.mubr.f32.mxu0 0.0
      %2443 = vmatmul.mubr.f32.gmra.mxu0 %v2234
      %v2444 = vpop.f32.mrf.mxu0
      %v2445 = vadd.f32 0.0, %v2444
      %v2446 = vpop.f32.mrf.mxu0
      %2447 = vmatprep.mubr.f32.mxu0 0.0
      %2448 = vmatmul.mubr.f32.gmra.mxu0 %v2237
      %v2449 = vpop.f32.mrf.mxu0
      %v2450 = vadd.f32 0.0, %v2449
      %v2451 = vpop.f32.mrf.mxu0
      %2452 = vmatprep.mubr.f32.mxu0 0.0
      %2453 = vmatmul.mubr.f32.gmra.mxu0 %v2240
      %v2454 = vpop.f32.mrf.mxu0
      %v2455 = vadd.f32 0.0, %v2454
      %v2456 = vpop.f32.mrf.mxu0
      %2457 = vmatprep.mubr.f32.mxu0 0.0
      %2458 = vmatmul.mubr.f32.gmra.mxu0 %v2243
      %v2459 = vpop.f32.mrf.mxu0
      %v2460 = vadd.f32 0.0, %v2459
      %v2461 = vpop.f32.mrf.mxu0
      %2462 = vmatprep.mubr.f32.mxu0 0.0
      %2463 = vmatmul.mubr.f32.gmra.mxu0 %v2246
      %v2464 = vpop.f32.mrf.mxu0
      %v2465 = vadd.f32 0.0, %v2464
      %v2466 = vpop.f32.mrf.mxu0
      %2467 = vmatprep.mubr.f32.mxu0 0.0
      %2468 = vmatmul.mubr.f32.gmra.mxu0 %v2249
      %v2469 = vpop.f32.mrf.mxu0
      %v2470 = vadd.f32 0.0, %v2469
      %v2471 = vpop.f32.mrf.mxu0
      %2472 = vmatprep.mubr.f32.mxu0 0.0
      %2473 = vmatmul.mubr.f32.gmra.mxu0 %v2252
      %v2474 = vpop.f32.mrf.mxu0
      %v2475 = vadd.f32 0.0, %v2474
      %v2476 = vpop.f32.mrf.mxu0
      %2477 = vmatprep.mubr.f32.mxu0 0.0
      %2478 = vmatmul.mubr.f32.gmra.mxu0 %v2255
      %v2479 = vpop.f32.mrf.mxu0
      %v2480 = vadd.f32 0.0, %v2479
      %v2481 = vpop.f32.mrf.mxu0
      %2482 = vmatprep.mubr.f32.mxu0 0.0
      %2483 = vmatmul.mubr.f32.gmra.mxu0 %v2258
      %v2484 = vpop.f32.mrf.mxu0
      %v2485 = vadd.f32 0.0, %v2484
      %v2486 = vpop.f32.mrf.mxu0
      %2487 = vdwg.mxu0
      %v2488 = vadd.f32 %v2098, %v2330
      %v2489 = vadd.f32 %v2099, %v2335
      %v2490 = vadd.f32 %v2100, %v2340
      %v2491 = vadd.f32 %v2101, %v2345
      %v2492 = vadd.f32 %v2102, %v2350
      %v2493 = vadd.f32 %v2103, %v2355
      %v2494 = vadd.f32 %v2104, %v2360
      %v2495 = vadd.f32 %v2105, %v2365
      %v2496 = vadd.f32 %v2106, %v2370
      %v2497 = vadd.f32 %v2107, %v2375
      %v2498 = vadd.f32 %v2108, %v2380
      %v2499 = vadd.f32 %v2109, %v2385
      %v2500 = vadd.f32 %v2110, %v2390
      %v2501 = vadd.f32 %v2111, %v2395
      %v2502 = vadd.f32 %v2112, %v2400
      %v2503 = vadd.f32 %v2113, %v2405
      %v2504 = vadd.f32 %v2114, %v2410
      %v2505 = vadd.f32 %v2115, %v2415
      %v2506 = vadd.f32 %v2116, %v2420
      %v2507 = vadd.f32 %v2117, %v2425
      %v2508 = vadd.f32 %v2118, %v2430
      %v2509 = vadd.f32 %v2119, %v2435
      %v2510 = vadd.f32 %v2120, %v2440
      %v2511 = vadd.f32 %v2121, %v2445
      %v2512 = vadd.f32 %v2122, %v2450
      %v2513 = vadd.f32 %v2123, %v2455
      %v2514 = vadd.f32 %v2124, %v2460
      %v2515 = vadd.f32 %v2125, %v2465
      %v2516 = vadd.f32 %v2126, %v2470
      %v2517 = vadd.f32 %v2127, %v2475
      %v2518 = vadd.f32 %v2128, %v2480
      %v2519 = vadd.f32 %v2129, %v2485
      %s2520 = scalar_lea.vmem %s165, 48
      %v2521 = vld [vmem:[%s2520] sm:$0xff]
      %v2522 = vld [vmem:[%s2520 + $0x8] sm:$0xff]
      %v2523 = vld [vmem:[%s2520 + $0x18] sm:$0xff]
      %v2524 = vld [vmem:[%s2520 + $0x20] sm:$0xff]
      %v2525 = vld [vmem:[%s2520 + $0x30] sm:$0xff]
      %v2526 = vld [vmem:[%s2520 + $0x38] sm:$0xff]
      %v2527 = vld [vmem:[%s2520 + $0x48] sm:$0xff]
      %v2528 = vld [vmem:[%s2520 + $0x50] sm:$0xff]
      %v2529 = vld [vmem:[%s2520 + $0x60] sm:$0xff]
      %v2530 = vld [vmem:[%s2520 + $0x68] sm:$0xff]
      %v2531 = vld [vmem:[%s2520 + $0x78] sm:$0xff]
      %v2532 = vld [vmem:[%s2520 + $0x80] sm:$0xff]
      %v2533 = vld [vmem:[%s2520 + $0x90] sm:$0xff]
      %v2534 = vld [vmem:[%s2520 + $0x98] sm:$0xff]
      %v2535 = vld [vmem:[%s2520 + $0xa8] sm:$0xff]
      %v2536 = vld [vmem:[%s2520 + $0xb0] sm:$0xff]
      %v2537 = vld [vmem:[%s2520 + $0xc0] sm:$0xff]
      %v2538 = vld [vmem:[%s2520 + $0xc8] sm:$0xff]
      %v2539 = vld [vmem:[%s2520 + $0xd8] sm:$0xff]
      %v2540 = vld [vmem:[%s2520 + $0xe0] sm:$0xff]
      %v2541 = vld [vmem:[%s2520 + $0xf0] sm:$0xff]
      %v2542 = vld [vmem:[%s2520 + $0xf8] sm:$0xff]
      %v2543 = vld [vmem:[%s2520 + $0x108] sm:$0xff]
      %v2544 = vld [vmem:[%s2520 + $0x110] sm:$0xff]
      %v2545 = vld [vmem:[%s2520 + $0x120] sm:$0xff]
      %v2546 = vld [vmem:[%s2520 + $0x128] sm:$0xff]
      %v2547 = vld [vmem:[%s2520 + $0x138] sm:$0xff]
      %v2548 = vld [vmem:[%s2520 + $0x140] sm:$0xff]
      %v2549 = vld [vmem:[%s2520 + $0x150] sm:$0xff]
      %v2550 = vld [vmem:[%s2520 + $0x158] sm:$0xff]
      %v2551 = vld [vmem:[%s2520 + $0x168] sm:$0xff]
      %v2552 = vld [vmem:[%s2520 + $0x170] sm:$0xff]
      %s2553 = scalar_lea.vmem %s1, 24
      %v2554 = vld [vmem:[%s2553] sm:$0xf]
      %v2556 = vsel %vm211, %v2521, 0
      %v2559 = vsel %vm211, %v2522, 0
      %v2562 = vsel %vm211, %v2523, 0
      %v2565 = vsel %vm211, %v2524, 0
      %v2568 = vsel %vm211, %v2525, 0
      %v2571 = vsel %vm211, %v2526, 0
      %v2574 = vsel %vm211, %v2527, 0
      %v2577 = vsel %vm211, %v2528, 0
      %v2580 = vsel %vm211, %v2529, 0
      %v2583 = vsel %vm211, %v2530, 0
      %v2586 = vsel %vm211, %v2531, 0
      %v2589 = vsel %vm211, %v2532, 0
      %v2592 = vsel %vm211, %v2533, 0
      %v2595 = vsel %vm211, %v2534, 0
      %v2598 = vsel %vm211, %v2535, 0
      %v2601 = vsel %vm211, %v2536, 0
      %v2604 = vsel %vm211, %v2537, 0
      %v2607 = vsel %vm211, %v2538, 0
      %v2610 = vsel %vm211, %v2539, 0
      %v2613 = vsel %vm211, %v2540, 0
      %v2616 = vsel %vm211, %v2541, 0
      %v2619 = vsel %vm211, %v2542, 0
      %v2622 = vsel %vm211, %v2543, 0
      %v2625 = vsel %vm211, %v2544, 0
      %v2628 = vsel %vm211, %v2545, 0
      %v2631 = vsel %vm211, %v2546, 0
      %v2634 = vsel %vm211, %v2547, 0
      %v2637 = vsel %vm211, %v2548, 0
      %v2640 = vsel %vm211, %v2549, 0
      %v2643 = vsel %vm211, %v2550, 0
      %v2646 = vsel %vm211, %v2551, 0
      %v2649 = vsel %vm211, %v2552, 0
      %v2652 = vsel %vm308, %v2554, 0
      %2654 = vmatprep.subr.mxu0 0.0
      %2655 = vmatpush1.msra.mxu0 0.0
      %2656 = vmatprep.subr.mxu0 0.0
      %2657 = vmatpush1.msra.mxu0 0.0
      %2658 = vmatprep.subr.mxu0 0.0
      %2659 = vmatpush1.msra.mxu0 0.0
      %2660 = vmatprep.subr.mxu0 0.0
      %2661 = vmatpush1.msra.mxu0 0.0
      %2662 = vmatprep.subr.mxu0 0.0
      %2663 = vmatpush1.msra.mxu0 0.0
      %2664 = vmatprep.subr.mxu0 0.0
      %2665 = vmatpush1.msra.mxu0 0.0
      %2666 = vmatprep.subr.mxu0 0.0
      %2667 = vmatpush1.msra.mxu0 0.0
      %2668 = vmatprep.subr.mxu0 0.0
      %2669 = vmatpush1.msra.mxu0 0.0
      %2670 = vmatprep.subr.mxu0 0.0
      %2671 = vmatpush1.msra.mxu0 0.0
      %2672 = vmatprep.subr.mxu0 0.0
      %2673 = vmatpush1.msra.mxu0 0.0
      %2674 = vmatprep.subr.mxu0 0.0
      %2675 = vmatpush1.msra.mxu0 0.0
      %2676 = vmatprep.subr.mxu0 0.0
      %2677 = vmatpush1.msra.mxu0 0.0
      %2678 = vmatprep.subr.mxu0 0.0
      %2679 = vmatpush1.msra.mxu0 0.0
      %2680 = vmatprep.subr.mxu0 0.0
      %2681 = vmatpush1.msra.mxu0 0.0
      %2682 = vmatprep.subr.mxu0 0.0
      %2683 = vmatpush1.msra.mxu0 0.0
      %2684 = vmatprep.subr.mxu0 0.0
      %2685 = vmatpush1.msra.mxu0 %v2652
      %2686 = vmatprep.subr.mxu0 0.0
      %2687 = vmatpush2.msra.mxu0 0.0
      %2688 = vmatprep.subr.mxu0 0.0
      %2689 = vmatpush2.msra.mxu0 0.0
      %2690 = vmatprep.subr.mxu0 0.0
      %2691 = vmatpush2.msra.mxu0 0.0
      %2692 = vmatprep.subr.mxu0 0.0
      %2693 = vmatpush2.msra.mxu0 0.0
      %2694 = vmatprep.subr.mxu0 0.0
      %2695 = vmatpush2.msra.mxu0 0.0
      %2696 = vmatprep.subr.mxu0 0.0
      %2697 = vmatpush2.msra.mxu0 0.0
      %2698 = vmatprep.subr.mxu0 0.0
      %2699 = vmatpush2.msra.mxu0 0.0
      %2700 = vmatprep.subr.mxu0 0.0
      %2701 = vmatpush2.msra.mxu0 0.0
      %2702 = vmatprep.subr.mxu0 0.0
      %2703 = vmatpush2.msra.mxu0 0.0
      %2704 = vmatprep.subr.mxu0 0.0
      %2705 = vmatpush2.msra.mxu0 0.0
      %2706 = vmatprep.subr.mxu0 0.0
      %2707 = vmatpush2.msra.mxu0 0.0
      %2708 = vmatprep.subr.mxu0 0.0
      %2709 = vmatpush2.msra.mxu0 0.0
      %2710 = vmatprep.subr.mxu0 0.0
      %2711 = vmatpush2.msra.mxu0 0.0
      %2712 = vmatprep.subr.mxu0 0.0
      %2713 = vmatpush2.msra.mxu0 0.0
      %2714 = vmatprep.subr.mxu0 0.0
      %2715 = vmatpush2.msra.mxu0 0.0
      %2716 = vmatprep.subr.mxu0 0.0
      %2717 = vmatpush2.msra.mxu0 0.0
      %2718 = vmatprep.mubr.f32.mxu0 0.0
      %2719 = vmatmul.mubr.f32.gmra.mxu0 %v2556
      %v2720 = vpop.f32.mrf.mxu0
      %v2721 = vadd.f32 0.0, %v2720
      %v2722 = vpop.f32.mrf.mxu0
      %2723 = vmatprep.mubr.f32.mxu0 0.0
      %2724 = vmatmul.mubr.f32.gmra.mxu0 %v2559
      %v2725 = vpop.f32.mrf.mxu0
      %v2726 = vadd.f32 0.0, %v2725
      %v2727 = vpop.f32.mrf.mxu0
      %2728 = vmatprep.mubr.f32.mxu0 0.0
      %2729 = vmatmul.mubr.f32.gmra.mxu0 %v2562
      %v2730 = vpop.f32.mrf.mxu0
      %v2731 = vadd.f32 0.0, %v2730
      %v2732 = vpop.f32.mrf.mxu0
      %2733 = vmatprep.mubr.f32.mxu0 0.0
      %2734 = vmatmul.mubr.f32.gmra.mxu0 %v2565
      %v2735 = vpop.f32.mrf.mxu0
      %v2736 = vadd.f32 0.0, %v2735
      %v2737 = vpop.f32.mrf.mxu0
      %2738 = vmatprep.mubr.f32.mxu0 0.0
      %2739 = vmatmul.mubr.f32.gmra.mxu0 %v2568
      %v2740 = vpop.f32.mrf.mxu0
      %v2741 = vadd.f32 0.0, %v2740
      %v2742 = vpop.f32.mrf.mxu0
      %2743 = vmatprep.mubr.f32.mxu0 0.0
      %2744 = vmatmul.mubr.f32.gmra.mxu0 %v2571
      %v2745 = vpop.f32.mrf.mxu0
      %v2746 = vadd.f32 0.0, %v2745
      %v2747 = vpop.f32.mrf.mxu0
      %2748 = vmatprep.mubr.f32.mxu0 0.0
      %2749 = vmatmul.mubr.f32.gmra.mxu0 %v2574
      %v2750 = vpop.f32.mrf.mxu0
      %v2751 = vadd.f32 0.0, %v2750
      %v2752 = vpop.f32.mrf.mxu0
      %2753 = vmatprep.mubr.f32.mxu0 0.0
      %2754 = vmatmul.mubr.f32.gmra.mxu0 %v2577
      %v2755 = vpop.f32.mrf.mxu0
      %v2756 = vadd.f32 0.0, %v2755
      %v2757 = vpop.f32.mrf.mxu0
      %2758 = vmatprep.mubr.f32.mxu0 0.0
      %2759 = vmatmul.mubr.f32.gmra.mxu0 %v2580
      %v2760 = vpop.f32.mrf.mxu0
      %v2761 = vadd.f32 0.0, %v2760
      %v2762 = vpop.f32.mrf.mxu0
      %2763 = vmatprep.mubr.f32.mxu0 0.0
      %2764 = vmatmul.mubr.f32.gmra.mxu0 %v2583
      %v2765 = vpop.f32.mrf.mxu0
      %v2766 = vadd.f32 0.0, %v2765
      %v2767 = vpop.f32.mrf.mxu0
      %2768 = vmatprep.mubr.f32.mxu0 0.0
      %2769 = vmatmul.mubr.f32.gmra.mxu0 %v2586
      %v2770 = vpop.f32.mrf.mxu0
      %v2771 = vadd.f32 0.0, %v2770
      %v2772 = vpop.f32.mrf.mxu0
      %2773 = vmatprep.mubr.f32.mxu0 0.0
      %2774 = vmatmul.mubr.f32.gmra.mxu0 %v2589
      %v2775 = vpop.f32.mrf.mxu0
      %v2776 = vadd.f32 0.0, %v2775
      %v2777 = vpop.f32.mrf.mxu0
      %2778 = vmatprep.mubr.f32.mxu0 0.0
      %2779 = vmatmul.mubr.f32.gmra.mxu0 %v2592
      %v2780 = vpop.f32.mrf.mxu0
      %v2781 = vadd.f32 0.0, %v2780
      %v2782 = vpop.f32.mrf.mxu0
      %2783 = vmatprep.mubr.f32.mxu0 0.0
      %2784 = vmatmul.mubr.f32.gmra.mxu0 %v2595
      %v2785 = vpop.f32.mrf.mxu0
      %v2786 = vadd.f32 0.0, %v2785
      %v2787 = vpop.f32.mrf.mxu0
      %2788 = vmatprep.mubr.f32.mxu0 0.0
      %2789 = vmatmul.mubr.f32.gmra.mxu0 %v2598
      %v2790 = vpop.f32.mrf.mxu0
      %v2791 = vadd.f32 0.0, %v2790
      %v2792 = vpop.f32.mrf.mxu0
      %2793 = vmatprep.mubr.f32.mxu0 0.0
      %2794 = vmatmul.mubr.f32.gmra.mxu0 %v2601
      %v2795 = vpop.f32.mrf.mxu0
      %v2796 = vadd.f32 0.0, %v2795
      %v2797 = vpop.f32.mrf.mxu0
      %2798 = vmatprep.mubr.f32.mxu0 0.0
      %2799 = vmatmul.mubr.f32.gmra.mxu0 %v2604
      %v2800 = vpop.f32.mrf.mxu0
      %v2801 = vadd.f32 0.0, %v2800
      %v2802 = vpop.f32.mrf.mxu0
      %2803 = vmatprep.mubr.f32.mxu0 0.0
      %2804 = vmatmul.mubr.f32.gmra.mxu0 %v2607
      %v2805 = vpop.f32.mrf.mxu0
      %v2806 = vadd.f32 0.0, %v2805
      %v2807 = vpop.f32.mrf.mxu0
      %2808 = vmatprep.mubr.f32.mxu0 0.0
      %2809 = vmatmul.mubr.f32.gmra.mxu0 %v2610
      %v2810 = vpop.f32.mrf.mxu0
      %v2811 = vadd.f32 0.0, %v2810
      %v2812 = vpop.f32.mrf.mxu0
      %2813 = vmatprep.mubr.f32.mxu0 0.0
      %2814 = vmatmul.mubr.f32.gmra.mxu0 %v2613
      %v2815 = vpop.f32.mrf.mxu0
      %v2816 = vadd.f32 0.0, %v2815
      %v2817 = vpop.f32.mrf.mxu0
      %2818 = vmatprep.mubr.f32.mxu0 0.0
      %2819 = vmatmul.mubr.f32.gmra.mxu0 %v2616
      %v2820 = vpop.f32.mrf.mxu0
      %v2821 = vadd.f32 0.0, %v2820
      %v2822 = vpop.f32.mrf.mxu0
      %2823 = vmatprep.mubr.f32.mxu0 0.0
      %2824 = vmatmul.mubr.f32.gmra.mxu0 %v2619
      %v2825 = vpop.f32.mrf.mxu0
      %v2826 = vadd.f32 0.0, %v2825
      %v2827 = vpop.f32.mrf.mxu0
      %2828 = vmatprep.mubr.f32.mxu0 0.0
      %2829 = vmatmul.mubr.f32.gmra.mxu0 %v2622
      %v2830 = vpop.f32.mrf.mxu0
      %v2831 = vadd.f32 0.0, %v2830
      %v2832 = vpop.f32.mrf.mxu0
      %2833 = vmatprep.mubr.f32.mxu0 0.0
      %2834 = vmatmul.mubr.f32.gmra.mxu0 %v2625
      %v2835 = vpop.f32.mrf.mxu0
      %v2836 = vadd.f32 0.0, %v2835
      %v2837 = vpop.f32.mrf.mxu0
      %2838 = vmatprep.mubr.f32.mxu0 0.0
      %2839 = vmatmul.mubr.f32.gmra.mxu0 %v2628
      %v2840 = vpop.f32.mrf.mxu0
      %v2841 = vadd.f32 0.0, %v2840
      %v2842 = vpop.f32.mrf.mxu0
      %2843 = vmatprep.mubr.f32.mxu0 0.0
      %2844 = vmatmul.mubr.f32.gmra.mxu0 %v2631
      %v2845 = vpop.f32.mrf.mxu0
      %v2846 = vadd.f32 0.0, %v2845
      %v2847 = vpop.f32.mrf.mxu0
      %2848 = vmatprep.mubr.f32.mxu0 0.0
      %2849 = vmatmul.mubr.f32.gmra.mxu0 %v2634
      %v2850 = vpop.f32.mrf.mxu0
      %v2851 = vadd.f32 0.0, %v2850
      %v2852 = vpop.f32.mrf.mxu0
      %2853 = vmatprep.mubr.f32.mxu0 0.0
      %2854 = vmatmul.mubr.f32.gmra.mxu0 %v2637
      %v2855 = vpop.f32.mrf.mxu0
      %v2856 = vadd.f32 0.0, %v2855
      %v2857 = vpop.f32.mrf.mxu0
      %2858 = vmatprep.mubr.f32.mxu0 0.0
      %2859 = vmatmul.mubr.f32.gmra.mxu0 %v2640
      %v2860 = vpop.f32.mrf.mxu0
      %v2861 = vadd.f32 0.0, %v2860
      %v2862 = vpop.f32.mrf.mxu0
      %2863 = vmatprep.mubr.f32.mxu0 0.0
      %2864 = vmatmul.mubr.f32.gmra.mxu0 %v2643
      %v2865 = vpop.f32.mrf.mxu0
      %v2866 = vadd.f32 0.0, %v2865
      %v2867 = vpop.f32.mrf.mxu0
      %2868 = vmatprep.mubr.f32.mxu0 0.0
      %2869 = vmatmul.mubr.f32.gmra.mxu0 %v2646
      %v2870 = vpop.f32.mrf.mxu0
      %v2871 = vadd.f32 0.0, %v2870
      %v2872 = vpop.f32.mrf.mxu0
      %2873 = vmatprep.mubr.f32.mxu0 0.0
      %2874 = vmatmul.mubr.f32.gmra.mxu0 %v2649
      %v2875 = vpop.f32.mrf.mxu0
      %v2876 = vadd.f32 0.0, %v2875
      %v2877 = vpop.f32.mrf.mxu0
      %2878 = vdwg.mxu0
      %v2879 = vadd.f32 %v2488, %v2721
      %v2880 = vadd.f32 %v2489, %v2726
      %v2881 = vadd.f32 %v2490, %v2731
      %v2882 = vadd.f32 %v2491, %v2736
      %v2883 = vadd.f32 %v2492, %v2741
      %v2884 = vadd.f32 %v2493, %v2746
      %v2885 = vadd.f32 %v2494, %v2751
      %v2886 = vadd.f32 %v2495, %v2756
      %v2887 = vadd.f32 %v2496, %v2761
      %v2888 = vadd.f32 %v2497, %v2766
      %v2889 = vadd.f32 %v2498, %v2771
      %v2890 = vadd.f32 %v2499, %v2776
      %v2891 = vadd.f32 %v2500, %v2781
      %v2892 = vadd.f32 %v2501, %v2786
      %v2893 = vadd.f32 %v2502, %v2791
      %v2894 = vadd.f32 %v2503, %v2796
      %v2895 = vadd.f32 %v2504, %v2801
      %v2896 = vadd.f32 %v2505, %v2806
      %v2897 = vadd.f32 %v2506, %v2811
      %v2898 = vadd.f32 %v2507, %v2816
      %v2899 = vadd.f32 %v2508, %v2821
      %v2900 = vadd.f32 %v2509, %v2826
      %v2901 = vadd.f32 %v2510, %v2831
      %v2902 = vadd.f32 %v2511, %v2836
      %v2903 = vadd.f32 %v2512, %v2841
      %v2904 = vadd.f32 %v2513, %v2846
      %v2905 = vadd.f32 %v2514, %v2851
      %v2906 = vadd.f32 %v2515, %v2856
      %v2907 = vadd.f32 %v2516, %v2861
      %v2908 = vadd.f32 %v2517, %v2866
      %v2909 = vadd.f32 %v2518, %v2871
      %v2910 = vadd.f32 %v2519, %v2876
      %v2911 = vld [vmem:[%s2520 + $0x1] sm:$0xff]
      %v2912 = vld [vmem:[%s2520 + $0x9] sm:$0xff]
      %v2913 = vld [vmem:[%s2520 + $0x19] sm:$0xff]
      %v2914 = vld [vmem:[%s2520 + $0x21] sm:$0xff]
      %v2915 = vld [vmem:[%s2520 + $0x31] sm:$0xff]
      %v2916 = vld [vmem:[%s2520 + $0x39] sm:$0xff]
      %v2917 = vld [vmem:[%s2520 + $0x49] sm:$0xff]
      %v2918 = vld [vmem:[%s2520 + $0x51] sm:$0xff]
      %v2919 = vld [vmem:[%s2520 + $0x61] sm:$0xff]
      %v2920 = vld [vmem:[%s2520 + $0x69] sm:$0xff]
      %v2921 = vld [vmem:[%s2520 + $0x79] sm:$0xff]
      %v2922 = vld [vmem:[%s2520 + $0x81] sm:$0xff]
      %v2923 = vld [vmem:[%s2520 + $0x91] sm:$0xff]
      %v2924 = vld [vmem:[%s2520 + $0x99] sm:$0xff]
      %v2925 = vld [vmem:[%s2520 + $0xa9] sm:$0xff]
      %v2926 = vld [vmem:[%s2520 + $0xb1] sm:$0xff]
      %v2927 = vld [vmem:[%s2520 + $0xc1] sm:$0xff]
      %v2928 = vld [vmem:[%s2520 + $0xc9] sm:$0xff]
      %v2929 = vld [vmem:[%s2520 + $0xd9] sm:$0xff]
      %v2930 = vld [vmem:[%s2520 + $0xe1] sm:$0xff]
      %v2931 = vld [vmem:[%s2520 + $0xf1] sm:$0xff]
      %v2932 = vld [vmem:[%s2520 + $0xf9] sm:$0xff]
      %v2933 = vld [vmem:[%s2520 + $0x109] sm:$0xff]
      %v2934 = vld [vmem:[%s2520 + $0x111] sm:$0xff]
      %v2935 = vld [vmem:[%s2520 + $0x121] sm:$0xff]
      %v2936 = vld [vmem:[%s2520 + $0x129] sm:$0xff]
      %v2937 = vld [vmem:[%s2520 + $0x139] sm:$0xff]
      %v2938 = vld [vmem:[%s2520 + $0x141] sm:$0xff]
      %v2939 = vld [vmem:[%s2520 + $0x151] sm:$0xff]
      %v2940 = vld [vmem:[%s2520 + $0x159] sm:$0xff]
      %v2941 = vld [vmem:[%s2520 + $0x169] sm:$0xff]
      %v2942 = vld [vmem:[%s2520 + $0x171] sm:$0xff]
      %s2943 = scalar_lea.vmem %s1, 28
      %v2944 = vld [vmem:[%s2943] sm:$0xf]
      %v2946 = vsel %vm211, %v2911, 0
      %v2949 = vsel %vm211, %v2912, 0
      %v2952 = vsel %vm211, %v2913, 0
      %v2955 = vsel %vm211, %v2914, 0
      %v2958 = vsel %vm211, %v2915, 0
      %v2961 = vsel %vm211, %v2916, 0
      %v2964 = vsel %vm211, %v2917, 0
      %v2967 = vsel %vm211, %v2918, 0
      %v2970 = vsel %vm211, %v2919, 0
      %v2973 = vsel %vm211, %v2920, 0
      %v2976 = vsel %vm211, %v2921, 0
      %v2979 = vsel %vm211, %v2922, 0
      %v2982 = vsel %vm211, %v2923, 0
      %v2985 = vsel %vm211, %v2924, 0
      %v2988 = vsel %vm211, %v2925, 0
      %v2991 = vsel %vm211, %v2926, 0
      %v2994 = vsel %vm211, %v2927, 0
      %v2997 = vsel %vm211, %v2928, 0
      %v3000 = vsel %vm211, %v2929, 0
      %v3003 = vsel %vm211, %v2930, 0
      %v3006 = vsel %vm211, %v2931, 0
      %v3009 = vsel %vm211, %v2932, 0
      %v3012 = vsel %vm211, %v2933, 0
      %v3015 = vsel %vm211, %v2934, 0
      %v3018 = vsel %vm211, %v2935, 0
      %v3021 = vsel %vm211, %v2936, 0
      %v3024 = vsel %vm211, %v2937, 0
      %v3027 = vsel %vm211, %v2938, 0
      %v3030 = vsel %vm211, %v2939, 0
      %v3033 = vsel %vm211, %v2940, 0
      %v3036 = vsel %vm211, %v2941, 0
      %v3039 = vsel %vm211, %v2942, 0
      %v3042 = vsel %vm308, %v2944, 0
      %3044 = vmatprep.subr.mxu0 0.0
      %3045 = vmatpush1.msra.mxu0 0.0
      %3046 = vmatprep.subr.mxu0 0.0
      %3047 = vmatpush1.msra.mxu0 0.0
      %3048 = vmatprep.subr.mxu0 0.0
      %3049 = vmatpush1.msra.mxu0 0.0
      %3050 = vmatprep.subr.mxu0 0.0
      %3051 = vmatpush1.msra.mxu0 0.0
      %3052 = vmatprep.subr.mxu0 0.0
      %3053 = vmatpush1.msra.mxu0 0.0
      %3054 = vmatprep.subr.mxu0 0.0
      %3055 = vmatpush1.msra.mxu0 0.0
      %3056 = vmatprep.subr.mxu0 0.0
      %3057 = vmatpush1.msra.mxu0 0.0
      %3058 = vmatprep.subr.mxu0 0.0
      %3059 = vmatpush1.msra.mxu0 0.0
      %3060 = vmatprep.subr.mxu0 0.0
      %3061 = vmatpush1.msra.mxu0 0.0
      %3062 = vmatprep.subr.mxu0 0.0
      %3063 = vmatpush1.msra.mxu0 0.0
      %3064 = vmatprep.subr.mxu0 0.0
      %3065 = vmatpush1.msra.mxu0 0.0
      %3066 = vmatprep.subr.mxu0 0.0
      %3067 = vmatpush1.msra.mxu0 0.0
      %3068 = vmatprep.subr.mxu0 0.0
      %3069 = vmatpush1.msra.mxu0 0.0
      %3070 = vmatprep.subr.mxu0 0.0
      %3071 = vmatpush1.msra.mxu0 0.0
      %3072 = vmatprep.subr.mxu0 0.0
      %3073 = vmatpush1.msra.mxu0 0.0
      %3074 = vmatprep.subr.mxu0 0.0
      %3075 = vmatpush1.msra.mxu0 %v3042
      %3076 = vmatprep.subr.mxu0 0.0
      %3077 = vmatpush2.msra.mxu0 0.0
      %3078 = vmatprep.subr.mxu0 0.0
      %3079 = vmatpush2.msra.mxu0 0.0
      %3080 = vmatprep.subr.mxu0 0.0
      %3081 = vmatpush2.msra.mxu0 0.0
      %3082 = vmatprep.subr.mxu0 0.0
      %3083 = vmatpush2.msra.mxu0 0.0
      %3084 = vmatprep.subr.mxu0 0.0
      %3085 = vmatpush2.msra.mxu0 0.0
      %3086 = vmatprep.subr.mxu0 0.0
      %3087 = vmatpush2.msra.mxu0 0.0
      %3088 = vmatprep.subr.mxu0 0.0
      %3089 = vmatpush2.msra.mxu0 0.0
      %3090 = vmatprep.subr.mxu0 0.0
      %3091 = vmatpush2.msra.mxu0 0.0
      %3092 = vmatprep.subr.mxu0 0.0
      %3093 = vmatpush2.msra.mxu0 0.0
      %3094 = vmatprep.subr.mxu0 0.0
      %3095 = vmatpush2.msra.mxu0 0.0
      %3096 = vmatprep.subr.mxu0 0.0
      %3097 = vmatpush2.msra.mxu0 0.0
      %3098 = vmatprep.subr.mxu0 0.0
      %3099 = vmatpush2.msra.mxu0 0.0
      %3100 = vmatprep.subr.mxu0 0.0
      %3101 = vmatpush2.msra.mxu0 0.0
      %3102 = vmatprep.subr.mxu0 0.0
      %3103 = vmatpush2.msra.mxu0 0.0
      %3104 = vmatprep.subr.mxu0 0.0
      %3105 = vmatpush2.msra.mxu0 0.0
      %3106 = vmatprep.subr.mxu0 0.0
      %3107 = vmatpush2.msra.mxu0 0.0
      %3108 = vmatprep.mubr.f32.mxu0 0.0
      %3109 = vmatmul.mubr.f32.gmra.mxu0 %v2946
      %v3110 = vpop.f32.mrf.mxu0
      %v3111 = vadd.f32 0.0, %v3110
      %v3112 = vpop.f32.mrf.mxu0
      %3113 = vmatprep.mubr.f32.mxu0 0.0
      %3114 = vmatmul.mubr.f32.gmra.mxu0 %v2949
      %v3115 = vpop.f32.mrf.mxu0
      %v3116 = vadd.f32 0.0, %v3115
      %v3117 = vpop.f32.mrf.mxu0
      %3118 = vmatprep.mubr.f32.mxu0 0.0
      %3119 = vmatmul.mubr.f32.gmra.mxu0 %v2952
      %v3120 = vpop.f32.mrf.mxu0
      %v3121 = vadd.f32 0.0, %v3120
      %v3122 = vpop.f32.mrf.mxu0
      %3123 = vmatprep.mubr.f32.mxu0 0.0
      %3124 = vmatmul.mubr.f32.gmra.mxu0 %v2955
      %v3125 = vpop.f32.mrf.mxu0
      %v3126 = vadd.f32 0.0, %v3125
      %v3127 = vpop.f32.mrf.mxu0
      %3128 = vmatprep.mubr.f32.mxu0 0.0
      %3129 = vmatmul.mubr.f32.gmra.mxu0 %v2958
      %v3130 = vpop.f32.mrf.mxu0
      %v3131 = vadd.f32 0.0, %v3130
      %v3132 = vpop.f32.mrf.mxu0
      %3133 = vmatprep.mubr.f32.mxu0 0.0
      %3134 = vmatmul.mubr.f32.gmra.mxu0 %v2961
      %v3135 = vpop.f32.mrf.mxu0
      %v3136 = vadd.f32 0.0, %v3135
      %v3137 = vpop.f32.mrf.mxu0
      %3138 = vmatprep.mubr.f32.mxu0 0.0
      %3139 = vmatmul.mubr.f32.gmra.mxu0 %v2964
      %v3140 = vpop.f32.mrf.mxu0
      %v3141 = vadd.f32 0.0, %v3140
      %v3142 = vpop.f32.mrf.mxu0
      %3143 = vmatprep.mubr.f32.mxu0 0.0
      %3144 = vmatmul.mubr.f32.gmra.mxu0 %v2967
      %v3145 = vpop.f32.mrf.mxu0
      %v3146 = vadd.f32 0.0, %v3145
      %v3147 = vpop.f32.mrf.mxu0
      %3148 = vmatprep.mubr.f32.mxu0 0.0
      %3149 = vmatmul.mubr.f32.gmra.mxu0 %v2970
      %v3150 = vpop.f32.mrf.mxu0
      %v3151 = vadd.f32 0.0, %v3150
      %v3152 = vpop.f32.mrf.mxu0
      %3153 = vmatprep.mubr.f32.mxu0 0.0
      %3154 = vmatmul.mubr.f32.gmra.mxu0 %v2973
      %v3155 = vpop.f32.mrf.mxu0
      %v3156 = vadd.f32 0.0, %v3155
      %v3157 = vpop.f32.mrf.mxu0
      %3158 = vmatprep.mubr.f32.mxu0 0.0
      %3159 = vmatmul.mubr.f32.gmra.mxu0 %v2976
      %v3160 = vpop.f32.mrf.mxu0
      %v3161 = vadd.f32 0.0, %v3160
      %v3162 = vpop.f32.mrf.mxu0
      %3163 = vmatprep.mubr.f32.mxu0 0.0
      %3164 = vmatmul.mubr.f32.gmra.mxu0 %v2979
      %v3165 = vpop.f32.mrf.mxu0
      %v3166 = vadd.f32 0.0, %v3165
      %v3167 = vpop.f32.mrf.mxu0
      %3168 = vmatprep.mubr.f32.mxu0 0.0
      %3169 = vmatmul.mubr.f32.gmra.mxu0 %v2982
      %v3170 = vpop.f32.mrf.mxu0
      %v3171 = vadd.f32 0.0, %v3170
      %v3172 = vpop.f32.mrf.mxu0
      %3173 = vmatprep.mubr.f32.mxu0 0.0
      %3174 = vmatmul.mubr.f32.gmra.mxu0 %v2985
      %v3175 = vpop.f32.mrf.mxu0
      %v3176 = vadd.f32 0.0, %v3175
      %v3177 = vpop.f32.mrf.mxu0
      %3178 = vmatprep.mubr.f32.mxu0 0.0
      %3179 = vmatmul.mubr.f32.gmra.mxu0 %v2988
      %v3180 = vpop.f32.mrf.mxu0
      %v3181 = vadd.f32 0.0, %v3180
      %v3182 = vpop.f32.mrf.mxu0
      %3183 = vmatprep.mubr.f32.mxu0 0.0
      %3184 = vmatmul.mubr.f32.gmra.mxu0 %v2991
      %v3185 = vpop.f32.mrf.mxu0
      %v3186 = vadd.f32 0.0, %v3185
      %v3187 = vpop.f32.mrf.mxu0
      %3188 = vmatprep.mubr.f32.mxu0 0.0
      %3189 = vmatmul.mubr.f32.gmra.mxu0 %v2994
      %v3190 = vpop.f32.mrf.mxu0
      %v3191 = vadd.f32 0.0, %v3190
      %v3192 = vpop.f32.mrf.mxu0
      %3193 = vmatprep.mubr.f32.mxu0 0.0
      %3194 = vmatmul.mubr.f32.gmra.mxu0 %v2997
      %v3195 = vpop.f32.mrf.mxu0
      %v3196 = vadd.f32 0.0, %v3195
      %v3197 = vpop.f32.mrf.mxu0
      %3198 = vmatprep.mubr.f32.mxu0 0.0
      %3199 = vmatmul.mubr.f32.gmra.mxu0 %v3000
      %v3200 = vpop.f32.mrf.mxu0
      %v3201 = vadd.f32 0.0, %v3200
      %v3202 = vpop.f32.mrf.mxu0
      %3203 = vmatprep.mubr.f32.mxu0 0.0
      %3204 = vmatmul.mubr.f32.gmra.mxu0 %v3003
      %v3205 = vpop.f32.mrf.mxu0
      %v3206 = vadd.f32 0.0, %v3205
      %v3207 = vpop.f32.mrf.mxu0
      %3208 = vmatprep.mubr.f32.mxu0 0.0
      %3209 = vmatmul.mubr.f32.gmra.mxu0 %v3006
      %v3210 = vpop.f32.mrf.mxu0
      %v3211 = vadd.f32 0.0, %v3210
      %v3212 = vpop.f32.mrf.mxu0
      %3213 = vmatprep.mubr.f32.mxu0 0.0
      %3214 = vmatmul.mubr.f32.gmra.mxu0 %v3009
      %v3215 = vpop.f32.mrf.mxu0
      %v3216 = vadd.f32 0.0, %v3215
      %v3217 = vpop.f32.mrf.mxu0
      %3218 = vmatprep.mubr.f32.mxu0 0.0
      %3219 = vmatmul.mubr.f32.gmra.mxu0 %v3012
      %v3220 = vpop.f32.mrf.mxu0
      %v3221 = vadd.f32 0.0, %v3220
      %v3222 = vpop.f32.mrf.mxu0
      %3223 = vmatprep.mubr.f32.mxu0 0.0
      %3224 = vmatmul.mubr.f32.gmra.mxu0 %v3015
      %v3225 = vpop.f32.mrf.mxu0
      %v3226 = vadd.f32 0.0, %v3225
      %v3227 = vpop.f32.mrf.mxu0
      %3228 = vmatprep.mubr.f32.mxu0 0.0
      %3229 = vmatmul.mubr.f32.gmra.mxu0 %v3018
      %v3230 = vpop.f32.mrf.mxu0
      %v3231 = vadd.f32 0.0, %v3230
      %v3232 = vpop.f32.mrf.mxu0
      %3233 = vmatprep.mubr.f32.mxu0 0.0
      %3234 = vmatmul.mubr.f32.gmra.mxu0 %v3021
      %v3235 = vpop.f32.mrf.mxu0
      %v3236 = vadd.f32 0.0, %v3235
      %v3237 = vpop.f32.mrf.mxu0
      %3238 = vmatprep.mubr.f32.mxu0 0.0
      %3239 = vmatmul.mubr.f32.gmra.mxu0 %v3024
      %v3240 = vpop.f32.mrf.mxu0
      %v3241 = vadd.f32 0.0, %v3240
      %v3242 = vpop.f32.mrf.mxu0
      %3243 = vmatprep.mubr.f32.mxu0 0.0
      %3244 = vmatmul.mubr.f32.gmra.mxu0 %v3027
      %v3245 = vpop.f32.mrf.mxu0
      %v3246 = vadd.f32 0.0, %v3245
      %v3247 = vpop.f32.mrf.mxu0
      %3248 = vmatprep.mubr.f32.mxu0 0.0
      %3249 = vmatmul.mubr.f32.gmra.mxu0 %v3030
      %v3250 = vpop.f32.mrf.mxu0
      %v3251 = vadd.f32 0.0, %v3250
      %v3252 = vpop.f32.mrf.mxu0
      %3253 = vmatprep.mubr.f32.mxu0 0.0
      %3254 = vmatmul.mubr.f32.gmra.mxu0 %v3033
      %v3255 = vpop.f32.mrf.mxu0
      %v3256 = vadd.f32 0.0, %v3255
      %v3257 = vpop.f32.mrf.mxu0
      %3258 = vmatprep.mubr.f32.mxu0 0.0
      %3259 = vmatmul.mubr.f32.gmra.mxu0 %v3036
      %v3260 = vpop.f32.mrf.mxu0
      %v3261 = vadd.f32 0.0, %v3260
      %v3262 = vpop.f32.mrf.mxu0
      %3263 = vmatprep.mubr.f32.mxu0 0.0
      %3264 = vmatmul.mubr.f32.gmra.mxu0 %v3039
      %v3265 = vpop.f32.mrf.mxu0
      %v3266 = vadd.f32 0.0, %v3265
      %v3267 = vpop.f32.mrf.mxu0
      %3268 = vdwg.mxu0
      %v3269 = vadd.f32 %v2879, %v3111
      %v3270 = vadd.f32 %v2880, %v3116
      %v3271 = vadd.f32 %v2881, %v3121
      %v3272 = vadd.f32 %v2882, %v3126
      %v3273 = vadd.f32 %v2883, %v3131
      %v3274 = vadd.f32 %v2884, %v3136
      %v3275 = vadd.f32 %v2885, %v3141
      %v3276 = vadd.f32 %v2886, %v3146
      %v3277 = vadd.f32 %v2887, %v3151
      %v3278 = vadd.f32 %v2888, %v3156
      %v3279 = vadd.f32 %v2889, %v3161
      %v3280 = vadd.f32 %v2890, %v3166
      %v3281 = vadd.f32 %v2891, %v3171
      %v3282 = vadd.f32 %v2892, %v3176
      %v3283 = vadd.f32 %v2893, %v3181
      %v3284 = vadd.f32 %v2894, %v3186
      %v3285 = vadd.f32 %v2895, %v3191
      %v3286 = vadd.f32 %v2896, %v3196
      %v3287 = vadd.f32 %v2897, %v3201
      %v3288 = vadd.f32 %v2898, %v3206
      %v3289 = vadd.f32 %v2899, %v3211
      %v3290 = vadd.f32 %v2900, %v3216
      %v3291 = vadd.f32 %v2901, %v3221
      %v3292 = vadd.f32 %v2902, %v3226
      %v3293 = vadd.f32 %v2903, %v3231
      %v3294 = vadd.f32 %v2904, %v3236
      %v3295 = vadd.f32 %v2905, %v3241
      %v3296 = vadd.f32 %v2906, %v3246
      %v3297 = vadd.f32 %v2907, %v3251
      %v3298 = vadd.f32 %v2908, %v3256
      %v3299 = vadd.f32 %v2909, %v3261
      %v3300 = vadd.f32 %v2910, %v3266
      %v3301 = vld [vmem:[%s2520 + $0x2] sm:$0xff]
      %v3302 = vld [vmem:[%s2520 + $0xa] sm:$0xff]
      %v3303 = vld [vmem:[%s2520 + $0x1a] sm:$0xff]
      %v3304 = vld [vmem:[%s2520 + $0x22] sm:$0xff]
      %v3305 = vld [vmem:[%s2520 + $0x32] sm:$0xff]
      %v3306 = vld [vmem:[%s2520 + $0x3a] sm:$0xff]
      %v3307 = vld [vmem:[%s2520 + $0x4a] sm:$0xff]
      %v3308 = vld [vmem:[%s2520 + $0x52] sm:$0xff]
      %v3309 = vld [vmem:[%s2520 + $0x62] sm:$0xff]
      %v3310 = vld [vmem:[%s2520 + $0x6a] sm:$0xff]
      %v3311 = vld [vmem:[%s2520 + $0x7a] sm:$0xff]
      %v3312 = vld [vmem:[%s2520 + $0x82] sm:$0xff]
      %v3313 = vld [vmem:[%s2520 + $0x92] sm:$0xff]
      %v3314 = vld [vmem:[%s2520 + $0x9a] sm:$0xff]
      %v3315 = vld [vmem:[%s2520 + $0xaa] sm:$0xff]
      %v3316 = vld [vmem:[%s2520 + $0xb2] sm:$0xff]
      %v3317 = vld [vmem:[%s2520 + $0xc2] sm:$0xff]
      %v3318 = vld [vmem:[%s2520 + $0xca] sm:$0xff]
      %v3319 = vld [vmem:[%s2520 + $0xda] sm:$0xff]
      %v3320 = vld [vmem:[%s2520 + $0xe2] sm:$0xff]
      %v3321 = vld [vmem:[%s2520 + $0xf2] sm:$0xff]
      %v3322 = vld [vmem:[%s2520 + $0xfa] sm:$0xff]
      %v3323 = vld [vmem:[%s2520 + $0x10a] sm:$0xff]
      %v3324 = vld [vmem:[%s2520 + $0x112] sm:$0xff]
      %v3325 = vld [vmem:[%s2520 + $0x122] sm:$0xff]
      %v3326 = vld [vmem:[%s2520 + $0x12a] sm:$0xff]
      %v3327 = vld [vmem:[%s2520 + $0x13a] sm:$0xff]
      %v3328 = vld [vmem:[%s2520 + $0x142] sm:$0xff]
      %v3329 = vld [vmem:[%s2520 + $0x152] sm:$0xff]
      %v3330 = vld [vmem:[%s2520 + $0x15a] sm:$0xff]
      %v3331 = vld [vmem:[%s2520 + $0x16a] sm:$0xff]
      %v3332 = vld [vmem:[%s2520 + $0x172] sm:$0xff]
      %s3333 = scalar_lea.vmem %s1, 32
      %v3334 = vld [vmem:[%s3333] sm:$0xf]
      %v3336 = vsel %vm211, %v3301, 0
      %v3339 = vsel %vm211, %v3302, 0
      %v3342 = vsel %vm211, %v3303, 0
      %v3345 = vsel %vm211, %v3304, 0
      %v3348 = vsel %vm211, %v3305, 0
      %v3351 = vsel %vm211, %v3306, 0
      %v3354 = vsel %vm211, %v3307, 0
      %v3357 = vsel %vm211, %v3308, 0
      %v3360 = vsel %vm211, %v3309, 0
      %v3363 = vsel %vm211, %v3310, 0
      %v3366 = vsel %vm211, %v3311, 0
      %v3369 = vsel %vm211, %v3312, 0
      %v3372 = vsel %vm211, %v3313, 0
      %v3375 = vsel %vm211, %v3314, 0
      %v3378 = vsel %vm211, %v3315, 0
      %v3381 = vsel %vm211, %v3316, 0
      %v3384 = vsel %vm211, %v3317, 0
      %v3387 = vsel %vm211, %v3318, 0
      %v3390 = vsel %vm211, %v3319, 0
      %v3393 = vsel %vm211, %v3320, 0
      %v3396 = vsel %vm211, %v3321, 0
      %v3399 = vsel %vm211, %v3322, 0
      %v3402 = vsel %vm211, %v3323, 0
      %v3405 = vsel %vm211, %v3324, 0
      %v3408 = vsel %vm211, %v3325, 0
      %v3411 = vsel %vm211, %v3326, 0
      %v3414 = vsel %vm211, %v3327, 0
      %v3417 = vsel %vm211, %v3328, 0
      %v3420 = vsel %vm211, %v3329, 0
      %v3423 = vsel %vm211, %v3330, 0
      %v3426 = vsel %vm211, %v3331, 0
      %v3429 = vsel %vm211, %v3332, 0
      %v3432 = vsel %vm308, %v3334, 0
      %3434 = vmatprep.subr.mxu0 0.0
      %3435 = vmatpush1.msra.mxu0 0.0
      %3436 = vmatprep.subr.mxu0 0.0
      %3437 = vmatpush1.msra.mxu0 0.0
      %3438 = vmatprep.subr.mxu0 0.0
      %3439 = vmatpush1.msra.mxu0 0.0
      %3440 = vmatprep.subr.mxu0 0.0
      %3441 = vmatpush1.msra.mxu0 0.0
      %3442 = vmatprep.subr.mxu0 0.0
      %3443 = vmatpush1.msra.mxu0 0.0
      %3444 = vmatprep.subr.mxu0 0.0
      %3445 = vmatpush1.msra.mxu0 0.0
      %3446 = vmatprep.subr.mxu0 0.0
      %3447 = vmatpush1.msra.mxu0 0.0
      %3448 = vmatprep.subr.mxu0 0.0
      %3449 = vmatpush1.msra.mxu0 0.0
      %3450 = vmatprep.subr.mxu0 0.0
      %3451 = vmatpush1.msra.mxu0 0.0
      %3452 = vmatprep.subr.mxu0 0.0
      %3453 = vmatpush1.msra.mxu0 0.0
      %3454 = vmatprep.subr.mxu0 0.0
      %3455 = vmatpush1.msra.mxu0 0.0
      %3456 = vmatprep.subr.mxu0 0.0
      %3457 = vmatpush1.msra.mxu0 0.0
      %3458 = vmatprep.subr.mxu0 0.0
      %3459 = vmatpush1.msra.mxu0 0.0
      %3460 = vmatprep.subr.mxu0 0.0
      %3461 = vmatpush1.msra.mxu0 0.0
      %3462 = vmatprep.subr.mxu0 0.0
      %3463 = vmatpush1.msra.mxu0 0.0
      %3464 = vmatprep.subr.mxu0 0.0
      %3465 = vmatpush1.msra.mxu0 %v3432
      %3466 = vmatprep.subr.mxu0 0.0
      %3467 = vmatpush2.msra.mxu0 0.0
      %3468 = vmatprep.subr.mxu0 0.0
      %3469 = vmatpush2.msra.mxu0 0.0
      %3470 = vmatprep.subr.mxu0 0.0
      %3471 = vmatpush2.msra.mxu0 0.0
      %3472 = vmatprep.subr.mxu0 0.0
      %3473 = vmatpush2.msra.mxu0 0.0
      %3474 = vmatprep.subr.mxu0 0.0
      %3475 = vmatpush2.msra.mxu0 0.0
      %3476 = vmatprep.subr.mxu0 0.0
      %3477 = vmatpush2.msra.mxu0 0.0
      %3478 = vmatprep.subr.mxu0 0.0
      %3479 = vmatpush2.msra.mxu0 0.0
      %3480 = vmatprep.subr.mxu0 0.0
      %3481 = vmatpush2.msra.mxu0 0.0
      %3482 = vmatprep.subr.mxu0 0.0
      %3483 = vmatpush2.msra.mxu0 0.0
      %3484 = vmatprep.subr.mxu0 0.0
      %3485 = vmatpush2.msra.mxu0 0.0
      %3486 = vmatprep.subr.mxu0 0.0
      %3487 = vmatpush2.msra.mxu0 0.0
      %3488 = vmatprep.subr.mxu0 0.0
      %3489 = vmatpush2.msra.mxu0 0.0
      %3490 = vmatprep.subr.mxu0 0.0
      %3491 = vmatpush2.msra.mxu0 0.0
      %3492 = vmatprep.subr.mxu0 0.0
      %3493 = vmatpush2.msra.mxu0 0.0
      %3494 = vmatprep.subr.mxu0 0.0
      %3495 = vmatpush2.msra.mxu0 0.0
      %3496 = vmatprep.subr.mxu0 0.0
      %3497 = vmatpush2.msra.mxu0 0.0
      %3498 = vmatprep.mubr.f32.mxu0 0.0
      %3499 = vmatmul.mubr.f32.gmra.mxu0 %v3336
      %v3500 = vpop.f32.mrf.mxu0
      %v3501 = vadd.f32 0.0, %v3500
      %v3502 = vpop.f32.mrf.mxu0
      %3503 = vmatprep.mubr.f32.mxu0 0.0
      %3504 = vmatmul.mubr.f32.gmra.mxu0 %v3339
      %v3505 = vpop.f32.mrf.mxu0
      %v3506 = vadd.f32 0.0, %v3505
      %v3507 = vpop.f32.mrf.mxu0
      %3508 = vmatprep.mubr.f32.mxu0 0.0
      %3509 = vmatmul.mubr.f32.gmra.mxu0 %v3342
      %v3510 = vpop.f32.mrf.mxu0
      %v3511 = vadd.f32 0.0, %v3510
      %v3512 = vpop.f32.mrf.mxu0
      %3513 = vmatprep.mubr.f32.mxu0 0.0
      %3514 = vmatmul.mubr.f32.gmra.mxu0 %v3345
      %v3515 = vpop.f32.mrf.mxu0
      %v3516 = vadd.f32 0.0, %v3515
      %v3517 = vpop.f32.mrf.mxu0
      %3518 = vmatprep.mubr.f32.mxu0 0.0
      %3519 = vmatmul.mubr.f32.gmra.mxu0 %v3348
      %v3520 = vpop.f32.mrf.mxu0
      %v3521 = vadd.f32 0.0, %v3520
      %v3522 = vpop.f32.mrf.mxu0
      %3523 = vmatprep.mubr.f32.mxu0 0.0
      %3524 = vmatmul.mubr.f32.gmra.mxu0 %v3351
      %v3525 = vpop.f32.mrf.mxu0
      %v3526 = vadd.f32 0.0, %v3525
      %v3527 = vpop.f32.mrf.mxu0
      %3528 = vmatprep.mubr.f32.mxu0 0.0
      %3529 = vmatmul.mubr.f32.gmra.mxu0 %v3354
      %v3530 = vpop.f32.mrf.mxu0
      %v3531 = vadd.f32 0.0, %v3530
      %v3532 = vpop.f32.mrf.mxu0
      %3533 = vmatprep.mubr.f32.mxu0 0.0
      %3534 = vmatmul.mubr.f32.gmra.mxu0 %v3357
      %v3535 = vpop.f32.mrf.mxu0
      %v3536 = vadd.f32 0.0, %v3535
      %v3537 = vpop.f32.mrf.mxu0
      %3538 = vmatprep.mubr.f32.mxu0 0.0
      %3539 = vmatmul.mubr.f32.gmra.mxu0 %v3360
      %v3540 = vpop.f32.mrf.mxu0
      %v3541 = vadd.f32 0.0, %v3540
      %v3542 = vpop.f32.mrf.mxu0
      %3543 = vmatprep.mubr.f32.mxu0 0.0
      %3544 = vmatmul.mubr.f32.gmra.mxu0 %v3363
      %v3545 = vpop.f32.mrf.mxu0
      %v3546 = vadd.f32 0.0, %v3545
      %v3547 = vpop.f32.mrf.mxu0
      %3548 = vmatprep.mubr.f32.mxu0 0.0
      %3549 = vmatmul.mubr.f32.gmra.mxu0 %v3366
      %v3550 = vpop.f32.mrf.mxu0
      %v3551 = vadd.f32 0.0, %v3550
      %v3552 = vpop.f32.mrf.mxu0
      %3553 = vmatprep.mubr.f32.mxu0 0.0
      %3554 = vmatmul.mubr.f32.gmra.mxu0 %v3369
      %v3555 = vpop.f32.mrf.mxu0
      %v3556 = vadd.f32 0.0, %v3555
      %v3557 = vpop.f32.mrf.mxu0
      %3558 = vmatprep.mubr.f32.mxu0 0.0
      %3559 = vmatmul.mubr.f32.gmra.mxu0 %v3372
      %v3560 = vpop.f32.mrf.mxu0
      %v3561 = vadd.f32 0.0, %v3560
      %v3562 = vpop.f32.mrf.mxu0
      %3563 = vmatprep.mubr.f32.mxu0 0.0
      %3564 = vmatmul.mubr.f32.gmra.mxu0 %v3375
      %v3565 = vpop.f32.mrf.mxu0
      %v3566 = vadd.f32 0.0, %v3565
      %v3567 = vpop.f32.mrf.mxu0
      %3568 = vmatprep.mubr.f32.mxu0 0.0
      %3569 = vmatmul.mubr.f32.gmra.mxu0 %v3378
      %v3570 = vpop.f32.mrf.mxu0
      %v3571 = vadd.f32 0.0, %v3570
      %v3572 = vpop.f32.mrf.mxu0
      %3573 = vmatprep.mubr.f32.mxu0 0.0
      %3574 = vmatmul.mubr.f32.gmra.mxu0 %v3381
      %v3575 = vpop.f32.mrf.mxu0
      %v3576 = vadd.f32 0.0, %v3575
      %v3577 = vpop.f32.mrf.mxu0
      %3578 = vmatprep.mubr.f32.mxu0 0.0
      %3579 = vmatmul.mubr.f32.gmra.mxu0 %v3384
      %v3580 = vpop.f32.mrf.mxu0
      %v3581 = vadd.f32 0.0, %v3580
      %v3582 = vpop.f32.mrf.mxu0
      %3583 = vmatprep.mubr.f32.mxu0 0.0
      %3584 = vmatmul.mubr.f32.gmra.mxu0 %v3387
      %v3585 = vpop.f32.mrf.mxu0
      %v3586 = vadd.f32 0.0, %v3585
      %v3587 = vpop.f32.mrf.mxu0
      %3588 = vmatprep.mubr.f32.mxu0 0.0
      %3589 = vmatmul.mubr.f32.gmra.mxu0 %v3390
      %v3590 = vpop.f32.mrf.mxu0
      %v3591 = vadd.f32 0.0, %v3590
      %v3592 = vpop.f32.mrf.mxu0
      %3593 = vmatprep.mubr.f32.mxu0 0.0
      %3594 = vmatmul.mubr.f32.gmra.mxu0 %v3393
      %v3595 = vpop.f32.mrf.mxu0
      %v3596 = vadd.f32 0.0, %v3595
      %v3597 = vpop.f32.mrf.mxu0
      %3598 = vmatprep.mubr.f32.mxu0 0.0
      %3599 = vmatmul.mubr.f32.gmra.mxu0 %v3396
      %v3600 = vpop.f32.mrf.mxu0
      %v3601 = vadd.f32 0.0, %v3600
      %v3602 = vpop.f32.mrf.mxu0
      %3603 = vmatprep.mubr.f32.mxu0 0.0
      %3604 = vmatmul.mubr.f32.gmra.mxu0 %v3399
      %v3605 = vpop.f32.mrf.mxu0
      %v3606 = vadd.f32 0.0, %v3605
      %v3607 = vpop.f32.mrf.mxu0
      %3608 = vmatprep.mubr.f32.mxu0 0.0
      %3609 = vmatmul.mubr.f32.gmra.mxu0 %v3402
      %v3610 = vpop.f32.mrf.mxu0
      %v3611 = vadd.f32 0.0, %v3610
      %v3612 = vpop.f32.mrf.mxu0
      %3613 = vmatprep.mubr.f32.mxu0 0.0
      %3614 = vmatmul.mubr.f32.gmra.mxu0 %v3405
      %v3615 = vpop.f32.mrf.mxu0
      %v3616 = vadd.f32 0.0, %v3615
      %v3617 = vpop.f32.mrf.mxu0
      %3618 = vmatprep.mubr.f32.mxu0 0.0
      %3619 = vmatmul.mubr.f32.gmra.mxu0 %v3408
      %v3620 = vpop.f32.mrf.mxu0
      %v3621 = vadd.f32 0.0, %v3620
      %v3622 = vpop.f32.mrf.mxu0
      %3623 = vmatprep.mubr.f32.mxu0 0.0
      %3624 = vmatmul.mubr.f32.gmra.mxu0 %v3411
      %v3625 = vpop.f32.mrf.mxu0
      %v3626 = vadd.f32 0.0, %v3625
      %v3627 = vpop.f32.mrf.mxu0
      %3628 = vmatprep.mubr.f32.mxu0 0.0
      %3629 = vmatmul.mubr.f32.gmra.mxu0 %v3414
      %v3630 = vpop.f32.mrf.mxu0
      %v3631 = vadd.f32 0.0, %v3630
      %v3632 = vpop.f32.mrf.mxu0
      %3633 = vmatprep.mubr.f32.mxu0 0.0
      %3634 = vmatmul.mubr.f32.gmra.mxu0 %v3417
      %v3635 = vpop.f32.mrf.mxu0
      %v3636 = vadd.f32 0.0, %v3635
      %v3637 = vpop.f32.mrf.mxu0
      %3638 = vmatprep.mubr.f32.mxu0 0.0
      %3639 = vmatmul.mubr.f32.gmra.mxu0 %v3420
      %v3640 = vpop.f32.mrf.mxu0
      %v3641 = vadd.f32 0.0, %v3640
      %v3642 = vpop.f32.mrf.mxu0
      %3643 = vmatprep.mubr.f32.mxu0 0.0
      %3644 = vmatmul.mubr.f32.gmra.mxu0 %v3423
      %v3645 = vpop.f32.mrf.mxu0
      %v3646 = vadd.f32 0.0, %v3645
      %v3647 = vpop.f32.mrf.mxu0
      %3648 = vmatprep.mubr.f32.mxu0 0.0
      %3649 = vmatmul.mubr.f32.gmra.mxu0 %v3426
      %v3650 = vpop.f32.mrf.mxu0
      %v3651 = vadd.f32 0.0, %v3650
      %v3652 = vpop.f32.mrf.mxu0
      %3653 = vmatprep.mubr.f32.mxu0 0.0
      %3654 = vmatmul.mubr.f32.gmra.mxu0 %v3429
      %v3655 = vpop.f32.mrf.mxu0
      %v3656 = vadd.f32 0.0, %v3655
      %v3657 = vpop.f32.mrf.mxu0
      %3658 = vdwg.mxu0
      %v3659 = vadd.f32 %v3269, %v3501
      %v3660 = vadd.f32 %v3270, %v3506
      %v3661 = vadd.f32 %v3271, %v3511
      %v3662 = vadd.f32 %v3272, %v3516
      %v3663 = vadd.f32 %v3273, %v3521
      %v3664 = vadd.f32 %v3274, %v3526
      %v3665 = vadd.f32 %v3275, %v3531
      %v3666 = vadd.f32 %v3276, %v3536
      %v3667 = vadd.f32 %v3277, %v3541
      %v3668 = vadd.f32 %v3278, %v3546
      %v3669 = vadd.f32 %v3279, %v3551
      %v3670 = vadd.f32 %v3280, %v3556
      %v3671 = vadd.f32 %v3281, %v3561
      %v3672 = vadd.f32 %v3282, %v3566
      %v3673 = vadd.f32 %v3283, %v3571
      %v3674 = vadd.f32 %v3284, %v3576
      %v3675 = vadd.f32 %v3285, %v3581
      %v3676 = vadd.f32 %v3286, %v3586
      %v3677 = vadd.f32 %v3287, %v3591
      %v3678 = vadd.f32 %v3288, %v3596
      %v3679 = vadd.f32 %v3289, %v3601
      %v3680 = vadd.f32 %v3290, %v3606
      %v3681 = vadd.f32 %v3291, %v3611
      %v3682 = vadd.f32 %v3292, %v3616
      %v3683 = vadd.f32 %v3293, %v3621
      %v3684 = vadd.f32 %v3294, %v3626
      %v3685 = vadd.f32 %v3295, %v3631
      %v3686 = vadd.f32 %v3296, %v3636
      %v3687 = vadd.f32 %v3297, %v3641
      %v3688 = vadd.f32 %v3298, %v3646
      %v3689 = vadd.f32 %v3299, %v3651
      %v3690 = vadd.f32 %v3300, %v3656
      %vm3691 = vcmask 64512
      %3692 = vst.msk [vmem:[%s170] sm:$0xff] %vm3691, %v3659
      %3693 = vst.msk [vmem:[%s170 + $0x8] sm:$0xff] %vm3691, %v3660
      %3694 = vst.msk [vmem:[%s170 + $0x10] sm:$0xff] %vm3691, %v3661
      %3695 = vst.msk [vmem:[%s170 + $0x18] sm:$0xff] %vm3691, %v3662
      %3696 = vst.msk [vmem:[%s170 + $0x20] sm:$0xff] %vm3691, %v3663
      %3697 = vst.msk [vmem:[%s170 + $0x28] sm:$0xff] %vm3691, %v3664
      %3698 = vst.msk [vmem:[%s170 + $0x30] sm:$0xff] %vm3691, %v3665
      %3699 = vst.msk [vmem:[%s170 + $0x38] sm:$0xff] %vm3691, %v3666
      %3700 = vst.msk [vmem:[%s170 + $0x40] sm:$0xff] %vm3691, %v3667
      %3701 = vst.msk [vmem:[%s170 + $0x48] sm:$0xff] %vm3691, %v3668
      %3702 = vst.msk [vmem:[%s170 + $0x50] sm:$0xff] %vm3691, %v3669
      %3703 = vst.msk [vmem:[%s170 + $0x58] sm:$0xff] %vm3691, %v3670
      %3704 = vst.msk [vmem:[%s170 + $0x60] sm:$0xff] %vm3691, %v3671
      %3705 = vst.msk [vmem:[%s170 + $0x68] sm:$0xff] %vm3691, %v3672
      %3706 = vst.msk [vmem:[%s170 + $0x70] sm:$0xff] %vm3691, %v3673
      %3707 = vst.msk [vmem:[%s170 + $0x78] sm:$0xff] %vm3691, %v3674
      %3708 = vst.msk [vmem:[%s170 + $0x80] sm:$0xff] %vm3691, %v3675
      %3709 = vst.msk [vmem:[%s170 + $0x88] sm:$0xff] %vm3691, %v3676
      %3710 = vst.msk [vmem:[%s170 + $0x90] sm:$0xff] %vm3691, %v3677
      %3711 = vst.msk [vmem:[%s170 + $0x98] sm:$0xff] %vm3691, %v3678
      %3712 = vst.msk [vmem:[%s170 + $0xa0] sm:$0xff] %vm3691, %v3679
      %3713 = vst.msk [vmem:[%s170 + $0xa8] sm:$0xff] %vm3691, %v3680
      %3714 = vst.msk [vmem:[%s170 + $0xb0] sm:$0xff] %vm3691, %v3681
      %3715 = vst.msk [vmem:[%s170 + $0xb8] sm:$0xff] %vm3691, %v3682
      %3716 = vst.msk [vmem:[%s170 + $0xc0] sm:$0xff] %vm3691, %v3683
      %3717 = vst.msk [vmem:[%s170 + $0xc8] sm:$0xff] %vm3691, %v3684
      %3718 = vst.msk [vmem:[%s170 + $0xd0] sm:$0xff] %vm3691, %v3685
      %3719 = vst.msk [vmem:[%s170 + $0xd8] sm:$0xff] %vm3691, %v3686
      %3720 = vst.msk [vmem:[%s170 + $0xe0] sm:$0xff] %vm3691, %v3687
      %3721 = vst.msk [vmem:[%s170 + $0xe8] sm:$0xff] %vm3691, %v3688
      %3722 = vst.msk [vmem:[%s170 + $0xf0] sm:$0xff] %vm3691, %v3689
      %3723 = vst.msk [vmem:[%s170 + $0xf8] sm:$0xff] %vm3691, %v3690
      %p3724 = scmp.lt.s32.totalorder %s14, 1
      %s3725 = scalar_select %p3724, %s14, 1
      %s3726 = smul.addr %s3725, 32
      %s3727 = smul.addr %s3726, 8
      %s3728 = scalar_lea.vmem %s3, %s3727
      // Predicated region
      $region33: #{conv2d_sm_forward.1} parent=31 // pred_check
        %p3729 = pneg %p100
      $region34: #{conv2d_sm_forward.1} parent=31 // pred_check_branch
        %3731 = sbr.rel (%p3729) target = $region36
      $region35: #{conv2d_sm_forward.1} parent=31 // pred_region
        _
      $region36: #{conv2d_sm_forward.1} parent=31 // pred_fallthru
        _
    $region32: #{conv2d_sm_forward.1} parent=5 // pred_fallthru
      _
    %p3732 = scmp.le.s32.totalorder 2, %s9
    // Predicated region
    $region37: #{conv2d_sm_forward.1} parent=5 // pred_check
      %p3733 = pneg %p3732
    $region38: #{conv2d_sm_forward.1} parent=5 // pred_check_branch
      %3735 = sbr.rel (%p3733) target = $region40
    $region39: #{conv2d_sm_forward.1} parent=5 // pred_region
      %s3736 = ssub.s32 %s9, 2
      // Predicated region
      $region41: #{conv2d_sm_forward.1} parent=39 // pred_check
        %p3737 = pneg %p106
      $region42: #{conv2d_sm_forward.1} parent=39 // pred_check_branch
        %3739 = sbr.rel (%p3737) target = $region44
      $region43: #{conv2d_sm_forward.1} parent=39 // pred_region
        %p3740 = scmp.lt.s32.totalorder %s15, 1
        %s3741 = scalar_select %p3740, %s15, 1
        %s3742 = smul.addr %s3741, 32
        %s3743 = smul.addr %s3742, 8
        %s3744 = scalar_lea.vmem %s3, %s3743
      $region44: #{conv2d_sm_forward.1} parent=39 // pred_fallthru
        _
    $region40: #{conv2d_sm_forward.1} parent=5 // pred_fallthru
      _
  $region6: #{conv2d_sm_forward.1} parent=0 // loop_footer
    %s13 = sadd.s32 1, %s9
  $region7: #{conv2d_sm_forward.1} parent=0 // loop_footer_branch
    %8 = sbr.rel target = $region3
  $region8: #{conv2d_sm_forward.1} parent=0 // loop_exit
    _

</llo_original>
